<compile_context>
chip_gen: v6e
topology: v6e:2x2x1
jax: 0.10.0
libtpu: 0.0.40
codegen_flags: <defaults>
</compile_context>

<pallas_src>
import functools

import numpy as np
import jax
import jax.numpy as jnp
from jax.experimental import pallas as pl
from jax.experimental.pallas import tpu as pltpu


# ---------------------------------------------------------------------------
# Kernel.  Per grid step (TB images):
#   x (TB,256) -> c1 (TB,14*128)  [lane = h1*128 + w1*6 + c, 84 valid lanes/row]
#   -> 10 band matmuls (TB,640)x(640,256) -> pooled s4 (TB,640)
#      [lane = ph*128 + pw*16 + c, 80 valid lanes per 128-lane group]
#   -> f5 (TB,128) -> f6 (TB,128) -> out (TB,128) (logits in lanes [0,43)).
# ---------------------------------------------------------------------------
def lenet_kernel(x_ref, w1_ref, b1_ref, wb_ref, b2_ref,
                 wf1_ref, bf1_ref, wf2_ref, bf2_ref, wf3_ref, bf3_ref,
                 out_ref):
    mdt = w1_ref.dtype                                     # MXU operand dtype (bf16 default)

    # conv1 (3x3, 1->6, VALID) as one dense matmul + ReLU (row-padded layout).
    x = x_ref[...].astype(mdt)                             # (TB, 256)
    c1 = jnp.dot(x, w1_ref[...], preferred_element_type=jnp.float32) + b1_ref[...]
    c1 = jnp.maximum(c1, 0.0)                              # (TB, 1792) f32, pad lanes = 0
    # s2 = F.relu(c1, (2,2)) in the torch code is just another ReLU -> no-op here.
    c1m = c1.astype(mdt)

    # conv2 (5x5, 6->16, VALID) via the shift-invariant band matrix: one shared
    # (640, 256) weight applied to 128-aligned 640-lane slices of c1 (one per output row).
    # Slab lanes [0,128) = even-w columns (pw*16 + oc), [128,256) = odd-w columns.
    # The 2x2 max-pool folds in as full-vreg maxima (no unaligned lane shifts).
    wband = wb_ref[...]
    b2 = b2_ref[...]
    pooled = []
    for ph in range(5):
        row_max = None
        for h2 in (2 * ph, 2 * ph + 1):
            slab = jnp.dot(c1m[:, h2 * 128:(h2 + 5) * 128], wband,
                           preferred_element_type=jnp.float32) + b2
            slab = jnp.maximum(slab, 0.0)                  # (TB, 256)  ReLU(conv2)
            wmax = jnp.maximum(slab[:, :128], slab[:, 128:])   # pool over w (aligned)
            row_max = wmax if row_max is None else jnp.maximum(row_max, wmax)  # pool over h
        pooled.append(row_max)
    s4 = jnp.concatenate(pooled, axis=1)                   # (TB, 640) f32

    # fc1 (pooled-lane selection folded into zero rows of wf1), fc2, fc3 — all padded
    # to 128 output lanes for unmasked, lane-dense intermediates and stores.
    f5 = jnp.dot(s4.astype(mdt), wf1_ref[...],
                 preferred_element_type=jnp.float32) + bf1_ref[...]
    f5 = jnp.maximum(f5, 0.0)                              # (TB, 128)
    f6 = jnp.dot(f5.astype(mdt), wf2_ref[...],
                 preferred_element_type=jnp.float32) + bf2_ref[...]
    f6 = jnp.maximum(f6, 0.0)                              # (TB, 128)
    out_ref[...] = (jnp.dot(f6.astype(mdt), wf3_ref[...],
                            preferred_element_type=jnp.float32) + bf3_ref[...])


# ---------------------------------------------------------------------------
# One-time wrapper-side repack of torch-layout params into kernel matrices.
# matmul_dtype=jnp.float32 gives an exact reformulation (debug); bf16 is the fast path.
# ---------------------------------------------------------------------------
def prepare_params(params, matmul_dtype=jnp.bfloat16):
    (cw1, cb1, cw2, cb2, fw1, fb1, fw2, fb2, fw3, fb3) = (
        np.asarray(p, np.float32) for p in params)

    # conv1 -> (256, 14*128) Toeplitz: row = input pixel h*16+w,
    # col = h1*128 + w1*6 + oc (lanes 84..127 of each 128-lane row stay zero).
    w1m = np.zeros((256, 14 * 128), np.float32)
    h1, w1, oc, kh, kw = np.meshgrid(np.arange(14), np.arange(14), np.arange(6),
                                     np.arange(3), np.arange(3), indexing="ij")
    rows = ((h1 + kh) * 16 + (w1 + kw)).ravel()
    cols = (h1 * 128 + w1 * 6 + oc).ravel()
    w1m[rows, cols] = cw1.reshape(6, 3, 3)[oc.ravel(), kh.ravel(), kw.ravel()]
    b1m = np.zeros((1, 14 * 128), np.float32)
    h1, w1, oc = np.meshgrid(np.arange(14), np.arange(14), np.arange(6), indexing="ij")
    b1m[0, (h1 * 128 + w1 * 6 + oc).ravel()] = cb1[oc.ravel()]

    # conv2 -> shared (640, 256) band matrix (shift-invariant over output rows):
    # row = kh*128 + (w2+kw)*6 + ic, col = (w2%2)*128 + (w2//2)*16 + oc.
    wband = np.zeros((5 * 128, 256), np.float32)
    oc, ic, kh, kw, w2 = np.meshgrid(np.arange(16), np.arange(6), np.arange(5),
                                     np.arange(5), np.arange(10), indexing="ij")
    rows = (kh * 128 + (w2 + kw) * 6 + ic).ravel()
    cols = ((w2 % 2) * 128 + (w2 // 2) * 16 + oc).ravel()
    wband[rows, cols] = cw2[oc.ravel(), ic.ravel(), kh.ravel(), kw.ravel()]
    b2m = np.zeros((1, 256), np.float32)
    wpar, pw, oc = np.meshgrid(np.arange(2), np.arange(5), np.arange(16), indexing="ij")
    b2m[0, (wpar * 128 + pw * 16 + oc).ravel()] = cb2[oc.ravel()]

    # fc1 with pooled-lane selection folded in: s4 lane ph*128 + pw*16 + oc takes the
    # torch-flatten column oc*25 + ph*5 + pw; all other rows stay zero. Pad 120 -> 128.
    wf1m = np.zeros((640, 128), np.float32)
    ph, pw, oc = np.meshgrid(np.arange(5), np.arange(5), np.arange(16), indexing="ij")
    lanes = (ph * 128 + pw * 16 + oc).ravel()
    src = (oc * 25 + ph * 5 + pw).ravel()
    wf1m[lanes, :120] = fw1.T[src, :]
    bf1m = np.zeros((1, 128), np.float32); bf1m[0, :120] = fb1

    # fc2 / fc3 padded to 128x128 (MXU-tile multiples, lane-dense stores).
    wf2m = np.zeros((128, 128), np.float32); wf2m[:120, :84] = fw2.T
    bf2m = np.zeros((1, 128), np.float32);   bf2m[0, :84] = fb2
    wf3m = np.zeros((128, 128), np.float32); wf3m[:84, :43] = fw3.T
    bf3m = np.zeros((1, 128), np.float32);   bf3m[0, :43] = fb3

    w = lambda a: jnp.asarray(a, matmul_dtype)     # MXU operands
    b = lambda a: jnp.asarray(a, jnp.float32)      # biases stay f32
    return (w(w1m), b(b1m), w(wband), b(b2m),
            w(wf1m), b(bf1m), w(wf2m), b(bf2m), w(wf3m), b(bf3m))


def _round_up(n, m):
    return ((n + m - 1) // m) * m


@functools.partial(jax.jit, static_argnames=("block_b",))
def network_forward(x_nchw, packed, block_b=256):
    """x_nchw: (B, 1, 16, 16) f32 (PyTorch NCHW). Returns (B, 43) logits (f32)."""
    B = x_nchw.shape[0]
    b_pad8 = _round_up(B, 8)
    tb = _round_up(min(block_b, b_pad8), 8)
    # v7x: guarantee >= 2 grid steps when the batch allows, so ("parallel",) can shard
    # batch blocks across both TensorCores (v5e/v6e single-TC: negligible cost).
    if b_pad8 >= 16 and b_pad8 <= tb:
        tb = _round_up(b_pad8 // 2, 8)
    b_pad = _round_up(B, tb)

    x = x_nchw.reshape(B, 256).astype(jnp.float32)
    if b_pad != B:
        x = jnp.pad(x, ((0, b_pad - B), (0, 0)))

    # Whole-array VMEM residents: grid-invariant, loaded once, no per-step re-DMA or
    # double-buffering (total ~1.5 MiB bf16 for all weights + biases).
    weight_spec = pl.BlockSpec(memory_space=pltpu.MemorySpace.VMEM)

    out = pl.pallas_call(
        lenet_kernel,
        out_shape=jax.ShapeDtypeStruct((b_pad, 128), jnp.float32),
        grid=(b_pad // tb,),
        in_specs=[pl.BlockSpec((tb, 256), lambda i: (i, 0))] + [weight_spec] * 10,
        out_specs=pl.BlockSpec((tb, 128), lambda i: (i, 0)),
        compiler_params=pltpu.CompilerParams(
            dimension_semantics=("parallel",),
            vmem_limit_bytes=32 * 1024 * 1024),       # safe on v5e/v6e/v7x
    )(x, *packed)
    return out[:B, :43]


# ---------------------------------------------------------------------------
# Plain-JAX reference (torch-layout params, NCHW / OIHW) and param init.
# ---------------------------------------------------------------------------
def reference_forward(x_nchw, params):
    w1, b1, w2, b2, wf1, bf1, wf2, bf2, wf3, bf3 = params
    dn = ('NCHW', 'OIHW', 'NCHW')
    c1 = jax.lax.conv_general_dilated(x_nchw, w1, (1, 1), 'VALID', dimension_numbers=dn)
    c1 = jnp.maximum(c1 + b1[None, :, None, None], 0.0)
    s2 = c1  # F.relu(c1, (2,2)) is a ReLU, not a pool
    c3 = jax.lax.conv_general_dilated(s2, w2, (1, 1), 'VALID', dimension_numbers=dn)
    c3 = jnp.maximum(c3 + b2[None, :, None, None], 0.0)
    s4 = jax.lax.reduce_window(c3, -jnp.inf, jax.lax.max,
                               (1, 1, 2, 2), (1, 1, 2, 2), 'VALID')
    s4 = s4.reshape(s4.shape[0], -1)
    f5 = jnp.maximum(s4 @ wf1.T + bf1, 0.0)
    f6 = jnp.maximum(f5 @ wf2.T + bf2, 0.0)
    return f6 @ wf3.T + bf3


def init_params(key):
    """Deterministic PyTorch-default-style init (U(-1/sqrt(fan_in), 1/sqrt(fan_in)))."""
    ks = jax.random.split(key, 10)

    def u(k, shape, fan_in):
        bound = 1.0 / np.sqrt(fan_in)
        return jax.random.uniform(k, shape, jnp.float32, -bound, bound)

    w1 = u(ks[0], (6, 1, 3, 3), 9);      b1 = u(ks[1], (6,), 9)
    w2 = u(ks[2], (16, 6, 5, 5), 150);   b2 = u(ks[3], (16,), 150)
    wf1 = u(ks[4], (120, 400), 400);     bf1 = u(ks[5], (120,), 400)
    wf2 = u(ks[6], (84, 120), 120);      bf2 = u(ks[7], (84,), 120)
    wf3 = u(ks[8], (43, 84), 84);        bf3 = u(ks[9], (43,), 84)
    return (w1, b1, w2, b2, wf1, bf1, wf2, bf2, wf3, bf3)


if __name__ == "__main__":
    key = jax.random.PRNGKey(0)
    kx, kp = jax.random.split(key)
    x = jax.random.normal(kx, (2, 1, 16, 16), jnp.float32)   # NCHW, as PyTorch
    params = init_params(kp)

    # One-time weight repack (conv -> dense matmul, bf16 MXU operands).
    packed = prepare_params(params, matmul_dtype=jnp.bfloat16)

    out = network_forward(x, packed)
    out = jax.block_until_ready(out)
    assert out.shape == (2, 43)

    ref = reference_forward(x, params)
    # bf16 MXU operands with f32 accumulation -> loose-ish tolerance.
    # (prepare_params(..., matmul_dtype=jnp.float32) reproduces the reference exactly.)
    np.testing.assert_allclose(np.asarray(out), np.asarray(ref), rtol=2e-2, atol=2e-2)

    print("KERNEL_OK")
</pallas_src>

<mosaic_0001>
module attributes {stable_mosaic.version = 11 : i64} {
  func.func @lenet_kernel(%arg0: i32, %arg1: memref<8x256xf32, #tpu.memory_space<vmem>>, %arg2: memref<256x1792xbf16, #tpu.memory_space<vmem>>, %arg3: memref<1x1792xf32, #tpu.memory_space<vmem>>, %arg4: memref<640x256xbf16, #tpu.memory_space<vmem>>, %arg5: memref<1x256xf32, #tpu.memory_space<vmem>>, %arg6: memref<640x128xbf16, #tpu.memory_space<vmem>>, %arg7: memref<1x128xf32, #tpu.memory_space<vmem>>, %arg8: memref<128x128xbf16, #tpu.memory_space<vmem>>, %arg9: memref<1x128xf32, #tpu.memory_space<vmem>>, %arg10: memref<128x128xbf16, #tpu.memory_space<vmem>>, %arg11: memref<1x128xf32, #tpu.memory_space<vmem>>, %arg12: memref<8x128xf32, #tpu.memory_space<vmem>>) attributes {dimension_semantics = [#tpu.dimension_semantics<parallel>], iteration_bounds = array<i64: 1>, scalar_prefetch = 0 : i64, scratch_operands = 0 : i64, tpu.core_type = #tpu.core_type<tc>, window_params = [{transform_indices = @transform_0, window_bounds = array<i64: 8, 256>}, {pipeline_mode = #tpu.pipeline_mode<synchronous>, transform_indices = @transform_1, window_bounds = array<i64: 256, 1792>}, {pipeline_mode = #tpu.pipeline_mode<synchronous>, transform_indices = @transform_2, window_bounds = array<i64: 1, 1792>}, {pipeline_mode = #tpu.pipeline_mode<synchronous>, transform_indices = @transform_3, window_bounds = array<i64: 640, 256>}, {pipeline_mode = #tpu.pipeline_mode<synchronous>, transform_indices = @transform_4, window_bounds = array<i64: 1, 256>}, {pipeline_mode = #tpu.pipeline_mode<synchronous>, transform_indices = @transform_5, window_bounds = array<i64: 640, 128>}, {pipeline_mode = #tpu.pipeline_mode<synchronous>, transform_indices = @transform_6, window_bounds = array<i64: 1, 128>}, {pipeline_mode = #tpu.pipeline_mode<synchronous>, transform_indices = @transform_7, window_bounds = array<i64: 128, 128>}, {pipeline_mode = #tpu.pipeline_mode<synchronous>, transform_indices = @transform_8, window_bounds = array<i64: 1, 128>}, {pipeline_mode = #tpu.pipeline_mode<synchronous>, transform_indices = @transform_9, window_bounds = array<i64: 128, 128>}, {pipeline_mode = #tpu.pipeline_mode<synchronous>, transform_indices = @transform_10, window_bounds = array<i64: 1, 128>}, {transform_indices = @transform_11, window_bounds = array<i64: 8, 128>}]} {
    %c0 = arith.constant 0 : index
    %c0_0 = arith.constant 0 : index
    %0 = vector.load %arg1[%c0, %c0_0] : memref<8x256xf32, #tpu.memory_space<vmem>>, vector<8x256xf32>
    %1 = arith.truncf %0 : vector<8x256xf32> to vector<8x256xbf16>
    %c0_1 = arith.constant 0 : index
    %c0_2 = arith.constant 0 : index
    %2 = vector.load %arg2[%c0_1, %c0_2] : memref<256x1792xbf16, #tpu.memory_space<vmem>>, vector<256x1792xbf16>
    %cst = arith.constant dense<0.000000e+00> : vector<8x1792xf32>
    %3 = tpu.matmul %1, %2, %cst {dimension_numbers = #tpu.dot_dimension_numbers<[1], [0], [0], [1], [0, 0, 1, 1], [], []>} : vector<8x256xbf16>, vector<256x1792xbf16>, vector<8x1792xf32> -> vector<8x1792xf32>
    %c0_3 = arith.constant 0 : index
    %c0_4 = arith.constant 0 : index
    %4 = vector.load %arg3[%c0_3, %c0_4] : memref<1x1792xf32, #tpu.memory_space<vmem>>, vector<1x1792xf32>
    %5 = vector.broadcast %4 : vector<1x1792xf32> to vector<8x1792xf32>
    %6 = arith.addf %3, %5 : vector<8x1792xf32>
    %cst_5 = arith.constant 0.000000e+00 : f32
    %7 = vector.broadcast %cst_5 : f32 to vector<8x1792xf32>
    %8 = arith.maximumf %6, %7 : vector<8x1792xf32>
    %9 = arith.truncf %8 : vector<8x1792xf32> to vector<8x1792xbf16>
    %c0_6 = arith.constant 0 : index
    %c0_7 = arith.constant 0 : index
    %10 = vector.load %arg4[%c0_6, %c0_7] : memref<640x256xbf16, #tpu.memory_space<vmem>>, vector<640x256xbf16>
    %c0_8 = arith.constant 0 : index
    %c0_9 = arith.constant 0 : index
    %11 = vector.load %arg5[%c0_8, %c0_9] : memref<1x256xf32, #tpu.memory_space<vmem>>, vector<1x256xf32>
    %12 = vector.extract_strided_slice %9 {offsets = [0, 0], sizes = [8, 640], strides = [1, 1]} : vector<8x1792xbf16> to vector<8x640xbf16>
    %cst_10 = arith.constant dense<0.000000e+00> : vector<8x256xf32>
    %13 = tpu.matmul %12, %10, %cst_10 {dimension_numbers = #tpu.dot_dimension_numbers<[1], [0], [0], [1], [0, 0, 1, 1], [], []>} : vector<8x640xbf16>, vector<640x256xbf16>, vector<8x256xf32> -> vector<8x256xf32>
    %14 = vector.broadcast %11 : vector<1x256xf32> to vector<8x256xf32>
    %15 = arith.addf %13, %14 : vector<8x256xf32>
    %cst_11 = arith.constant 0.000000e+00 : f32
    %16 = vector.broadcast %cst_11 : f32 to vector<8x256xf32>
    %17 = arith.maximumf %15, %16 : vector<8x256xf32>
    %18 = vector.extract_strided_slice %17 {offsets = [0, 0], sizes = [8, 128], strides = [1, 1]} : vector<8x256xf32> to vector<8x128xf32>
    %19 = vector.extract_strided_slice %17 {offsets = [0, 128], sizes = [8, 128], strides = [1, 1]} : vector<8x256xf32> to vector<8x128xf32>
    %20 = arith.maximumf %18, %19 : vector<8x128xf32>
    %21 = vector.extract_strided_slice %9 {offsets = [0, 128], sizes = [8, 640], strides = [1, 1]} : vector<8x1792xbf16> to vector<8x640xbf16>
    %cst_12 = arith.constant dense<0.000000e+00> : vector<8x256xf32>
    %22 = tpu.matmul %21, %10, %cst_12 {dimension_numbers = #tpu.dot_dimension_numbers<[1], [0], [0], [1], [0, 0, 1, 1], [], []>} : vector<8x640xbf16>, vector<640x256xbf16>, vector<8x256xf32> -> vector<8x256xf32>
    %23 = vector.broadcast %11 : vector<1x256xf32> to vector<8x256xf32>
    %24 = arith.addf %22, %23 : vector<8x256xf32>
    %cst_13 = arith.constant 0.000000e+00 : f32
    %25 = vector.broadcast %cst_13 : f32 to vector<8x256xf32>
    %26 = arith.maximumf %24, %25 : vector<8x256xf32>
    %27 = vector.extract_strided_slice %26 {offsets = [0, 0], sizes = [8, 128], strides = [1, 1]} : vector<8x256xf32> to vector<8x128xf32>
    %28 = vector.extract_strided_slice %26 {offsets = [0, 128], sizes = [8, 128], strides = [1, 1]} : vector<8x256xf32> to vector<8x128xf32>
    %29 = arith.maximumf %27, %28 : vector<8x128xf32>
    %30 = arith.maximumf %20, %29 : vector<8x128xf32>
    %31 = vector.extract_strided_slice %9 {offsets = [0, 256], sizes = [8, 640], strides = [1, 1]} : vector<8x1792xbf16> to vector<8x640xbf16>
    %cst_14 = arith.constant dense<0.000000e+00> : vector<8x256xf32>
    %32 = tpu.matmul %31, %10, %cst_14 {dimension_numbers = #tpu.dot_dimension_numbers<[1], [0], [0], [1], [0, 0, 1, 1], [], []>} : vector<8x640xbf16>, vector<640x256xbf16>, vector<8x256xf32> -> vector<8x256xf32>
    %33 = vector.broadcast %11 : vector<1x256xf32> to vector<8x256xf32>
    %34 = arith.addf %32, %33 : vector<8x256xf32>
    %cst_15 = arith.constant 0.000000e+00 : f32
    %35 = vector.broadcast %cst_15 : f32 to vector<8x256xf32>
    %36 = arith.maximumf %34, %35 : vector<8x256xf32>
    %37 = vector.extract_strided_slice %36 {offsets = [0, 0], sizes = [8, 128], strides = [1, 1]} : vector<8x256xf32> to vector<8x128xf32>
    %38 = vector.extract_strided_slice %36 {offsets = [0, 128], sizes = [8, 128], strides = [1, 1]} : vector<8x256xf32> to vector<8x128xf32>
    %39 = arith.maximumf %37, %38 : vector<8x128xf32>
    %40 = vector.extract_strided_slice %9 {offsets = [0, 384], sizes = [8, 640], strides = [1, 1]} : vector<8x1792xbf16> to vector<8x640xbf16>
    %cst_16 = arith.constant dense<0.000000e+00> : vector<8x256xf32>
    %41 = tpu.matmul %40, %10, %cst_16 {dimension_numbers = #tpu.dot_dimension_numbers<[1], [0], [0], [1], [0, 0, 1, 1], [], []>} : vector<8x640xbf16>, vector<640x256xbf16>, vector<8x256xf32> -> vector<8x256xf32>
    %42 = vector.broadcast %11 : vector<1x256xf32> to vector<8x256xf32>
    %43 = arith.addf %41, %42 : vector<8x256xf32>
    %cst_17 = arith.constant 0.000000e+00 : f32
    %44 = vector.broadcast %cst_17 : f32 to vector<8x256xf32>
    %45 = arith.maximumf %43, %44 : vector<8x256xf32>
    %46 = vector.extract_strided_slice %45 {offsets = [0, 0], sizes = [8, 128], strides = [1, 1]} : vector<8x256xf32> to vector<8x128xf32>
    %47 = vector.extract_strided_slice %45 {offsets = [0, 128], sizes = [8, 128], strides = [1, 1]} : vector<8x256xf32> to vector<8x128xf32>
    %48 = arith.maximumf %46, %47 : vector<8x128xf32>
    %49 = arith.maximumf %39, %48 : vector<8x128xf32>
    %50 = vector.extract_strided_slice %9 {offsets = [0, 512], sizes = [8, 640], strides = [1, 1]} : vector<8x1792xbf16> to vector<8x640xbf16>
    %cst_18 = arith.constant dense<0.000000e+00> : vector<8x256xf32>
    %51 = tpu.matmul %50, %10, %cst_18 {dimension_numbers = #tpu.dot_dimension_numbers<[1], [0], [0], [1], [0, 0, 1, 1], [], []>} : vector<8x640xbf16>, vector<640x256xbf16>, vector<8x256xf32> -> vector<8x256xf32>
    %52 = vector.broadcast %11 : vector<1x256xf32> to vector<8x256xf32>
    %53 = arith.addf %51, %52 : vector<8x256xf32>
    %cst_19 = arith.constant 0.000000e+00 : f32
    %54 = vector.broadcast %cst_19 : f32 to vector<8x256xf32>
    %55 = arith.maximumf %53, %54 : vector<8x256xf32>
    %56 = vector.extract_strided_slice %55 {offsets = [0, 0], sizes = [8, 128], strides = [1, 1]} : vector<8x256xf32> to vector<8x128xf32>
    %57 = vector.extract_strided_slice %55 {offsets = [0, 128], sizes = [8, 128], strides = [1, 1]} : vector<8x256xf32> to vector<8x128xf32>
    %58 = arith.maximumf %56, %57 : vector<8x128xf32>
    %59 = vector.extract_strided_slice %9 {offsets = [0, 640], sizes = [8, 640], strides = [1, 1]} : vector<8x1792xbf16> to vector<8x640xbf16>
    %cst_20 = arith.constant dense<0.000000e+00> : vector<8x256xf32>
    %60 = tpu.matmul %59, %10, %cst_20 {dimension_numbers = #tpu.dot_dimension_numbers<[1], [0], [0], [1], [0, 0, 1, 1], [], []>} : vector<8x640xbf16>, vector<640x256xbf16>, vector<8x256xf32> -> vector<8x256xf32>
    %61 = vector.broadcast %11 : vector<1x256xf32> to vector<8x256xf32>
    %62 = arith.addf %60, %61 : vector<8x256xf32>
    %cst_21 = arith.constant 0.000000e+00 : f32
    %63 = vector.broadcast %cst_21 : f32 to vector<8x256xf32>
    %64 = arith.maximumf %62, %63 : vector<8x256xf32>
    %65 = vector.extract_strided_slice %64 {offsets = [0, 0], sizes = [8, 128], strides = [1, 1]} : vector<8x256xf32> to vector<8x128xf32>
    %66 = vector.extract_strided_slice %64 {offsets = [0, 128], sizes = [8, 128], strides = [1, 1]} : vector<8x256xf32> to vector<8x128xf32>
    %67 = arith.maximumf %65, %66 : vector<8x128xf32>
    %68 = arith.maximumf %58, %67 : vector<8x128xf32>
    %69 = vector.extract_strided_slice %9 {offsets = [0, 768], sizes = [8, 640], strides = [1, 1]} : vector<8x1792xbf16> to vector<8x640xbf16>
    %cst_22 = arith.constant dense<0.000000e+00> : vector<8x256xf32>
    %70 = tpu.matmul %69, %10, %cst_22 {dimension_numbers = #tpu.dot_dimension_numbers<[1], [0], [0], [1], [0, 0, 1, 1], [], []>} : vector<8x640xbf16>, vector<640x256xbf16>, vector<8x256xf32> -> vector<8x256xf32>
    %71 = vector.broadcast %11 : vector<1x256xf32> to vector<8x256xf32>
    %72 = arith.addf %70, %71 : vector<8x256xf32>
    %cst_23 = arith.constant 0.000000e+00 : f32
    %73 = vector.broadcast %cst_23 : f32 to vector<8x256xf32>
    %74 = arith.maximumf %72, %73 : vector<8x256xf32>
    %75 = vector.extract_strided_slice %74 {offsets = [0, 0], sizes = [8, 128], strides = [1, 1]} : vector<8x256xf32> to vector<8x128xf32>
    %76 = vector.extract_strided_slice %74 {offsets = [0, 128], sizes = [8, 128], strides = [1, 1]} : vector<8x256xf32> to vector<8x128xf32>
    %77 = arith.maximumf %75, %76 : vector<8x128xf32>
    %78 = vector.extract_strided_slice %9 {offsets = [0, 896], sizes = [8, 640], strides = [1, 1]} : vector<8x1792xbf16> to vector<8x640xbf16>
    %cst_24 = arith.constant dense<0.000000e+00> : vector<8x256xf32>
    %79 = tpu.matmul %78, %10, %cst_24 {dimension_numbers = #tpu.dot_dimension_numbers<[1], [0], [0], [1], [0, 0, 1, 1], [], []>} : vector<8x640xbf16>, vector<640x256xbf16>, vector<8x256xf32> -> vector<8x256xf32>
    %80 = vector.broadcast %11 : vector<1x256xf32> to vector<8x256xf32>
    %81 = arith.addf %79, %80 : vector<8x256xf32>
    %cst_25 = arith.constant 0.000000e+00 : f32
    %82 = vector.broadcast %cst_25 : f32 to vector<8x256xf32>
    %83 = arith.maximumf %81, %82 : vector<8x256xf32>
    %84 = vector.extract_strided_slice %83 {offsets = [0, 0], sizes = [8, 128], strides = [1, 1]} : vector<8x256xf32> to vector<8x128xf32>
    %85 = vector.extract_strided_slice %83 {offsets = [0, 128], sizes = [8, 128], strides = [1, 1]} : vector<8x256xf32> to vector<8x128xf32>
    %86 = arith.maximumf %84, %85 : vector<8x128xf32>
    %87 = arith.maximumf %77, %86 : vector<8x128xf32>
    %88 = vector.extract_strided_slice %9 {offsets = [0, 1024], sizes = [8, 640], strides = [1, 1]} : vector<8x1792xbf16> to vector<8x640xbf16>
    %cst_26 = arith.constant dense<0.000000e+00> : vector<8x256xf32>
    %89 = tpu.matmul %88, %10, %cst_26 {dimension_numbers = #tpu.dot_dimension_numbers<[1], [0], [0], [1], [0, 0, 1, 1], [], []>} : vector<8x640xbf16>, vector<640x256xbf16>, vector<8x256xf32> -> vector<8x256xf32>
    %90 = vector.broadcast %11 : vector<1x256xf32> to vector<8x256xf32>
    %91 = arith.addf %89, %90 : vector<8x256xf32>
    %cst_27 = arith.constant 0.000000e+00 : f32
    %92 = vector.broadcast %cst_27 : f32 to vector<8x256xf32>
    %93 = arith.maximumf %91, %92 : vector<8x256xf32>
    %94 = vector.extract_strided_slice %93 {offsets = [0, 0], sizes = [8, 128], strides = [1, 1]} : vector<8x256xf32> to vector<8x128xf32>
    %95 = vector.extract_strided_slice %93 {offsets = [0, 128], sizes = [8, 128], strides = [1, 1]} : vector<8x256xf32> to vector<8x128xf32>
    %96 = arith.maximumf %94, %95 : vector<8x128xf32>
    %97 = vector.extract_strided_slice %9 {offsets = [0, 1152], sizes = [8, 640], strides = [1, 1]} : vector<8x1792xbf16> to vector<8x640xbf16>
    %cst_28 = arith.constant dense<0.000000e+00> : vector<8x256xf32>
    %98 = tpu.matmul %97, %10, %cst_28 {dimension_numbers = #tpu.dot_dimension_numbers<[1], [0], [0], [1], [0, 0, 1, 1], [], []>} : vector<8x640xbf16>, vector<640x256xbf16>, vector<8x256xf32> -> vector<8x256xf32>
    %99 = vector.broadcast %11 : vector<1x256xf32> to vector<8x256xf32>
    %100 = arith.addf %98, %99 : vector<8x256xf32>
    %cst_29 = arith.constant 0.000000e+00 : f32
    %101 = vector.broadcast %cst_29 : f32 to vector<8x256xf32>
    %102 = arith.maximumf %100, %101 : vector<8x256xf32>
    %103 = vector.extract_strided_slice %102 {offsets = [0, 0], sizes = [8, 128], strides = [1, 1]} : vector<8x256xf32> to vector<8x128xf32>
    %104 = vector.extract_strided_slice %102 {offsets = [0, 128], sizes = [8, 128], strides = [1, 1]} : vector<8x256xf32> to vector<8x128xf32>
    %105 = arith.maximumf %103, %104 : vector<8x128xf32>
    %106 = arith.maximumf %96, %105 : vector<8x128xf32>
    %107 = tpu.concatenate %30, %49, %68, %87, %106 in 1 : vector<8x128xf32>, vector<8x128xf32>, vector<8x128xf32>, vector<8x128xf32>, vector<8x128xf32> -> vector<8x640xf32>
    %108 = arith.truncf %107 : vector<8x640xf32> to vector<8x640xbf16>
    %c0_30 = arith.constant 0 : index
    %c0_31 = arith.constant 0 : index
    %109 = vector.load %arg6[%c0_30, %c0_31] : memref<640x128xbf16, #tpu.memory_space<vmem>>, vector<640x128xbf16>
    %cst_32 = arith.constant dense<0.000000e+00> : vector<8x128xf32>
    %110 = tpu.matmul %108, %109, %cst_32 {dimension_numbers = #tpu.dot_dimension_numbers<[1], [0], [0], [1], [0, 0, 1, 1], [], []>} : vector<8x640xbf16>, vector<640x128xbf16>, vector<8x128xf32> -> vector<8x128xf32>
    %c0_33 = arith.constant 0 : index
    %c0_34 = arith.constant 0 : index
    %111 = vector.load %arg7[%c0_33, %c0_34] : memref<1x128xf32, #tpu.memory_space<vmem>>, vector<1x128xf32>
    %112 = vector.broadcast %111 : vector<1x128xf32> to vector<8x128xf32>
    %113 = arith.addf %110, %112 : vector<8x128xf32>
    %cst_35 = arith.constant 0.000000e+00 : f32
    %114 = vector.broadcast %cst_35 : f32 to vector<8x128xf32>
    %115 = arith.maximumf %113, %114 : vector<8x128xf32>
    %116 = arith.truncf %115 : vector<8x128xf32> to vector<8x128xbf16>
    %c0_36 = arith.constant 0 : index
    %c0_37 = arith.constant 0 : index
    %117 = vector.load %arg8[%c0_36, %c0_37] : memref<128x128xbf16, #tpu.memory_space<vmem>>, vector<128x128xbf16>
    %cst_38 = arith.constant dense<0.000000e+00> : vector<8x128xf32>
    %118 = tpu.matmul %116, %117, %cst_38 {dimension_numbers = #tpu.dot_dimension_numbers<[1], [0], [0], [1], [0, 0, 1, 1], [], []>} : vector<8x128xbf16>, vector<128x128xbf16>, vector<8x128xf32> -> vector<8x128xf32>
    %c0_39 = arith.constant 0 : index
    %c0_40 = arith.constant 0 : index
    %119 = vector.load %arg9[%c0_39, %c0_40] : memref<1x128xf32, #tpu.memory_space<vmem>>, vector<1x128xf32>
    %120 = vector.broadcast %119 : vector<1x128xf32> to vector<8x128xf32>
    %121 = arith.addf %118, %120 : vector<8x128xf32>
    %cst_41 = arith.constant 0.000000e+00 : f32
    %122 = vector.broadcast %cst_41 : f32 to vector<8x128xf32>
    %123 = arith.maximumf %121, %122 : vector<8x128xf32>
    %124 = arith.truncf %123 : vector<8x128xf32> to vector<8x128xbf16>
    %c0_42 = arith.constant 0 : index
    %c0_43 = arith.constant 0 : index
    %125 = vector.load %arg10[%c0_42, %c0_43] : memref<128x128xbf16, #tpu.memory_space<vmem>>, vector<128x128xbf16>
    %cst_44 = arith.constant dense<0.000000e+00> : vector<8x128xf32>
    %126 = tpu.matmul %124, %125, %cst_44 {dimension_numbers = #tpu.dot_dimension_numbers<[1], [0], [0], [1], [0, 0, 1, 1], [], []>} : vector<8x128xbf16>, vector<128x128xbf16>, vector<8x128xf32> -> vector<8x128xf32>
    %c0_45 = arith.constant 0 : index
    %c0_46 = arith.constant 0 : index
    %127 = vector.load %arg11[%c0_45, %c0_46] : memref<1x128xf32, #tpu.memory_space<vmem>>, vector<1x128xf32>
    %128 = vector.broadcast %127 : vector<1x128xf32> to vector<8x128xf32>
    %129 = arith.addf %126, %128 : vector<8x128xf32>
    %c0_47 = arith.constant 0 : index
    %c0_48 = arith.constant 0 : index
    %130 = vector.load %arg12[%c0_47, %c0_48] : memref<8x128xf32, #tpu.memory_space<vmem>>, vector<8x128xf32>
    tpu.vector_store %arg12[%c0_47, %c0_48], %129 {strides = array<i32>} : memref<8x128xf32, #tpu.memory_space<vmem>>, vector<8x128xf32>,
    return
  }
  func.func @transform_0(%arg0: i32) -> (i32, i32) {
    %c0_i32 = arith.constant 0 : i32
    %c0_i32_0 = arith.constant 0 : i32
    return %arg0, %c0_i32 : i32, i32
  }
  func.func @transform_1(%arg0: i32) -> (i32, i32) {
    %c0_i32 = arith.constant 0 : i32
    %c0_i32_0 = arith.constant 0 : i32
    %c0_i32_1 = arith.constant 0 : i32
    return %c0_i32, %c0_i32_0 : i32, i32
  }
  func.func @transform_2(%arg0: i32) -> (i32, i32) {
    %c0_i32 = arith.constant 0 : i32
    %c0_i32_0 = arith.constant 0 : i32
    %c0_i32_1 = arith.constant 0 : i32
    return %c0_i32, %c0_i32_0 : i32, i32
  }
  func.func @transform_3(%arg0: i32) -> (i32, i32) {
    %c0_i32 = arith.constant 0 : i32
    %c0_i32_0 = arith.constant 0 : i32
    %c0_i32_1 = arith.constant 0 : i32
    return %c0_i32, %c0_i32_0 : i32, i32
  }
  func.func @transform_4(%arg0: i32) -> (i32, i32) {
    %c0_i32 = arith.constant 0 : i32
    %c0_i32_0 = arith.constant 0 : i32
    %c0_i32_1 = arith.constant 0 : i32
    return %c0_i32, %c0_i32_0 : i32, i32
  }
  func.func @transform_5(%arg0: i32) -> (i32, i32) {
    %c0_i32 = arith.constant 0 : i32
    %c0_i32_0 = arith.constant 0 : i32
    %c0_i32_1 = arith.constant 0 : i32
    return %c0_i32, %c0_i32_0 : i32, i32
  }
  func.func @transform_6(%arg0: i32) -> (i32, i32) {
    %c0_i32 = arith.constant 0 : i32
    %c0_i32_0 = arith.constant 0 : i32
    %c0_i32_1 = arith.constant 0 : i32
    return %c0_i32, %c0_i32_0 : i32, i32
  }
  func.func @transform_7(%arg0: i32) -> (i32, i32) {
    %c0_i32 = arith.constant 0 : i32
    %c0_i32_0 = arith.constant 0 : i32
    %c0_i32_1 = arith.constant 0 : i32
    return %c0_i32, %c0_i32_0 : i32, i32
  }
  func.func @transform_8(%arg0: i32) -> (i32, i32) {
    %c0_i32 = arith.constant 0 : i32
    %c0_i32_0 = arith.constant 0 : i32
    %c0_i32_1 = arith.constant 0 : i32
    return %c0_i32, %c0_i32_0 : i32, i32
  }
  func.func @transform_9(%arg0: i32) -> (i32, i32) {
    %c0_i32 = arith.constant 0 : i32
    %c0_i32_0 = arith.constant 0 : i32
    %c0_i32_1 = arith.constant 0 : i32
    return %c0_i32, %c0_i32_0 : i32, i32
  }
  func.func @transform_10(%arg0: i32) -> (i32, i32) {
    %c0_i32 = arith.constant 0 : i32
    %c0_i32_0 = arith.constant 0 : i32
    %c0_i32_1 = arith.constant 0 : i32
    return %c0_i32, %c0_i32_0 : i32, i32
  }
  func.func @transform_11(%arg0: i32) -> (i32, i32) {
    %c0_i32 = arith.constant 0 : i32
    %c0_i32_0 = arith.constant 0 : i32
    return %arg0, %c0_i32 : i32, i32
  }
}

</mosaic_0001>

<llo_original>
// kernel: network_forward.1
$region0: #{network_forward.1}
  #allocation0 [shape = 'u32[]', space=smem, size = 0x4, offset = 0x4, fixed_abs, tag = 'smem constant byte address 0x4 - core index']
  #allocation1 [shape = 'u32[144,128]{1,0:T(1,128)}', space=vmem, size = 0x12000, scoped, tag = 'internal scratch']
  %s0 = inlined_call_operand.vmem [shape: f32[8,256], index: 0, kind: input, shape index: {}]
  %s1 = inlined_call_operand.hbm [shape: bf16[256,1792], index: 1, kind: input, shape index: {}]
  %s2 = inlined_call_operand.hbm [shape: f32[1,1792], index: 2, kind: input, shape index: {}]
  %s3 = inlined_call_operand.hbm [shape: bf16[640,256], index: 3, kind: input, shape index: {}]
  %s4 = inlined_call_operand.vmem [shape: f32[1,256], index: 4, kind: input, shape index: {}]
  %s5 = inlined_call_operand.hbm [shape: bf16[640,128], index: 5, kind: input, shape index: {}]
  %s6 = inlined_call_operand.vmem [shape: f32[1,128], index: 6, kind: input, shape index: {}]
  %s7 = inlined_call_operand.vmem [shape: bf16[128,128], index: 7, kind: input, shape index: {}]
  %s8 = inlined_call_operand.vmem [shape: f32[1,128], index: 8, kind: input, shape index: {}]
  %s9 = inlined_call_operand.hbm [shape: bf16[128,128], index: 9, kind: input, shape index: {}]
  %s10 = inlined_call_operand.vmem [shape: f32[1,128], index: 10, kind: input, shape index: {}]
  %s11 = inlined_call_operand.vmem [shape: f32[8,128], index: 11, kind: output, shape index: {}]
  %s12 = sld [smem:[#allocation0]]
  $region74: #{network_forward.1} parent=0
    _
  %s14 = ssub.s32 1, %s12
  %s15 = scalar_select 0, %s14, %s12
  $region1: #{network_forward.1} parent=0
    #allocation2 [shape = 'u8[917504]{0}', space=vmem, size = 0xe0000, scoped, tag = 'input window, operand 1, single buffered']
    #allocation3 [shape = 's32[1]{0}', space=sflag, size = 0x4, scoped, tag = 'scoped memory for network_forward.1']
    #allocation4 [shape = 'u8[7168]{0}', space=vmem, size = 0x1c00, scoped, tag = 'input window, operand 2, single buffered']
    #allocation5 [shape = 's32[1]{0}', space=sflag, size = 0x4, scoped, tag = 'scoped memory for network_forward.1']
    #allocation6 [shape = 'u8[327680]{0}', space=vmem, size = 0x50000, scoped, tag = 'input window, operand 3, single buffered']
    #allocation7 [shape = 'u8[163840]{0}', space=vmem, size = 0x28000, scoped, tag = 'input window, operand 5, single buffered']
    #allocation8 [shape = 's32[1]{0}', space=sflag, size = 0x4, scoped, tag = 'scoped memory for network_forward.1']
    #allocation9 [shape = 'u8[32768]{0}', space=vmem, size = 0x8000, scoped, tag = 'input window, operand 9, single buffered']
    %16 = vsyncpa [#allocation3], 0
    %17 = vsyncpa [#allocation5], 0
    %18 = vsyncpa [#allocation8], 0
    // Predicated region
    $region2: #{network_forward.1} parent=1 // pred_check
      _
    $region3: #{network_forward.1} parent=1 // pred_check_branch
      %20 = sbr.rel (0) target = $region5
    $region4: #{network_forward.1} parent=1 // pred_region
      _
    $region5: #{network_forward.1} parent=1 // pred_fallthru
      _
    // Predicated region
    $region6: #{network_forward.1} parent=1 // pred_check
      _
    $region7: #{network_forward.1} parent=1 // pred_check_branch
      %22 = sbr.rel (0) target = $region9
    $region8: #{network_forward.1} parent=1 // pred_region
      %s24 = ssub.s32 28672, 28672
      %25 = vsyncadd [#allocation3], %s24
      %s26 = sshll.u32 [#allocation2], 4
      %s27 = int_to_ptr.vmem [resolvable:$true] %s26
      %32 = dma.hbm_to_vmem [thread:$0]  %s1, 28672, %s27, [#allocation3], 896, 896, 56
    $region9: #{network_forward.1} parent=1 // pred_fallthru
      _
    // Predicated region
    $region10: #{network_forward.1} parent=1 // pred_check
      _
    $region11: #{network_forward.1} parent=1 // pred_check_branch
      %34 = sbr.rel (0) target = $region13
    $region12: #{network_forward.1} parent=1 // pred_region
      %s36 = ssub.s32 224, 224
      %37 = vsyncadd [#allocation5], %s36
      %s39 = sshll.u32 [#allocation4], 4
      %s40 = int_to_ptr.vmem [resolvable:$true] %s39
      %42 = dma.hbm_to_vmem [thread:$0]  %s2, 224, %s40, [#allocation5]
    $region13: #{network_forward.1} parent=1 // pred_fallthru
      _
    // Predicated region
    $region14: #{network_forward.1} parent=1 // pred_check
      _
    $region15: #{network_forward.1} parent=1 // pred_check_branch
      %44 = sbr.rel (0) target = $region17
    $region16: #{network_forward.1} parent=1 // pred_region
      %s46 = ssub.s32 10240, 10240
      %47 = vsyncadd [#allocation5], %s46
      %s48 = sshll.u32 [#allocation6], 4
      %s49 = int_to_ptr.vmem [resolvable:$true] %s48
      %54 = dma.hbm_to_vmem [thread:$0]  %s3, 10240, %s49, [#allocation5], 128, 128, 8
    $region17: #{network_forward.1} parent=1 // pred_fallthru
      _
    // Predicated region
    $region18: #{network_forward.1} parent=1 // pred_check
      _
    $region19: #{network_forward.1} parent=1 // pred_check_branch
      %56 = sbr.rel (0) target = $region21
    $region20: #{network_forward.1} parent=1 // pred_region
      _
    $region21: #{network_forward.1} parent=1 // pred_fallthru
      _
    // Predicated region
    $region22: #{network_forward.1} parent=1 // pred_check
      _
    $region23: #{network_forward.1} parent=1 // pred_check_branch
      %58 = sbr.rel (0) target = $region25
    $region24: #{network_forward.1} parent=1 // pred_region
      %s60 = ssub.s32 5120, 5120
      %61 = vsyncadd [#allocation8], %s60
      %s62 = sshll.u32 [#allocation7], 4
      %s63 = int_to_ptr.vmem [resolvable:$true] %s62
      %68 = dma.hbm_to_vmem [thread:$0]  %s5, 5120, %s63, [#allocation8], 64, 64, 4
    $region25: #{network_forward.1} parent=1 // pred_fallthru
      _
    // Predicated region
    $region26: #{network_forward.1} parent=1 // pred_check
      _
    $region27: #{network_forward.1} parent=1 // pred_check_branch
      %70 = sbr.rel (0) target = $region29
    $region28: #{network_forward.1} parent=1 // pred_region
      _
    $region29: #{network_forward.1} parent=1 // pred_fallthru
      _
    // Predicated region
    $region30: #{network_forward.1} parent=1 // pred_check
      _
    $region31: #{network_forward.1} parent=1 // pred_check_branch
      %72 = sbr.rel (0) target = $region33
    $region32: #{network_forward.1} parent=1 // pred_region
      _
    $region33: #{network_forward.1} parent=1 // pred_fallthru
      _
    // Predicated region
    $region34: #{network_forward.1} parent=1 // pred_check
      _
    $region35: #{network_forward.1} parent=1 // pred_check_branch
      %74 = sbr.rel (0) target = $region37
    $region36: #{network_forward.1} parent=1 // pred_region
      _
    $region37: #{network_forward.1} parent=1 // pred_fallthru
      _
    // Predicated region
    $region38: #{network_forward.1} parent=1 // pred_check
      _
    $region39: #{network_forward.1} parent=1 // pred_check_branch
      %76 = sbr.rel (0) target = $region41
    $region40: #{network_forward.1} parent=1 // pred_region
      %s78 = ssub.s32 1024, 1024
      %79 = vsyncadd [#allocation8], %s78
      %s80 = sshll.u32 [#allocation9], 4
      %s81 = int_to_ptr.vmem [resolvable:$true] %s80
      %86 = dma.hbm_to_vmem [thread:$0]  %s9, 1024, %s81, [#allocation8], 64, 64, 4
    $region41: #{network_forward.1} parent=1 // pred_fallthru
      _
    // Predicated region
    $region42: #{network_forward.1} parent=1 // pred_check
      _
    $region43: #{network_forward.1} parent=1 // pred_check_branch
      %88 = sbr.rel (0) target = $region45
    $region44: #{network_forward.1} parent=1 // pred_region
      _
    $region45: #{network_forward.1} parent=1 // pred_fallthru
      _
    // Predicated region
    $region46: #{network_forward.1} parent=1 // pred_check
      _
    $region47: #{network_forward.1} parent=1 // pred_check_branch
      %90 = sbr.rel (0) target = $region49
    $region48: #{network_forward.1} parent=1 // pred_region
      %91 = dma.done [#allocation3], 28672
    $region49: #{network_forward.1} parent=1 // pred_fallthru
      _
    // Predicated region
    $region50: #{network_forward.1} parent=1 // pred_check
      _
    $region51: #{network_forward.1} parent=1 // pred_check_branch
      %93 = sbr.rel (0) target = $region53
    $region52: #{network_forward.1} parent=1 // pred_region
      %94 = dma.done [#allocation5], 224
    $region53: #{network_forward.1} parent=1 // pred_fallthru
      _
    // Predicated region
    $region54: #{network_forward.1} parent=1 // pred_check
      _
    $region55: #{network_forward.1} parent=1 // pred_check_branch
      %96 = sbr.rel (0) target = $region57
    $region56: #{network_forward.1} parent=1 // pred_region
      %97 = dma.done [#allocation5], 10240
    $region57: #{network_forward.1} parent=1 // pred_fallthru
      _
    // Predicated region
    $region58: #{network_forward.1} parent=1 // pred_check
      _
    $region59: #{network_forward.1} parent=1 // pred_check_branch
      %99 = sbr.rel (0) target = $region61
    $region60: #{network_forward.1} parent=1 // pred_region
      %100 = dma.done [#allocation8], 5120
    $region61: #{network_forward.1} parent=1 // pred_fallthru
      _
    // Predicated region
    $region62: #{network_forward.1} parent=1 // pred_check
      _
    $region63: #{network_forward.1} parent=1 // pred_check_branch
      %102 = sbr.rel (0) target = $region65
    $region64: #{network_forward.1} parent=1 // pred_region
      %103 = dma.done [#allocation8], 1024
    $region65: #{network_forward.1} parent=1 // pred_fallthru
      _
    %v105 = vld [vmem:[%s0] sm:$0xff]
    %v106 = vld [vmem:[%s0 + $0x8] sm:$0xff]
    %v107 = vpack.c.bf16 %v105, %v105
    %v108 = vpack.c.bf16 %v106, %v106
    %v109 = vld [vmem:[#allocation2] sm:$0xff]
    %v110 = vld [vmem:[#allocation2 + $0x8] sm:$0xff]
    %v111 = vld [vmem:[#allocation2 + $0x10] sm:$0xff]
    %v112 = vld [vmem:[#allocation2 + $0x18] sm:$0xff]
    %v113 = vld [vmem:[#allocation2 + $0x20] sm:$0xff]
    %v114 = vld [vmem:[#allocation2 + $0x28] sm:$0xff]
    %v115 = vld [vmem:[#allocation2 + $0x30] sm:$0xff]
    %v116 = vld [vmem:[#allocation2 + $0x38] sm:$0xff]
    %v117 = vld [vmem:[#allocation2 + $0x40] sm:$0xff]
    %v118 = vld [vmem:[#allocation2 + $0x48] sm:$0xff]
    %v119 = vld [vmem:[#allocation2 + $0x50] sm:$0xff]
    %v120 = vld [vmem:[#allocation2 + $0x58] sm:$0xff]
    %v121 = vld [vmem:[#allocation2 + $0x60] sm:$0xff]
    %v122 = vld [vmem:[#allocation2 + $0x68] sm:$0xff]
    %v123 = vld [vmem:[#allocation2 + $0x70] sm:$0xff]
    %v124 = vld [vmem:[#allocation2 + $0x78] sm:$0xff]
    %v125 = vld [vmem:[#allocation2 + $0x80] sm:$0xff]
    %v126 = vld [vmem:[#allocation2 + $0x88] sm:$0xff]
    %v127 = vld [vmem:[#allocation2 + $0x90] sm:$0xff]
    %v128 = vld [vmem:[#allocation2 + $0x98] sm:$0xff]
    %v129 = vld [vmem:[#allocation2 + $0xa0] sm:$0xff]
    %v130 = vld [vmem:[#allocation2 + $0xa8] sm:$0xff]
    %v131 = vld [vmem:[#allocation2 + $0xb0] sm:$0xff]
    %v132 = vld [vmem:[#allocation2 + $0xb8] sm:$0xff]
    %v133 = vld [vmem:[#allocation2 + $0xc0] sm:$0xff]
    %v134 = vld [vmem:[#allocation2 + $0xc8] sm:$0xff]
    %v135 = vld [vmem:[#allocation2 + $0xd0] sm:$0xff]
    %v136 = vld [vmem:[#allocation2 + $0xd8] sm:$0xff]
    %v137 = vld [vmem:[#allocation2 + $0xe0] sm:$0xff]
    %v138 = vld [vmem:[#allocation2 + $0xe8] sm:$0xff]
    %v139 = vld [vmem:[#allocation2 + $0xf0] sm:$0xff]
    %v140 = vld [vmem:[#allocation2 + $0xf8] sm:$0xff]
    %v141 = vld [vmem:[#allocation2 + $0x100] sm:$0xff]
    %v142 = vld [vmem:[#allocation2 + $0x108] sm:$0xff]
    %v143 = vld [vmem:[#allocation2 + $0x110] sm:$0xff]
    %v144 = vld [vmem:[#allocation2 + $0x118] sm:$0xff]
    %v145 = vld [vmem:[#allocation2 + $0x120] sm:$0xff]
    %v146 = vld [vmem:[#allocation2 + $0x128] sm:$0xff]
    %v147 = vld [vmem:[#allocation2 + $0x130] sm:$0xff]
    %v148 = vld [vmem:[#allocation2 + $0x138] sm:$0xff]
    %v149 = vld [vmem:[#allocation2 + $0x140] sm:$0xff]
    %v150 = vld [vmem:[#allocation2 + $0x148] sm:$0xff]
    %v151 = vld [vmem:[#allocation2 + $0x150] sm:$0xff]
    %v152 = vld [vmem:[#allocation2 + $0x158] sm:$0xff]
    %v153 = vld [vmem:[#allocation2 + $0x160] sm:$0xff]
    %v154 = vld [vmem:[#allocation2 + $0x168] sm:$0xff]
    %v155 = vld [vmem:[#allocation2 + $0x170] sm:$0xff]
    %v156 = vld [vmem:[#allocation2 + $0x178] sm:$0xff]
    %v157 = vld [vmem:[#allocation2 + $0x180] sm:$0xff]
    %v158 = vld [vmem:[#allocation2 + $0x188] sm:$0xff]
    %v159 = vld [vmem:[#allocation2 + $0x190] sm:$0xff]
    %v160 = vld [vmem:[#allocation2 + $0x198] sm:$0xff]
    %v161 = vld [vmem:[#allocation2 + $0x1a0] sm:$0xff]
    %v162 = vld [vmem:[#allocation2 + $0x1a8] sm:$0xff]
    %v163 = vld [vmem:[#allocation2 + $0x1b0] sm:$0xff]
    %v164 = vld [vmem:[#allocation2 + $0x1b8] sm:$0xff]
    %v165 = vld [vmem:[#allocation2 + $0x1c0] sm:$0xff]
    %v166 = vld [vmem:[#allocation2 + $0x1c8] sm:$0xff]
    %v167 = vld [vmem:[#allocation2 + $0x1d0] sm:$0xff]
    %v168 = vld [vmem:[#allocation2 + $0x1d8] sm:$0xff]
    %v169 = vld [vmem:[#allocation2 + $0x1e0] sm:$0xff]
    %v170 = vld [vmem:[#allocation2 + $0x1e8] sm:$0xff]
    %v171 = vld [vmem:[#allocation2 + $0x1f0] sm:$0xff]
    %v172 = vld [vmem:[#allocation2 + $0x1f8] sm:$0xff]
    %v173 = vld [vmem:[#allocation2 + $0x200] sm:$0xff]
    %v174 = vld [vmem:[#allocation2 + $0x208] sm:$0xff]
    %v175 = vld [vmem:[#allocation2 + $0x210] sm:$0xff]
    %v176 = vld [vmem:[#allocation2 + $0x218] sm:$0xff]
    %v177 = vld [vmem:[#allocation2 + $0x220] sm:$0xff]
    %v178 = vld [vmem:[#allocation2 + $0x228] sm:$0xff]
    %v179 = vld [vmem:[#allocation2 + $0x230] sm:$0xff]
    %v180 = vld [vmem:[#allocation2 + $0x238] sm:$0xff]
    %v181 = vld [vmem:[#allocation2 + $0x240] sm:$0xff]
    %v182 = vld [vmem:[#allocation2 + $0x248] sm:$0xff]
    %v183 = vld [vmem:[#allocation2 + $0x250] sm:$0xff]
    %v184 = vld [vmem:[#allocation2 + $0x258] sm:$0xff]
    %v185 = vld [vmem:[#allocation2 + $0x260] sm:$0xff]
    %v186 = vld [vmem:[#allocation2 + $0x268] sm:$0xff]
    %v187 = vld [vmem:[#allocation2 + $0x270] sm:$0xff]
    %v188 = vld [vmem:[#allocation2 + $0x278] sm:$0xff]
    %v189 = vld [vmem:[#allocation2 + $0x280] sm:$0xff]
    %v190 = vld [vmem:[#allocation2 + $0x288] sm:$0xff]
    %v191 = vld [vmem:[#allocation2 + $0x290] sm:$0xff]
    %v192 = vld [vmem:[#allocation2 + $0x298] sm:$0xff]
    %v193 = vld [vmem:[#allocation2 + $0x2a0] sm:$0xff]
    %v194 = vld [vmem:[#allocation2 + $0x2a8] sm:$0xff]
    %v195 = vld [vmem:[#allocation2 + $0x2b0] sm:$0xff]
    %v196 = vld [vmem:[#allocation2 + $0x2b8] sm:$0xff]
    %v197 = vld [vmem:[#allocation2 + $0x2c0] sm:$0xff]
    %v198 = vld [vmem:[#allocation2 + $0x2c8] sm:$0xff]
    %v199 = vld [vmem:[#allocation2 + $0x2d0] sm:$0xff]
    %v200 = vld [vmem:[#allocation2 + $0x2d8] sm:$0xff]
    %v201 = vld [vmem:[#allocation2 + $0x2e0] sm:$0xff]
    %v202 = vld [vmem:[#allocation2 + $0x2e8] sm:$0xff]
    %v203 = vld [vmem:[#allocation2 + $0x2f0] sm:$0xff]
    %v204 = vld [vmem:[#allocation2 + $0x2f8] sm:$0xff]
    %v205 = vld [vmem:[#allocation2 + $0x300] sm:$0xff]
    %v206 = vld [vmem:[#allocation2 + $0x308] sm:$0xff]
    %v207 = vld [vmem:[#allocation2 + $0x310] sm:$0xff]
    %v208 = vld [vmem:[#allocation2 + $0x318] sm:$0xff]
    %v209 = vld [vmem:[#allocation2 + $0x320] sm:$0xff]
    %v210 = vld [vmem:[#allocation2 + $0x328] sm:$0xff]
    %v211 = vld [vmem:[#allocation2 + $0x330] sm:$0xff]
    %v212 = vld [vmem:[#allocation2 + $0x338] sm:$0xff]
    %v213 = vld [vmem:[#allocation2 + $0x340] sm:$0xff]
    %v214 = vld [vmem:[#allocation2 + $0x348] sm:$0xff]
    %v215 = vld [vmem:[#allocation2 + $0x350] sm:$0xff]
    %v216 = vld [vmem:[#allocation2 + $0x358] sm:$0xff]
    %v217 = vld [vmem:[#allocation2 + $0x360] sm:$0xff]
    %v218 = vld [vmem:[#allocation2 + $0x368] sm:$0xff]
    %v219 = vld [vmem:[#allocation2 + $0x370] sm:$0xff]
    %v220 = vld [vmem:[#allocation2 + $0x378] sm:$0xff]
    %v221 = vld [vmem:[#allocation2 + $0x380] sm:$0xff]
    %v222 = vld [vmem:[#allocation2 + $0x388] sm:$0xff]
    %v223 = vld [vmem:[#allocation2 + $0x390] sm:$0xff]
    %v224 = vld [vmem:[#allocation2 + $0x398] sm:$0xff]
    %v225 = vld [vmem:[#allocation2 + $0x3a0] sm:$0xff]
    %v226 = vld [vmem:[#allocation2 + $0x3a8] sm:$0xff]
    %v227 = vld [vmem:[#allocation2 + $0x3b0] sm:$0xff]
    %v228 = vld [vmem:[#allocation2 + $0x3b8] sm:$0xff]
    %v229 = vld [vmem:[#allocation2 + $0x3c0] sm:$0xff]
    %v230 = vld [vmem:[#allocation2 + $0x3c8] sm:$0xff]
    %v231 = vld [vmem:[#allocation2 + $0x3d0] sm:$0xff]
    %v232 = vld [vmem:[#allocation2 + $0x3d8] sm:$0xff]
    %v233 = vld [vmem:[#allocation2 + $0x3e0] sm:$0xff]
    %v234 = vld [vmem:[#allocation2 + $0x3e8] sm:$0xff]
    %v235 = vld [vmem:[#allocation2 + $0x3f0] sm:$0xff]
    %v236 = vld [vmem:[#allocation2 + $0x3f8] sm:$0xff]
    %v237 = vld [vmem:[#allocation2 + $0x400] sm:$0xff]
    %v238 = vld [vmem:[#allocation2 + $0x408] sm:$0xff]
    %v239 = vld [vmem:[#allocation2 + $0x410] sm:$0xff]
    %v240 = vld [vmem:[#allocation2 + $0x418] sm:$0xff]
    %v241 = vld [vmem:[#allocation2 + $0x420] sm:$0xff]
    %v242 = vld [vmem:[#allocation2 + $0x428] sm:$0xff]
    %v243 = vld [vmem:[#allocation2 + $0x430] sm:$0xff]
    %v244 = vld [vmem:[#allocation2 + $0x438] sm:$0xff]
    %v245 = vld [vmem:[#allocation2 + $0x440] sm:$0xff]
    %v246 = vld [vmem:[#allocation2 + $0x448] sm:$0xff]
    %v247 = vld [vmem:[#allocation2 + $0x450] sm:$0xff]
    %v248 = vld [vmem:[#allocation2 + $0x458] sm:$0xff]
    %v249 = vld [vmem:[#allocation2 + $0x460] sm:$0xff]
    %v250 = vld [vmem:[#allocation2 + $0x468] sm:$0xff]
    %v251 = vld [vmem:[#allocation2 + $0x470] sm:$0xff]
    %v252 = vld [vmem:[#allocation2 + $0x478] sm:$0xff]
    %v253 = vld [vmem:[#allocation2 + $0x480] sm:$0xff]
    %v254 = vld [vmem:[#allocation2 + $0x488] sm:$0xff]
    %v255 = vld [vmem:[#allocation2 + $0x490] sm:$0xff]
    %v256 = vld [vmem:[#allocation2 + $0x498] sm:$0xff]
    %v257 = vld [vmem:[#allocation2 + $0x4a0] sm:$0xff]
    %v258 = vld [vmem:[#allocation2 + $0x4a8] sm:$0xff]
    %v259 = vld [vmem:[#allocation2 + $0x4b0] sm:$0xff]
    %v260 = vld [vmem:[#allocation2 + $0x4b8] sm:$0xff]
    %v261 = vld [vmem:[#allocation2 + $0x4c0] sm:$0xff]
    %v262 = vld [vmem:[#allocation2 + $0x4c8] sm:$0xff]
    %v263 = vld [vmem:[#allocation2 + $0x4d0] sm:$0xff]
    %v264 = vld [vmem:[#allocation2 + $0x4d8] sm:$0xff]
    %v265 = vld [vmem:[#allocation2 + $0x4e0] sm:$0xff]
    %v266 = vld [vmem:[#allocation2 + $0x4e8] sm:$0xff]
    %v267 = vld [vmem:[#allocation2 + $0x4f0] sm:$0xff]
    %v268 = vld [vmem:[#allocation2 + $0x4f8] sm:$0xff]
    %v269 = vld [vmem:[#allocation2 + $0x500] sm:$0xff]
    %v270 = vld [vmem:[#allocation2 + $0x508] sm:$0xff]
    %v271 = vld [vmem:[#allocation2 + $0x510] sm:$0xff]
    %v272 = vld [vmem:[#allocation2 + $0x518] sm:$0xff]
    %v273 = vld [vmem:[#allocation2 + $0x520] sm:$0xff]
    %v274 = vld [vmem:[#allocation2 + $0x528] sm:$0xff]
    %v275 = vld [vmem:[#allocation2 + $0x530] sm:$0xff]
    %v276 = vld [vmem:[#allocation2 + $0x538] sm:$0xff]
    %v277 = vld [vmem:[#allocation2 + $0x540] sm:$0xff]
    %v278 = vld [vmem:[#allocation2 + $0x548] sm:$0xff]
    %v279 = vld [vmem:[#allocation2 + $0x550] sm:$0xff]
    %v280 = vld [vmem:[#allocation2 + $0x558] sm:$0xff]
    %v281 = vld [vmem:[#allocation2 + $0x560] sm:$0xff]
    %v282 = vld [vmem:[#allocation2 + $0x568] sm:$0xff]
    %v283 = vld [vmem:[#allocation2 + $0x570] sm:$0xff]
    %v284 = vld [vmem:[#allocation2 + $0x578] sm:$0xff]
    %v285 = vld [vmem:[#allocation2 + $0x580] sm:$0xff]
    %v286 = vld [vmem:[#allocation2 + $0x588] sm:$0xff]
    %v287 = vld [vmem:[#allocation2 + $0x590] sm:$0xff]
    %v288 = vld [vmem:[#allocation2 + $0x598] sm:$0xff]
    %v289 = vld [vmem:[#allocation2 + $0x5a0] sm:$0xff]
    %v290 = vld [vmem:[#allocation2 + $0x5a8] sm:$0xff]
    %v291 = vld [vmem:[#allocation2 + $0x5b0] sm:$0xff]
    %v292 = vld [vmem:[#allocation2 + $0x5b8] sm:$0xff]
    %v293 = vld [vmem:[#allocation2 + $0x5c0] sm:$0xff]
    %v294 = vld [vmem:[#allocation2 + $0x5c8] sm:$0xff]
    %v295 = vld [vmem:[#allocation2 + $0x5d0] sm:$0xff]
    %v296 = vld [vmem:[#allocation2 + $0x5d8] sm:$0xff]
    %v297 = vld [vmem:[#allocation2 + $0x5e0] sm:$0xff]
    %v298 = vld [vmem:[#allocation2 + $0x5e8] sm:$0xff]
    %v299 = vld [vmem:[#allocation2 + $0x5f0] sm:$0xff]
    %v300 = vld [vmem:[#allocation2 + $0x5f8] sm:$0xff]
    %v301 = vld [vmem:[#allocation2 + $0x600] sm:$0xff]
    %v302 = vld [vmem:[#allocation2 + $0x608] sm:$0xff]
    %v303 = vld [vmem:[#allocation2 + $0x610] sm:$0xff]
    %v304 = vld [vmem:[#allocation2 + $0x618] sm:$0xff]
    %v305 = vld [vmem:[#allocation2 + $0x620] sm:$0xff]
    %v306 = vld [vmem:[#allocation2 + $0x628] sm:$0xff]
    %v307 = vld [vmem:[#allocation2 + $0x630] sm:$0xff]
    %v308 = vld [vmem:[#allocation2 + $0x638] sm:$0xff]
    %v309 = vld [vmem:[#allocation2 + $0x640] sm:$0xff]
    %v310 = vld [vmem:[#allocation2 + $0x648] sm:$0xff]
    %v311 = vld [vmem:[#allocation2 + $0x650] sm:$0xff]
    %v312 = vld [vmem:[#allocation2 + $0x658] sm:$0xff]
    %v313 = vld [vmem:[#allocation2 + $0x660] sm:$0xff]
    %v314 = vld [vmem:[#allocation2 + $0x668] sm:$0xff]
    %v315 = vld [vmem:[#allocation2 + $0x670] sm:$0xff]
    %v316 = vld [vmem:[#allocation2 + $0x678] sm:$0xff]
    %v317 = vld [vmem:[#allocation2 + $0x680] sm:$0xff]
    %v318 = vld [vmem:[#allocation2 + $0x688] sm:$0xff]
    %v319 = vld [vmem:[#allocation2 + $0x690] sm:$0xff]
    %v320 = vld [vmem:[#allocation2 + $0x698] sm:$0xff]
    %v321 = vld [vmem:[#allocation2 + $0x6a0] sm:$0xff]
    %v322 = vld [vmem:[#allocation2 + $0x6a8] sm:$0xff]
    %v323 = vld [vmem:[#allocation2 + $0x6b0] sm:$0xff]
    %v324 = vld [vmem:[#allocation2 + $0x6b8] sm:$0xff]
    %v325 = vld [vmem:[#allocation2 + $0x6c0] sm:$0xff]
    %v326 = vld [vmem:[#allocation2 + $0x6c8] sm:$0xff]
    %v327 = vld [vmem:[#allocation2 + $0x6d0] sm:$0xff]
    %v328 = vld [vmem:[#allocation2 + $0x6d8] sm:$0xff]
    %v329 = vld [vmem:[#allocation2 + $0x6e0] sm:$0xff]
    %v330 = vld [vmem:[#allocation2 + $0x6e8] sm:$0xff]
    %v331 = vld [vmem:[#allocation2 + $0x6f0] sm:$0xff]
    %v332 = vld [vmem:[#allocation2 + $0x6f8] sm:$0xff]
    %v333 = vld [vmem:[#allocation4] sm:$0xff]
    %v334 = vld [vmem:[#allocation4 + $0x8] sm:$0x3f]
    %v337 = vlaneseq
    %v338 = vshrl.u32 %v337, 7
    %v339 = vsub.s32 0, %v338
    %v340 = vrot.slane %v333, %v339
    %v341 = vlaneseq
    %v342 = vshrl.u32 %v341, 7
    %v343 = vsub.s32 1, %v342
    %v344 = vrot.slane %v333, %v343
    %v345 = vlaneseq
    %v346 = vshrl.u32 %v345, 7
    %v347 = vsub.s32 2, %v346
    %v348 = vrot.slane %v333, %v347
    %v349 = vlaneseq
    %v350 = vshrl.u32 %v349, 7
    %v351 = vsub.s32 3, %v350
    %v352 = vrot.slane %v333, %v351
    %v353 = vlaneseq
    %v354 = vshrl.u32 %v353, 7
    %v355 = vsub.s32 4, %v354
    %v356 = vrot.slane %v333, %v355
    %v357 = vlaneseq
    %v358 = vshrl.u32 %v357, 7
    %v359 = vsub.s32 5, %v358
    %v360 = vrot.slane %v333, %v359
    %v361 = vlaneseq
    %v362 = vshrl.u32 %v361, 7
    %v363 = vsub.s32 6, %v362
    %v364 = vrot.slane %v333, %v363
    %v365 = vlaneseq
    %v366 = vshrl.u32 %v365, 7
    %v367 = vsub.s32 7, %v366
    %v368 = vrot.slane %v333, %v367
    %v369 = vlaneseq
    %v370 = vshrl.u32 %v369, 7
    %v371 = vsub.s32 0, %v370
    %v372 = vrot.slane %v334, %v371
    %v373 = vlaneseq
    %v374 = vshrl.u32 %v373, 7
    %v375 = vsub.s32 1, %v374
    %v376 = vrot.slane %v334, %v375
    %v377 = vlaneseq
    %v378 = vshrl.u32 %v377, 7
    %v379 = vsub.s32 2, %v378
    %v380 = vrot.slane %v334, %v379
    %v381 = vlaneseq
    %v382 = vshrl.u32 %v381, 7
    %v383 = vsub.s32 3, %v382
    %v384 = vrot.slane %v334, %v383
    %v385 = vlaneseq
    %v386 = vshrl.u32 %v385, 7
    %v387 = vsub.s32 4, %v386
    %v388 = vrot.slane %v334, %v387
    %v389 = vlaneseq
    %v390 = vshrl.u32 %v389, 7
    %v391 = vsub.s32 5, %v390
    %v392 = vrot.slane %v334, %v391
    %v631 = vunpack.c.l.b16 %v109
    %v632 = vunpack.c.h.b16 %v109
    %v633 = vunpack.c.l.b16 %v110
    %v634 = vunpack.c.h.b16 %v110
    %v635 = vunpack.c.l.b16 %v111
    %v636 = vunpack.c.h.b16 %v111
    %v637 = vunpack.c.l.b16 %v112
    %v638 = vunpack.c.h.b16 %v112
    %v639 = vunpack.c.l.b16 %v113
    %v640 = vunpack.c.h.b16 %v113
    %v641 = vunpack.c.l.b16 %v114
    %v642 = vunpack.c.h.b16 %v114
    %v643 = vunpack.c.l.b16 %v115
    %v644 = vunpack.c.h.b16 %v115
    %v645 = vunpack.c.l.b16 %v116
    %v646 = vunpack.c.h.b16 %v116
    %v647 = vunpack.c.l.b16 %v117
    %v648 = vunpack.c.h.b16 %v117
    %v649 = vunpack.c.l.b16 %v118
    %v650 = vunpack.c.h.b16 %v118
    %v651 = vunpack.c.l.b16 %v119
    %v652 = vunpack.c.h.b16 %v119
    %v653 = vunpack.c.l.b16 %v120
    %v654 = vunpack.c.h.b16 %v120
    %v655 = vunpack.c.l.b16 %v121
    %v656 = vunpack.c.h.b16 %v121
    %v657 = vunpack.c.l.b16 %v122
    %v658 = vunpack.c.h.b16 %v122
    %v659 = vunpack.c.l.b16 %v123
    %v660 = vunpack.c.h.b16 %v123
    %v661 = vunpack.c.l.b16 %v124
    %v662 = vunpack.c.h.b16 %v124
    %v663 = vunpack.c.l.b16 %v125
    %v664 = vunpack.c.h.b16 %v125
    %v665 = vunpack.c.l.b16 %v126
    %v666 = vunpack.c.h.b16 %v126
    %v667 = vunpack.c.l.b16 %v127
    %v668 = vunpack.c.h.b16 %v127
    %v669 = vunpack.c.l.b16 %v128
    %v670 = vunpack.c.h.b16 %v128
    %v671 = vunpack.c.l.b16 %v129
    %v672 = vunpack.c.h.b16 %v129
    %v673 = vunpack.c.l.b16 %v130
    %v674 = vunpack.c.h.b16 %v130
    %v675 = vunpack.c.l.b16 %v131
    %v676 = vunpack.c.h.b16 %v131
    %v677 = vunpack.c.l.b16 %v132
    %v678 = vunpack.c.h.b16 %v132
    %v679 = vunpack.c.l.b16 %v133
    %v680 = vunpack.c.h.b16 %v133
    %v681 = vunpack.c.l.b16 %v134
    %v682 = vunpack.c.h.b16 %v134
    %v683 = vunpack.c.l.b16 %v135
    %v684 = vunpack.c.h.b16 %v135
    %v685 = vunpack.c.l.b16 %v136
    %v686 = vunpack.c.h.b16 %v136
    %v687 = vunpack.c.l.b16 %v137
    %v688 = vunpack.c.h.b16 %v137
    %v689 = vunpack.c.l.b16 %v138
    %v690 = vunpack.c.h.b16 %v138
    %v691 = vunpack.c.l.b16 %v139
    %v692 = vunpack.c.h.b16 %v139
    %v693 = vunpack.c.l.b16 %v140
    %v694 = vunpack.c.h.b16 %v140
    %v695 = vunpack.c.l.b16 %v141
    %v696 = vunpack.c.h.b16 %v141
    %v697 = vunpack.c.l.b16 %v142
    %v698 = vunpack.c.h.b16 %v142
    %v699 = vunpack.c.l.b16 %v143
    %v700 = vunpack.c.h.b16 %v143
    %v701 = vunpack.c.l.b16 %v144
    %v702 = vunpack.c.h.b16 %v144
    %v703 = vunpack.c.l.b16 %v145
    %v704 = vunpack.c.h.b16 %v145
    %v705 = vunpack.c.l.b16 %v146
    %v706 = vunpack.c.h.b16 %v146
    %v707 = vunpack.c.l.b16 %v147
    %v708 = vunpack.c.h.b16 %v147
    %v709 = vunpack.c.l.b16 %v148
    %v710 = vunpack.c.h.b16 %v148
    %v711 = vunpack.c.l.b16 %v149
    %v712 = vunpack.c.h.b16 %v149
    %v713 = vunpack.c.l.b16 %v150
    %v714 = vunpack.c.h.b16 %v150
    %v715 = vunpack.c.l.b16 %v151
    %v716 = vunpack.c.h.b16 %v151
    %v717 = vunpack.c.l.b16 %v152
    %v718 = vunpack.c.h.b16 %v152
    %v719 = vunpack.c.l.b16 %v153
    %v720 = vunpack.c.h.b16 %v153
    %v721 = vunpack.c.l.b16 %v154
    %v722 = vunpack.c.h.b16 %v154
    %v723 = vunpack.c.l.b16 %v155
    %v724 = vunpack.c.h.b16 %v155
    %v725 = vunpack.c.l.b16 %v156
    %v726 = vunpack.c.h.b16 %v156
    %v727 = vunpack.c.l.b16 %v157
    %v728 = vunpack.c.h.b16 %v157
    %v729 = vunpack.c.l.b16 %v158
    %v730 = vunpack.c.h.b16 %v158
    %v731 = vunpack.c.l.b16 %v159
    %v732 = vunpack.c.h.b16 %v159
    %v733 = vunpack.c.l.b16 %v160
    %v734 = vunpack.c.h.b16 %v160
    %v735 = vunpack.c.l.b16 %v161
    %v736 = vunpack.c.h.b16 %v161
    %v737 = vunpack.c.l.b16 %v162
    %v738 = vunpack.c.h.b16 %v162
    %v739 = vunpack.c.l.b16 %v163
    %v740 = vunpack.c.h.b16 %v163
    %v741 = vunpack.c.l.b16 %v164
    %v742 = vunpack.c.h.b16 %v164
    %v743 = vunpack.c.l.b16 %v165
    %v744 = vunpack.c.h.b16 %v165
    %v745 = vunpack.c.l.b16 %v166
    %v746 = vunpack.c.h.b16 %v166
    %v747 = vunpack.c.l.b16 %v167
    %v748 = vunpack.c.h.b16 %v167
    %v749 = vunpack.c.l.b16 %v168
    %v750 = vunpack.c.h.b16 %v168
    %v751 = vunpack.c.l.b16 %v169
    %v752 = vunpack.c.h.b16 %v169
    %v753 = vunpack.c.l.b16 %v170
    %v754 = vunpack.c.h.b16 %v170
    %v755 = vunpack.c.l.b16 %v171
    %v756 = vunpack.c.h.b16 %v171
    %v757 = vunpack.c.l.b16 %v172
    %v758 = vunpack.c.h.b16 %v172
    %v759 = vunpack.c.l.b16 %v173
    %v760 = vunpack.c.h.b16 %v173
    %v761 = vunpack.c.l.b16 %v174
    %v762 = vunpack.c.h.b16 %v174
    %v763 = vunpack.c.l.b16 %v175
    %v764 = vunpack.c.h.b16 %v175
    %v765 = vunpack.c.l.b16 %v176
    %v766 = vunpack.c.h.b16 %v176
    %v767 = vunpack.c.l.b16 %v177
    %v768 = vunpack.c.h.b16 %v177
    %v769 = vunpack.c.l.b16 %v178
    %v770 = vunpack.c.h.b16 %v178
    %v771 = vunpack.c.l.b16 %v179
    %v772 = vunpack.c.h.b16 %v179
    %v773 = vunpack.c.l.b16 %v180
    %v774 = vunpack.c.h.b16 %v180
    %v775 = vunpack.c.l.b16 %v181
    %v776 = vunpack.c.h.b16 %v181
    %v777 = vunpack.c.l.b16 %v182
    %v778 = vunpack.c.h.b16 %v182
    %v779 = vunpack.c.l.b16 %v183
    %v780 = vunpack.c.h.b16 %v183
    %v781 = vunpack.c.l.b16 %v184
    %v782 = vunpack.c.h.b16 %v184
    %v783 = vunpack.c.l.b16 %v185
    %v784 = vunpack.c.h.b16 %v185
    %v785 = vunpack.c.l.b16 %v186
    %v786 = vunpack.c.h.b16 %v186
    %v787 = vunpack.c.l.b16 %v187
    %v788 = vunpack.c.h.b16 %v187
    %v789 = vunpack.c.l.b16 %v188
    %v790 = vunpack.c.h.b16 %v188
    %v791 = vunpack.c.l.b16 %v189
    %v792 = vunpack.c.h.b16 %v189
    %v793 = vunpack.c.l.b16 %v190
    %v794 = vunpack.c.h.b16 %v190
    %v795 = vunpack.c.l.b16 %v191
    %v796 = vunpack.c.h.b16 %v191
    %v797 = vunpack.c.l.b16 %v192
    %v798 = vunpack.c.h.b16 %v192
    %v799 = vunpack.c.l.b16 %v193
    %v800 = vunpack.c.h.b16 %v193
    %v801 = vunpack.c.l.b16 %v194
    %v802 = vunpack.c.h.b16 %v194
    %v803 = vunpack.c.l.b16 %v195
    %v804 = vunpack.c.h.b16 %v195
    %v805 = vunpack.c.l.b16 %v196
    %v806 = vunpack.c.h.b16 %v196
    %v807 = vunpack.c.l.b16 %v197
    %v808 = vunpack.c.h.b16 %v197
    %v809 = vunpack.c.l.b16 %v198
    %v810 = vunpack.c.h.b16 %v198
    %v811 = vunpack.c.l.b16 %v199
    %v812 = vunpack.c.h.b16 %v199
    %v813 = vunpack.c.l.b16 %v200
    %v814 = vunpack.c.h.b16 %v200
    %v815 = vunpack.c.l.b16 %v201
    %v816 = vunpack.c.h.b16 %v201
    %v817 = vunpack.c.l.b16 %v202
    %v818 = vunpack.c.h.b16 %v202
    %v819 = vunpack.c.l.b16 %v203
    %v820 = vunpack.c.h.b16 %v203
    %v821 = vunpack.c.l.b16 %v204
    %v822 = vunpack.c.h.b16 %v204
    %v823 = vunpack.c.l.b16 %v205
    %v824 = vunpack.c.h.b16 %v205
    %v825 = vunpack.c.l.b16 %v206
    %v826 = vunpack.c.h.b16 %v206
    %v827 = vunpack.c.l.b16 %v207
    %v828 = vunpack.c.h.b16 %v207
    %v829 = vunpack.c.l.b16 %v208
    %v830 = vunpack.c.h.b16 %v208
    %v831 = vunpack.c.l.b16 %v209
    %v832 = vunpack.c.h.b16 %v209
    %v833 = vunpack.c.l.b16 %v210
    %v834 = vunpack.c.h.b16 %v210
    %v835 = vunpack.c.l.b16 %v211
    %v836 = vunpack.c.h.b16 %v211
    %v837 = vunpack.c.l.b16 %v212
    %v838 = vunpack.c.h.b16 %v212
    %v839 = vunpack.c.l.b16 %v213
    %v840 = vunpack.c.h.b16 %v213
    %v841 = vunpack.c.l.b16 %v214
    %v842 = vunpack.c.h.b16 %v214
    %v843 = vunpack.c.l.b16 %v215
    %v844 = vunpack.c.h.b16 %v215
    %v845 = vunpack.c.l.b16 %v216
    %v846 = vunpack.c.h.b16 %v216
    %v847 = vunpack.c.l.b16 %v217
    %v848 = vunpack.c.h.b16 %v217
    %v849 = vunpack.c.l.b16 %v218
    %v850 = vunpack.c.h.b16 %v218
    %v851 = vunpack.c.l.b16 %v219
    %v852 = vunpack.c.h.b16 %v219
    %v853 = vunpack.c.l.b16 %v220
    %v854 = vunpack.c.h.b16 %v220
    %v855 = vunpack.c.l.b16 %v221
    %v856 = vunpack.c.h.b16 %v221
    %v857 = vunpack.c.l.b16 %v222
    %v858 = vunpack.c.h.b16 %v222
    %v859 = vunpack.c.l.b16 %v223
    %v860 = vunpack.c.h.b16 %v223
    %v861 = vunpack.c.l.b16 %v224
    %v862 = vunpack.c.h.b16 %v224
    %v863 = vunpack.c.l.b16 %v225
    %v864 = vunpack.c.h.b16 %v225
    %v865 = vunpack.c.l.b16 %v226
    %v866 = vunpack.c.h.b16 %v226
    %v867 = vunpack.c.l.b16 %v227
    %v868 = vunpack.c.h.b16 %v227
    %v869 = vunpack.c.l.b16 %v228
    %v870 = vunpack.c.h.b16 %v228
    %v871 = vunpack.c.l.b16 %v229
    %v872 = vunpack.c.h.b16 %v229
    %v873 = vunpack.c.l.b16 %v230
    %v874 = vunpack.c.h.b16 %v230
    %v875 = vunpack.c.l.b16 %v231
    %v876 = vunpack.c.h.b16 %v231
    %v877 = vunpack.c.l.b16 %v232
    %v878 = vunpack.c.h.b16 %v232
    %v879 = vunpack.c.l.b16 %v233
    %v880 = vunpack.c.h.b16 %v233
    %v881 = vunpack.c.l.b16 %v234
    %v882 = vunpack.c.h.b16 %v234
    %v883 = vunpack.c.l.b16 %v235
    %v884 = vunpack.c.h.b16 %v235
    %v885 = vunpack.c.l.b16 %v236
    %v886 = vunpack.c.h.b16 %v236
    %v887 = vunpack.c.l.b16 %v237
    %v888 = vunpack.c.h.b16 %v237
    %v889 = vunpack.c.l.b16 %v238
    %v890 = vunpack.c.h.b16 %v238
    %v891 = vunpack.c.l.b16 %v239
    %v892 = vunpack.c.h.b16 %v239
    %v893 = vunpack.c.l.b16 %v240
    %v894 = vunpack.c.h.b16 %v240
    %v895 = vunpack.c.l.b16 %v241
    %v896 = vunpack.c.h.b16 %v241
    %v897 = vunpack.c.l.b16 %v242
    %v898 = vunpack.c.h.b16 %v242
    %v899 = vunpack.c.l.b16 %v243
    %v900 = vunpack.c.h.b16 %v243
    %v901 = vunpack.c.l.b16 %v244
    %v902 = vunpack.c.h.b16 %v244
    %v903 = vunpack.c.l.b16 %v245
    %v904 = vunpack.c.h.b16 %v245
    %v905 = vunpack.c.l.b16 %v246
    %v906 = vunpack.c.h.b16 %v246
    %v907 = vunpack.c.l.b16 %v247
    %v908 = vunpack.c.h.b16 %v247
    %v909 = vunpack.c.l.b16 %v248
    %v910 = vunpack.c.h.b16 %v248
    %v911 = vunpack.c.l.b16 %v249
    %v912 = vunpack.c.h.b16 %v249
    %v913 = vunpack.c.l.b16 %v250
    %v914 = vunpack.c.h.b16 %v250
    %v915 = vunpack.c.l.b16 %v251
    %v916 = vunpack.c.h.b16 %v251
    %v917 = vunpack.c.l.b16 %v252
    %v918 = vunpack.c.h.b16 %v252
    %v919 = vunpack.c.l.b16 %v253
    %v920 = vunpack.c.h.b16 %v253
    %v921 = vunpack.c.l.b16 %v254
    %v922 = vunpack.c.h.b16 %v254
    %v923 = vunpack.c.l.b16 %v255
    %v924 = vunpack.c.h.b16 %v255
    %v925 = vunpack.c.l.b16 %v256
    %v926 = vunpack.c.h.b16 %v256
    %v927 = vunpack.c.l.b16 %v257
    %v928 = vunpack.c.h.b16 %v257
    %v929 = vunpack.c.l.b16 %v258
    %v930 = vunpack.c.h.b16 %v258
    %v931 = vunpack.c.l.b16 %v259
    %v932 = vunpack.c.h.b16 %v259
    %v933 = vunpack.c.l.b16 %v260
    %v934 = vunpack.c.h.b16 %v260
    %v935 = vunpack.c.l.b16 %v261
    %v936 = vunpack.c.h.b16 %v261
    %v937 = vunpack.c.l.b16 %v262
    %v938 = vunpack.c.h.b16 %v262
    %v939 = vunpack.c.l.b16 %v263
    %v940 = vunpack.c.h.b16 %v263
    %v941 = vunpack.c.l.b16 %v264
    %v942 = vunpack.c.h.b16 %v264
    %v943 = vunpack.c.l.b16 %v265
    %v944 = vunpack.c.h.b16 %v265
    %v945 = vunpack.c.l.b16 %v266
    %v946 = vunpack.c.h.b16 %v266
    %v947 = vunpack.c.l.b16 %v267
    %v948 = vunpack.c.h.b16 %v267
    %v949 = vunpack.c.l.b16 %v268
    %v950 = vunpack.c.h.b16 %v268
    %v951 = vunpack.c.l.b16 %v269
    %v952 = vunpack.c.h.b16 %v269
    %v953 = vunpack.c.l.b16 %v270
    %v954 = vunpack.c.h.b16 %v270
    %v955 = vunpack.c.l.b16 %v271
    %v956 = vunpack.c.h.b16 %v271
    %v957 = vunpack.c.l.b16 %v272
    %v958 = vunpack.c.h.b16 %v272
    %v959 = vunpack.c.l.b16 %v273
    %v960 = vunpack.c.h.b16 %v273
    %v961 = vunpack.c.l.b16 %v274
    %v962 = vunpack.c.h.b16 %v274
    %v963 = vunpack.c.l.b16 %v275
    %v964 = vunpack.c.h.b16 %v275
    %v965 = vunpack.c.l.b16 %v276
    %v966 = vunpack.c.h.b16 %v276
    %v967 = vunpack.c.l.b16 %v277
    %v968 = vunpack.c.h.b16 %v277
    %v969 = vunpack.c.l.b16 %v278
    %v970 = vunpack.c.h.b16 %v278
    %v971 = vunpack.c.l.b16 %v279
    %v972 = vunpack.c.h.b16 %v279
    %v973 = vunpack.c.l.b16 %v280
    %v974 = vunpack.c.h.b16 %v280
    %v975 = vunpack.c.l.b16 %v281
    %v976 = vunpack.c.h.b16 %v281
    %v977 = vunpack.c.l.b16 %v282
    %v978 = vunpack.c.h.b16 %v282
    %v979 = vunpack.c.l.b16 %v283
    %v980 = vunpack.c.h.b16 %v283
    %v981 = vunpack.c.l.b16 %v284
    %v982 = vunpack.c.h.b16 %v284
    %v983 = vunpack.c.l.b16 %v285
    %v984 = vunpack.c.h.b16 %v285
    %v985 = vunpack.c.l.b16 %v286
    %v986 = vunpack.c.h.b16 %v286
    %v987 = vunpack.c.l.b16 %v287
    %v988 = vunpack.c.h.b16 %v287
    %v989 = vunpack.c.l.b16 %v288
    %v990 = vunpack.c.h.b16 %v288
    %v991 = vunpack.c.l.b16 %v289
    %v992 = vunpack.c.h.b16 %v289
    %v993 = vunpack.c.l.b16 %v290
    %v994 = vunpack.c.h.b16 %v290
    %v995 = vunpack.c.l.b16 %v291
    %v996 = vunpack.c.h.b16 %v291
    %v997 = vunpack.c.l.b16 %v292
    %v998 = vunpack.c.h.b16 %v292
    %v999 = vunpack.c.l.b16 %v293
    %v1000 = vunpack.c.h.b16 %v293
    %v1001 = vunpack.c.l.b16 %v294
    %v1002 = vunpack.c.h.b16 %v294
    %v1003 = vunpack.c.l.b16 %v295
    %v1004 = vunpack.c.h.b16 %v295
    %v1005 = vunpack.c.l.b16 %v296
    %v1006 = vunpack.c.h.b16 %v296
    %v1007 = vunpack.c.l.b16 %v297
    %v1008 = vunpack.c.h.b16 %v297
    %v1009 = vunpack.c.l.b16 %v298
    %v1010 = vunpack.c.h.b16 %v298
    %v1011 = vunpack.c.l.b16 %v299
    %v1012 = vunpack.c.h.b16 %v299
    %v1013 = vunpack.c.l.b16 %v300
    %v1014 = vunpack.c.h.b16 %v300
    %v1015 = vunpack.c.l.b16 %v301
    %v1016 = vunpack.c.h.b16 %v301
    %v1017 = vunpack.c.l.b16 %v302
    %v1018 = vunpack.c.h.b16 %v302
    %v1019 = vunpack.c.l.b16 %v303
    %v1020 = vunpack.c.h.b16 %v303
    %v1021 = vunpack.c.l.b16 %v304
    %v1022 = vunpack.c.h.b16 %v304
    %v1023 = vunpack.c.l.b16 %v305
    %v1024 = vunpack.c.h.b16 %v305
    %v1025 = vunpack.c.l.b16 %v306
    %v1026 = vunpack.c.h.b16 %v306
    %v1027 = vunpack.c.l.b16 %v307
    %v1028 = vunpack.c.h.b16 %v307
    %v1029 = vunpack.c.l.b16 %v308
    %v1030 = vunpack.c.h.b16 %v308
    %v1031 = vunpack.c.l.b16 %v309
    %v1032 = vunpack.c.h.b16 %v309
    %v1033 = vunpack.c.l.b16 %v310
    %v1034 = vunpack.c.h.b16 %v310
    %v1035 = vunpack.c.l.b16 %v311
    %v1036 = vunpack.c.h.b16 %v311
    %v1037 = vunpack.c.l.b16 %v312
    %v1038 = vunpack.c.h.b16 %v312
    %v1039 = vunpack.c.l.b16 %v313
    %v1040 = vunpack.c.h.b16 %v313
    %v1041 = vunpack.c.l.b16 %v314
    %v1042 = vunpack.c.h.b16 %v314
    %v1043 = vunpack.c.l.b16 %v315
    %v1044 = vunpack.c.h.b16 %v315
    %v1045 = vunpack.c.l.b16 %v316
    %v1046 = vunpack.c.h.b16 %v316
    %v1047 = vunpack.c.l.b16 %v317
    %v1048 = vunpack.c.h.b16 %v317
    %v1049 = vunpack.c.l.b16 %v318
    %v1050 = vunpack.c.h.b16 %v318
    %v1051 = vunpack.c.l.b16 %v319
    %v1052 = vunpack.c.h.b16 %v319
    %v1053 = vunpack.c.l.b16 %v320
    %v1054 = vunpack.c.h.b16 %v320
    %v1055 = vunpack.c.l.b16 %v321
    %v1056 = vunpack.c.h.b16 %v321
    %v1057 = vunpack.c.l.b16 %v322
    %v1058 = vunpack.c.h.b16 %v322
    %v1059 = vunpack.c.l.b16 %v323
    %v1060 = vunpack.c.h.b16 %v323
    %v1061 = vunpack.c.l.b16 %v324
    %v1062 = vunpack.c.h.b16 %v324
    %v1063 = vunpack.c.l.b16 %v325
    %v1064 = vunpack.c.h.b16 %v325
    %v1065 = vunpack.c.l.b16 %v326
    %v1066 = vunpack.c.h.b16 %v326
    %v1067 = vunpack.c.l.b16 %v327
    %v1068 = vunpack.c.h.b16 %v327
    %v1069 = vunpack.c.l.b16 %v328
    %v1070 = vunpack.c.h.b16 %v328
    %v1071 = vunpack.c.l.b16 %v329
    %v1072 = vunpack.c.h.b16 %v329
    %v1073 = vunpack.c.l.b16 %v330
    %v1074 = vunpack.c.h.b16 %v330
    %v1075 = vunpack.c.l.b16 %v331
    %v1076 = vunpack.c.h.b16 %v331
    %v1077 = vunpack.c.l.b16 %v332
    %v1078 = vunpack.c.h.b16 %v332
    %v1079 = vpack.c.b16 %v645, %v631
    %v1080 = vpack.c.b16 %v646, %v632
    %v1081 = vpack.c.b16 %v647, %v633
    %v1082 = vpack.c.b16 %v648, %v634
    %v1083 = vpack.c.b16 %v649, %v635
    %v1084 = vpack.c.b16 %v650, %v636
    %v1085 = vpack.c.b16 %v651, %v637
    %v1086 = vpack.c.b16 %v652, %v638
    %v1087 = vpack.c.b16 %v653, %v639
    %v1088 = vpack.c.b16 %v654, %v640
    %v1089 = vpack.c.b16 %v655, %v641
    %v1090 = vpack.c.b16 %v656, %v642
    %v1091 = vpack.c.b16 %v657, %v643
    %v1092 = vpack.c.b16 %v658, %v644
    %v1093 = vpack.c.b16 %v673, %v659
    %v1094 = vpack.c.b16 %v674, %v660
    %v1095 = vpack.c.b16 %v675, %v661
    %v1096 = vpack.c.b16 %v676, %v662
    %v1097 = vpack.c.b16 %v677, %v663
    %v1098 = vpack.c.b16 %v678, %v664
    %v1099 = vpack.c.b16 %v679, %v665
    %v1100 = vpack.c.b16 %v680, %v666
    %v1101 = vpack.c.b16 %v681, %v667
    %v1102 = vpack.c.b16 %v682, %v668
    %v1103 = vpack.c.b16 %v683, %v669
    %v1104 = vpack.c.b16 %v684, %v670
    %v1105 = vpack.c.b16 %v685, %v671
    %v1106 = vpack.c.b16 %v686, %v672
    %v1107 = vpack.c.b16 %v701, %v687
    %v1108 = vpack.c.b16 %v702, %v688
    %v1109 = vpack.c.b16 %v703, %v689
    %v1110 = vpack.c.b16 %v704, %v690
    %v1111 = vpack.c.b16 %v705, %v691
    %v1112 = vpack.c.b16 %v706, %v692
    %v1113 = vpack.c.b16 %v707, %v693
    %v1114 = vpack.c.b16 %v708, %v694
    %v1115 = vpack.c.b16 %v709, %v695
    %v1116 = vpack.c.b16 %v710, %v696
    %v1117 = vpack.c.b16 %v711, %v697
    %v1118 = vpack.c.b16 %v712, %v698
    %v1119 = vpack.c.b16 %v713, %v699
    %v1120 = vpack.c.b16 %v714, %v700
    %v1121 = vpack.c.b16 %v729, %v715
    %v1122 = vpack.c.b16 %v730, %v716
    %v1123 = vpack.c.b16 %v731, %v717
    %v1124 = vpack.c.b16 %v732, %v718
    %v1125 = vpack.c.b16 %v733, %v719
    %v1126 = vpack.c.b16 %v734, %v720
    %v1127 = vpack.c.b16 %v735, %v721
    %v1128 = vpack.c.b16 %v736, %v722
    %v1129 = vpack.c.b16 %v737, %v723
    %v1130 = vpack.c.b16 %v738, %v724
    %v1131 = vpack.c.b16 %v739, %v725
    %v1132 = vpack.c.b16 %v740, %v726
    %v1133 = vpack.c.b16 %v741, %v727
    %v1134 = vpack.c.b16 %v742, %v728
    %v1135 = vpack.c.b16 %v757, %v743
    %v1136 = vpack.c.b16 %v758, %v744
    %v1137 = vpack.c.b16 %v759, %v745
    %v1138 = vpack.c.b16 %v760, %v746
    %v1139 = vpack.c.b16 %v761, %v747
    %v1140 = vpack.c.b16 %v762, %v748
    %v1141 = vpack.c.b16 %v763, %v749
    %v1142 = vpack.c.b16 %v764, %v750
    %v1143 = vpack.c.b16 %v765, %v751
    %v1144 = vpack.c.b16 %v766, %v752
    %v1145 = vpack.c.b16 %v767, %v753
    %v1146 = vpack.c.b16 %v768, %v754
    %v1147 = vpack.c.b16 %v769, %v755
    %v1148 = vpack.c.b16 %v770, %v756
    %v1149 = vpack.c.b16 %v785, %v771
    %v1150 = vpack.c.b16 %v786, %v772
    %v1151 = vpack.c.b16 %v787, %v773
    %v1152 = vpack.c.b16 %v788, %v774
    %v1153 = vpack.c.b16 %v789, %v775
    %v1154 = vpack.c.b16 %v790, %v776
    %v1155 = vpack.c.b16 %v791, %v777
    %v1156 = vpack.c.b16 %v792, %v778
    %v1157 = vpack.c.b16 %v793, %v779
    %v1158 = vpack.c.b16 %v794, %v780
    %v1159 = vpack.c.b16 %v795, %v781
    %v1160 = vpack.c.b16 %v796, %v782
    %v1161 = vpack.c.b16 %v797, %v783
    %v1162 = vpack.c.b16 %v798, %v784
    %v1163 = vpack.c.b16 %v813, %v799
    %v1164 = vpack.c.b16 %v814, %v800
    %v1165 = vpack.c.b16 %v815, %v801
    %v1166 = vpack.c.b16 %v816, %v802
    %v1167 = vpack.c.b16 %v817, %v803
    %v1168 = vpack.c.b16 %v818, %v804
    %v1169 = vpack.c.b16 %v819, %v805
    %v1170 = vpack.c.b16 %v820, %v806
    %v1171 = vpack.c.b16 %v821, %v807
    %v1172 = vpack.c.b16 %v822, %v808
    %v1173 = vpack.c.b16 %v823, %v809
    %v1174 = vpack.c.b16 %v824, %v810
    %v1175 = vpack.c.b16 %v825, %v811
    %v1176 = vpack.c.b16 %v826, %v812
    %v1177 = vpack.c.b16 %v841, %v827
    %v1178 = vpack.c.b16 %v842, %v828
    %v1179 = vpack.c.b16 %v843, %v829
    %v1180 = vpack.c.b16 %v844, %v830
    %v1181 = vpack.c.b16 %v845, %v831
    %v1182 = vpack.c.b16 %v846, %v832
    %v1183 = vpack.c.b16 %v847, %v833
    %v1184 = vpack.c.b16 %v848, %v834
    %v1185 = vpack.c.b16 %v849, %v835
    %v1186 = vpack.c.b16 %v850, %v836
    %v1187 = vpack.c.b16 %v851, %v837
    %v1188 = vpack.c.b16 %v852, %v838
    %v1189 = vpack.c.b16 %v853, %v839
    %v1190 = vpack.c.b16 %v854, %v840
    %v1191 = vpack.c.b16 %v869, %v855
    %v1192 = vpack.c.b16 %v870, %v856
    %v1193 = vpack.c.b16 %v871, %v857
    %v1194 = vpack.c.b16 %v872, %v858
    %v1195 = vpack.c.b16 %v873, %v859
    %v1196 = vpack.c.b16 %v874, %v860
    %v1197 = vpack.c.b16 %v875, %v861
    %v1198 = vpack.c.b16 %v876, %v862
    %v1199 = vpack.c.b16 %v877, %v863
    %v1200 = vpack.c.b16 %v878, %v864
    %v1201 = vpack.c.b16 %v879, %v865
    %v1202 = vpack.c.b16 %v880, %v866
    %v1203 = vpack.c.b16 %v881, %v867
    %v1204 = vpack.c.b16 %v882, %v868
    %v1205 = vpack.c.b16 %v897, %v883
    %v1206 = vpack.c.b16 %v898, %v884
    %v1207 = vpack.c.b16 %v899, %v885
    %v1208 = vpack.c.b16 %v900, %v886
    %v1209 = vpack.c.b16 %v901, %v887
    %v1210 = vpack.c.b16 %v902, %v888
    %v1211 = vpack.c.b16 %v903, %v889
    %v1212 = vpack.c.b16 %v904, %v890
    %v1213 = vpack.c.b16 %v905, %v891
    %v1214 = vpack.c.b16 %v906, %v892
    %v1215 = vpack.c.b16 %v907, %v893
    %v1216 = vpack.c.b16 %v908, %v894
    %v1217 = vpack.c.b16 %v909, %v895
    %v1218 = vpack.c.b16 %v910, %v896
    %v1219 = vpack.c.b16 %v925, %v911
    %v1220 = vpack.c.b16 %v926, %v912
    %v1221 = vpack.c.b16 %v927, %v913
    %v1222 = vpack.c.b16 %v928, %v914
    %v1223 = vpack.c.b16 %v929, %v915
    %v1224 = vpack.c.b16 %v930, %v916
    %v1225 = vpack.c.b16 %v931, %v917
    %v1226 = vpack.c.b16 %v932, %v918
    %v1227 = vpack.c.b16 %v933, %v919
    %v1228 = vpack.c.b16 %v934, %v920
    %v1229 = vpack.c.b16 %v935, %v921
    %v1230 = vpack.c.b16 %v936, %v922
    %v1231 = vpack.c.b16 %v937, %v923
    %v1232 = vpack.c.b16 %v938, %v924
    %v1233 = vpack.c.b16 %v953, %v939
    %v1234 = vpack.c.b16 %v954, %v940
    %v1235 = vpack.c.b16 %v955, %v941
    %v1236 = vpack.c.b16 %v956, %v942
    %v1237 = vpack.c.b16 %v957, %v943
    %v1238 = vpack.c.b16 %v958, %v944
    %v1239 = vpack.c.b16 %v959, %v945
    %v1240 = vpack.c.b16 %v960, %v946
    %v1241 = vpack.c.b16 %v961, %v947
    %v1242 = vpack.c.b16 %v962, %v948
    %v1243 = vpack.c.b16 %v963, %v949
    %v1244 = vpack.c.b16 %v964, %v950
    %v1245 = vpack.c.b16 %v965, %v951
    %v1246 = vpack.c.b16 %v966, %v952
    %v1247 = vpack.c.b16 %v981, %v967
    %v1248 = vpack.c.b16 %v982, %v968
    %v1249 = vpack.c.b16 %v983, %v969
    %v1250 = vpack.c.b16 %v984, %v970
    %v1251 = vpack.c.b16 %v985, %v971
    %v1252 = vpack.c.b16 %v986, %v972
    %v1253 = vpack.c.b16 %v987, %v973
    %v1254 = vpack.c.b16 %v988, %v974
    %v1255 = vpack.c.b16 %v989, %v975
    %v1256 = vpack.c.b16 %v990, %v976
    %v1257 = vpack.c.b16 %v991, %v977
    %v1258 = vpack.c.b16 %v992, %v978
    %v1259 = vpack.c.b16 %v993, %v979
    %v1260 = vpack.c.b16 %v994, %v980
    %v1261 = vpack.c.b16 %v1009, %v995
    %v1262 = vpack.c.b16 %v1010, %v996
    %v1263 = vpack.c.b16 %v1011, %v997
    %v1264 = vpack.c.b16 %v1012, %v998
    %v1265 = vpack.c.b16 %v1013, %v999
    %v1266 = vpack.c.b16 %v1014, %v1000
    %v1267 = vpack.c.b16 %v1015, %v1001
    %v1268 = vpack.c.b16 %v1016, %v1002
    %v1269 = vpack.c.b16 %v1017, %v1003
    %v1270 = vpack.c.b16 %v1018, %v1004
    %v1271 = vpack.c.b16 %v1019, %v1005
    %v1272 = vpack.c.b16 %v1020, %v1006
    %v1273 = vpack.c.b16 %v1021, %v1007
    %v1274 = vpack.c.b16 %v1022, %v1008
    %v1275 = vpack.c.b16 %v1037, %v1023
    %v1276 = vpack.c.b16 %v1038, %v1024
    %v1277 = vpack.c.b16 %v1039, %v1025
    %v1278 = vpack.c.b16 %v1040, %v1026
    %v1279 = vpack.c.b16 %v1041, %v1027
    %v1280 = vpack.c.b16 %v1042, %v1028
    %v1281 = vpack.c.b16 %v1043, %v1029
    %v1282 = vpack.c.b16 %v1044, %v1030
    %v1283 = vpack.c.b16 %v1045, %v1031
    %v1284 = vpack.c.b16 %v1046, %v1032
    %v1285 = vpack.c.b16 %v1047, %v1033
    %v1286 = vpack.c.b16 %v1048, %v1034
    %v1287 = vpack.c.b16 %v1049, %v1035
    %v1288 = vpack.c.b16 %v1050, %v1036
    %v1289 = vpack.c.b16 %v1065, %v1051
    %v1290 = vpack.c.b16 %v1066, %v1052
    %v1291 = vpack.c.b16 %v1067, %v1053
    %v1292 = vpack.c.b16 %v1068, %v1054
    %v1293 = vpack.c.b16 %v1069, %v1055
    %v1294 = vpack.c.b16 %v1070, %v1056
    %v1295 = vpack.c.b16 %v1071, %v1057
    %v1296 = vpack.c.b16 %v1072, %v1058
    %v1297 = vpack.c.b16 %v1073, %v1059
    %v1298 = vpack.c.b16 %v1074, %v1060
    %v1299 = vpack.c.b16 %v1075, %v1061
    %v1300 = vpack.c.b16 %v1076, %v1062
    %v1301 = vpack.c.b16 %v1077, %v1063
    %v1302 = vpack.c.b16 %v1078, %v1064
    %1527 = vmatprep.subr.bf16.mxu0 %v1178
    %1528 = vmatpush1.bf16.msra.mxu0 %v1177
    %1529 = vmatprep.subr.bf16.mxu0 %v1164
    %1530 = vmatpush1.bf16.msra.mxu0 %v1163
    %1531 = vmatprep.subr.bf16.mxu0 %v1150
    %1532 = vmatpush1.bf16.msra.mxu0 %v1149
    %1533 = vmatprep.subr.bf16.mxu0 %v1136
    %1534 = vmatpush1.bf16.msra.mxu0 %v1135
    %1535 = vmatprep.subr.bf16.mxu0 %v1122
    %1536 = vmatpush1.bf16.msra.mxu0 %v1121
    %1537 = vmatprep.subr.bf16.mxu0 %v1108
    %1538 = vmatpush1.bf16.msra.mxu0 %v1107
    %1539 = vmatprep.subr.bf16.mxu0 %v1094
    %1540 = vmatpush1.bf16.msra.mxu0 %v1093
    %1541 = vmatprep.subr.bf16.mxu0 %v1080
    %1542 = vmatpush1.bf16.msra.mxu0 %v1079
    %1543 = vmatprep.subr.bf16.mxu0 %v1290
    %1544 = vmatpush2.bf16.msra.mxu0 %v1289
    %1545 = vmatprep.subr.bf16.mxu0 %v1276
    %1546 = vmatpush2.bf16.msra.mxu0 %v1275
    %1547 = vmatprep.subr.bf16.mxu0 %v1262
    %1548 = vmatpush2.bf16.msra.mxu0 %v1261
    %1549 = vmatprep.subr.bf16.mxu0 %v1248
    %1550 = vmatpush2.bf16.msra.mxu0 %v1247
    %1551 = vmatprep.subr.bf16.mxu0 %v1234
    %1552 = vmatpush2.bf16.msra.mxu0 %v1233
    %1553 = vmatprep.subr.bf16.mxu0 %v1220
    %1554 = vmatpush2.bf16.msra.mxu0 %v1219
    %1555 = vmatprep.subr.bf16.mxu0 %v1206
    %1556 = vmatpush2.bf16.msra.mxu0 %v1205
    %1557 = vmatprep.subr.bf16.mxu0 %v1192
    %1558 = vmatpush2.bf16.msra.mxu0 %v1191
    %1559 = vmatprep.mubr.bf16.mxu0 %v108
    %1560 = vmatmul.mubr.bf16.gmra.mxu0 %v107
    %v1561 = vpop.f32.mrf.mxu0
    %v1562 = vadd.f32 %v340, %v1561
    %v1563 = vpop.f32.mrf.mxu0
    %v1564 = vadd.f32 %v344, %v1563
    %v1565 = vpop.f32.mrf.mxu0
    %v1566 = vpop.f32.mrf.mxu0
    %1567 = vdwg.mxu0
    %1568 = vmatprep.subr.bf16.mxu0 %v1180
    %1569 = vmatpush1.bf16.msra.mxu0 %v1179
    %1570 = vmatprep.subr.bf16.mxu0 %v1166
    %1571 = vmatpush1.bf16.msra.mxu0 %v1165
    %1572 = vmatprep.subr.bf16.mxu0 %v1152
    %1573 = vmatpush1.bf16.msra.mxu0 %v1151
    %1574 = vmatprep.subr.bf16.mxu0 %v1138
    %1575 = vmatpush1.bf16.msra.mxu0 %v1137
    %1576 = vmatprep.subr.bf16.mxu0 %v1124
    %1577 = vmatpush1.bf16.msra.mxu0 %v1123
    %1578 = vmatprep.subr.bf16.mxu0 %v1110
    %1579 = vmatpush1.bf16.msra.mxu0 %v1109
    %1580 = vmatprep.subr.bf16.mxu0 %v1096
    %1581 = vmatpush1.bf16.msra.mxu0 %v1095
    %1582 = vmatprep.subr.bf16.mxu0 %v1082
    %1583 = vmatpush1.bf16.msra.mxu0 %v1081
    %1584 = vmatprep.subr.bf16.mxu0 %v1292
    %1585 = vmatpush2.bf16.msra.mxu0 %v1291
    %1586 = vmatprep.subr.bf16.mxu0 %v1278
    %1587 = vmatpush2.bf16.msra.mxu0 %v1277
    %1588 = vmatprep.subr.bf16.mxu0 %v1264
    %1589 = vmatpush2.bf16.msra.mxu0 %v1263
    %1590 = vmatprep.subr.bf16.mxu0 %v1250
    %1591 = vmatpush2.bf16.msra.mxu0 %v1249
    %1592 = vmatprep.subr.bf16.mxu0 %v1236
    %1593 = vmatpush2.bf16.msra.mxu0 %v1235
    %1594 = vmatprep.subr.bf16.mxu0 %v1222
    %1595 = vmatpush2.bf16.msra.mxu0 %v1221
    %1596 = vmatprep.subr.bf16.mxu0 %v1208
    %1597 = vmatpush2.bf16.msra.mxu0 %v1207
    %1598 = vmatprep.subr.bf16.mxu0 %v1194
    %1599 = vmatpush2.bf16.msra.mxu0 %v1193
    %1600 = vmatprep.mubr.bf16.mxu0 %v108
    %1601 = vmatmul.mubr.bf16.gmra.mxu0 %v107
    %v1602 = vpop.f32.mrf.mxu0
    %v1603 = vadd.f32 %v348, %v1602
    %v1604 = vpop.f32.mrf.mxu0
    %v1605 = vadd.f32 %v352, %v1604
    %v1606 = vpop.f32.mrf.mxu0
    %v1607 = vpop.f32.mrf.mxu0
    %1608 = vdwg.mxu0
    %1609 = vmatprep.subr.bf16.mxu0 %v1182
    %1610 = vmatpush1.bf16.msra.mxu0 %v1181
    %1611 = vmatprep.subr.bf16.mxu0 %v1168
    %1612 = vmatpush1.bf16.msra.mxu0 %v1167
    %1613 = vmatprep.subr.bf16.mxu0 %v1154
    %1614 = vmatpush1.bf16.msra.mxu0 %v1153
    %1615 = vmatprep.subr.bf16.mxu0 %v1140
    %1616 = vmatpush1.bf16.msra.mxu0 %v1139
    %1617 = vmatprep.subr.bf16.mxu0 %v1126
    %1618 = vmatpush1.bf16.msra.mxu0 %v1125
    %1619 = vmatprep.subr.bf16.mxu0 %v1112
    %1620 = vmatpush1.bf16.msra.mxu0 %v1111
    %1621 = vmatprep.subr.bf16.mxu0 %v1098
    %1622 = vmatpush1.bf16.msra.mxu0 %v1097
    %1623 = vmatprep.subr.bf16.mxu0 %v1084
    %1624 = vmatpush1.bf16.msra.mxu0 %v1083
    %1625 = vmatprep.subr.bf16.mxu0 %v1294
    %1626 = vmatpush2.bf16.msra.mxu0 %v1293
    %1627 = vmatprep.subr.bf16.mxu0 %v1280
    %1628 = vmatpush2.bf16.msra.mxu0 %v1279
    %1629 = vmatprep.subr.bf16.mxu0 %v1266
    %1630 = vmatpush2.bf16.msra.mxu0 %v1265
    %1631 = vmatprep.subr.bf16.mxu0 %v1252
    %1632 = vmatpush2.bf16.msra.mxu0 %v1251
    %1633 = vmatprep.subr.bf16.mxu0 %v1238
    %1634 = vmatpush2.bf16.msra.mxu0 %v1237
    %1635 = vmatprep.subr.bf16.mxu0 %v1224
    %1636 = vmatpush2.bf16.msra.mxu0 %v1223
    %1637 = vmatprep.subr.bf16.mxu0 %v1210
    %1638 = vmatpush2.bf16.msra.mxu0 %v1209
    %1639 = vmatprep.subr.bf16.mxu0 %v1196
    %1640 = vmatpush2.bf16.msra.mxu0 %v1195
    %1641 = vmatprep.mubr.bf16.mxu0 %v108
    %1642 = vmatmul.mubr.bf16.gmra.mxu0 %v107
    %v1643 = vpop.f32.mrf.mxu0
    %v1644 = vadd.f32 %v356, %v1643
    %v1645 = vpop.f32.mrf.mxu0
    %v1646 = vadd.f32 %v360, %v1645
    %v1647 = vpop.f32.mrf.mxu0
    %v1648 = vpop.f32.mrf.mxu0
    %1649 = vdwg.mxu0
    %1650 = vmatprep.subr.bf16.mxu0 %v1184
    %1651 = vmatpush1.bf16.msra.mxu0 %v1183
    %1652 = vmatprep.subr.bf16.mxu0 %v1170
    %1653 = vmatpush1.bf16.msra.mxu0 %v1169
    %1654 = vmatprep.subr.bf16.mxu0 %v1156
    %1655 = vmatpush1.bf16.msra.mxu0 %v1155
    %1656 = vmatprep.subr.bf16.mxu0 %v1142
    %1657 = vmatpush1.bf16.msra.mxu0 %v1141
    %1658 = vmatprep.subr.bf16.mxu0 %v1128
    %1659 = vmatpush1.bf16.msra.mxu0 %v1127
    %1660 = vmatprep.subr.bf16.mxu0 %v1114
    %1661 = vmatpush1.bf16.msra.mxu0 %v1113
    %1662 = vmatprep.subr.bf16.mxu0 %v1100
    %1663 = vmatpush1.bf16.msra.mxu0 %v1099
    %1664 = vmatprep.subr.bf16.mxu0 %v1086
    %1665 = vmatpush1.bf16.msra.mxu0 %v1085
    %1666 = vmatprep.subr.bf16.mxu0 %v1296
    %1667 = vmatpush2.bf16.msra.mxu0 %v1295
    %1668 = vmatprep.subr.bf16.mxu0 %v1282
    %1669 = vmatpush2.bf16.msra.mxu0 %v1281
    %1670 = vmatprep.subr.bf16.mxu0 %v1268
    %1671 = vmatpush2.bf16.msra.mxu0 %v1267
    %1672 = vmatprep.subr.bf16.mxu0 %v1254
    %1673 = vmatpush2.bf16.msra.mxu0 %v1253
    %1674 = vmatprep.subr.bf16.mxu0 %v1240
    %1675 = vmatpush2.bf16.msra.mxu0 %v1239
    %1676 = vmatprep.subr.bf16.mxu0 %v1226
    %1677 = vmatpush2.bf16.msra.mxu0 %v1225
    %1678 = vmatprep.subr.bf16.mxu0 %v1212
    %1679 = vmatpush2.bf16.msra.mxu0 %v1211
    %1680 = vmatprep.subr.bf16.mxu0 %v1198
    %1681 = vmatpush2.bf16.msra.mxu0 %v1197
    %1682 = vmatprep.mubr.bf16.mxu0 %v108
    %1683 = vmatmul.mubr.bf16.gmra.mxu0 %v107
    %v1684 = vpop.f32.mrf.mxu0
    %v1685 = vadd.f32 %v364, %v1684
    %v1686 = vpop.f32.mrf.mxu0
    %v1687 = vadd.f32 %v368, %v1686
    %v1688 = vpop.f32.mrf.mxu0
    %v1689 = vpop.f32.mrf.mxu0
    %1690 = vdwg.mxu0
    %1691 = vmatprep.subr.bf16.mxu0 %v1186
    %1692 = vmatpush1.bf16.msra.mxu0 %v1185
    %1693 = vmatprep.subr.bf16.mxu0 %v1172
    %1694 = vmatpush1.bf16.msra.mxu0 %v1171
    %1695 = vmatprep.subr.bf16.mxu0 %v1158
    %1696 = vmatpush1.bf16.msra.mxu0 %v1157
    %1697 = vmatprep.subr.bf16.mxu0 %v1144
    %1698 = vmatpush1.bf16.msra.mxu0 %v1143
    %1699 = vmatprep.subr.bf16.mxu0 %v1130
    %1700 = vmatpush1.bf16.msra.mxu0 %v1129
    %1701 = vmatprep.subr.bf16.mxu0 %v1116
    %1702 = vmatpush1.bf16.msra.mxu0 %v1115
    %1703 = vmatprep.subr.bf16.mxu0 %v1102
    %1704 = vmatpush1.bf16.msra.mxu0 %v1101
    %1705 = vmatprep.subr.bf16.mxu0 %v1088
    %1706 = vmatpush1.bf16.msra.mxu0 %v1087
    %1707 = vmatprep.subr.bf16.mxu0 %v1298
    %1708 = vmatpush2.bf16.msra.mxu0 %v1297
    %1709 = vmatprep.subr.bf16.mxu0 %v1284
    %1710 = vmatpush2.bf16.msra.mxu0 %v1283
    %1711 = vmatprep.subr.bf16.mxu0 %v1270
    %1712 = vmatpush2.bf16.msra.mxu0 %v1269
    %1713 = vmatprep.subr.bf16.mxu0 %v1256
    %1714 = vmatpush2.bf16.msra.mxu0 %v1255
    %1715 = vmatprep.subr.bf16.mxu0 %v1242
    %1716 = vmatpush2.bf16.msra.mxu0 %v1241
    %1717 = vmatprep.subr.bf16.mxu0 %v1228
    %1718 = vmatpush2.bf16.msra.mxu0 %v1227
    %1719 = vmatprep.subr.bf16.mxu0 %v1214
    %1720 = vmatpush2.bf16.msra.mxu0 %v1213
    %1721 = vmatprep.subr.bf16.mxu0 %v1200
    %1722 = vmatpush2.bf16.msra.mxu0 %v1199
    %1723 = vmatprep.mubr.bf16.mxu0 %v108
    %1724 = vmatmul.mubr.bf16.gmra.mxu0 %v107
    %v1725 = vpop.f32.mrf.mxu0
    %v1726 = vadd.f32 %v372, %v1725
    %v1727 = vpop.f32.mrf.mxu0
    %v1728 = vadd.f32 %v376, %v1727
    %v1729 = vpop.f32.mrf.mxu0
    %v1730 = vpop.f32.mrf.mxu0
    %1731 = vdwg.mxu0
    %1732 = vmatprep.subr.bf16.mxu0 %v1188
    %1733 = vmatpush1.bf16.msra.mxu0 %v1187
    %1734 = vmatprep.subr.bf16.mxu0 %v1174
    %1735 = vmatpush1.bf16.msra.mxu0 %v1173
    %1736 = vmatprep.subr.bf16.mxu0 %v1160
    %1737 = vmatpush1.bf16.msra.mxu0 %v1159
    %1738 = vmatprep.subr.bf16.mxu0 %v1146
    %1739 = vmatpush1.bf16.msra.mxu0 %v1145
    %1740 = vmatprep.subr.bf16.mxu0 %v1132
    %1741 = vmatpush1.bf16.msra.mxu0 %v1131
    %1742 = vmatprep.subr.bf16.mxu0 %v1118
    %1743 = vmatpush1.bf16.msra.mxu0 %v1117
    %1744 = vmatprep.subr.bf16.mxu0 %v1104
    %1745 = vmatpush1.bf16.msra.mxu0 %v1103
    %1746 = vmatprep.subr.bf16.mxu0 %v1090
    %1747 = vmatpush1.bf16.msra.mxu0 %v1089
    %1748 = vmatprep.subr.bf16.mxu0 %v1300
    %1749 = vmatpush2.bf16.msra.mxu0 %v1299
    %1750 = vmatprep.subr.bf16.mxu0 %v1286
    %1751 = vmatpush2.bf16.msra.mxu0 %v1285
    %1752 = vmatprep.subr.bf16.mxu0 %v1272
    %1753 = vmatpush2.bf16.msra.mxu0 %v1271
    %1754 = vmatprep.subr.bf16.mxu0 %v1258
    %1755 = vmatpush2.bf16.msra.mxu0 %v1257
    %1756 = vmatprep.subr.bf16.mxu0 %v1244
    %1757 = vmatpush2.bf16.msra.mxu0 %v1243
    %1758 = vmatprep.subr.bf16.mxu0 %v1230
    %1759 = vmatpush2.bf16.msra.mxu0 %v1229
    %1760 = vmatprep.subr.bf16.mxu0 %v1216
    %1761 = vmatpush2.bf16.msra.mxu0 %v1215
    %1762 = vmatprep.subr.bf16.mxu0 %v1202
    %1763 = vmatpush2.bf16.msra.mxu0 %v1201
    %1764 = vmatprep.mubr.bf16.mxu0 %v108
    %1765 = vmatmul.mubr.bf16.gmra.mxu0 %v107
    %v1766 = vpop.f32.mrf.mxu0
    %v1767 = vadd.f32 %v380, %v1766
    %v1768 = vpop.f32.mrf.mxu0
    %v1769 = vadd.f32 %v384, %v1768
    %v1770 = vpop.f32.mrf.mxu0
    %v1771 = vpop.f32.mrf.mxu0
    %1772 = vdwg.mxu0
    %1773 = vmatprep.subr.bf16.mxu0 %v1190
    %1774 = vmatpush1.bf16.msra.mxu0 %v1189
    %1775 = vmatprep.subr.bf16.mxu0 %v1176
    %1776 = vmatpush1.bf16.msra.mxu0 %v1175
    %1777 = vmatprep.subr.bf16.mxu0 %v1162
    %1778 = vmatpush1.bf16.msra.mxu0 %v1161
    %1779 = vmatprep.subr.bf16.mxu0 %v1148
    %1780 = vmatpush1.bf16.msra.mxu0 %v1147
    %1781 = vmatprep.subr.bf16.mxu0 %v1134
    %1782 = vmatpush1.bf16.msra.mxu0 %v1133
    %1783 = vmatprep.subr.bf16.mxu0 %v1120
    %1784 = vmatpush1.bf16.msra.mxu0 %v1119
    %1785 = vmatprep.subr.bf16.mxu0 %v1106
    %1786 = vmatpush1.bf16.msra.mxu0 %v1105
    %1787 = vmatprep.subr.bf16.mxu0 %v1092
    %1788 = vmatpush1.bf16.msra.mxu0 %v1091
    %1789 = vmatprep.subr.bf16.mxu0 %v1302
    %1790 = vmatpush2.bf16.msra.mxu0 %v1301
    %1791 = vmatprep.subr.bf16.mxu0 %v1288
    %1792 = vmatpush2.bf16.msra.mxu0 %v1287
    %1793 = vmatprep.subr.bf16.mxu0 %v1274
    %1794 = vmatpush2.bf16.msra.mxu0 %v1273
    %1795 = vmatprep.subr.bf16.mxu0 %v1260
    %1796 = vmatpush2.bf16.msra.mxu0 %v1259
    %1797 = vmatprep.subr.bf16.mxu0 %v1246
    %1798 = vmatpush2.bf16.msra.mxu0 %v1245
    %1799 = vmatprep.subr.bf16.mxu0 %v1232
    %1800 = vmatpush2.bf16.msra.mxu0 %v1231
    %1801 = vmatprep.subr.bf16.mxu0 %v1218
    %1802 = vmatpush2.bf16.msra.mxu0 %v1217
    %1803 = vmatprep.subr.bf16.mxu0 %v1204
    %1804 = vmatpush2.bf16.msra.mxu0 %v1203
    %1805 = vmatprep.mubr.bf16.mxu0 %v108
    %1806 = vmatmul.mubr.bf16.gmra.mxu0 %v107
    %v1807 = vpop.f32.mrf.mxu0
    %v1808 = vadd.f32 %v388, %v1807
    %v1809 = vpop.f32.mrf.mxu0
    %v1810 = vadd.f32 %v392, %v1809
    %v1811 = vpop.f32.mrf.mxu0
    %v1812 = vpop.f32.mrf.mxu0
    %1813 = vdwg.mxu0
    %v1814 = vmax.f32 %v1562, 0.0
    %v1815 = vmax.f32 %v1564, 0.0
    %v1816 = vmax.f32 %v1603, 0.0
    %v1817 = vmax.f32 %v1605, 0.0
    %v1818 = vmax.f32 %v1644, 0.0
    %v1819 = vmax.f32 %v1646, 0.0
    %v1820 = vmax.f32 %v1685, 0.0
    %v1821 = vmax.f32 %v1687, 0.0
    %v1822 = vmax.f32 %v1726, 0.0
    %v1823 = vmax.f32 %v1728, 0.0
    %v1824 = vmax.f32 %v1767, 0.0
    %v1825 = vmax.f32 %v1769, 0.0
    %v1826 = vmax.f32 %v1808, 0.0
    %v1827 = vmax.f32 %v1810, 0.0
    %v1828 = vpack.c.bf16 %v1814, %v1814
    %v1829 = vpack.c.bf16 %v1815, %v1815
    %v1830 = vpack.c.bf16 %v1816, %v1816
    %v1831 = vpack.c.bf16 %v1817, %v1817
    %v1832 = vpack.c.bf16 %v1818, %v1818
    %v1833 = vpack.c.bf16 %v1819, %v1819
    %v1834 = vpack.c.bf16 %v1820, %v1820
    %v1835 = vpack.c.bf16 %v1821, %v1821
    %v1836 = vpack.c.bf16 %v1822, %v1822
    %v1837 = vpack.c.bf16 %v1823, %v1823
    %v1838 = vpack.c.bf16 %v1824, %v1824
    %v1839 = vpack.c.bf16 %v1825, %v1825
    %v1840 = vpack.c.bf16 %v1826, %v1826
    %v1841 = vpack.c.bf16 %v1827, %v1827
    %v1842 = vld [vmem:[#allocation6] sm:$0xff]
    %v1843 = vld [vmem:[#allocation6 + $0x8] sm:$0xff]
    %v1844 = vld [vmem:[#allocation6 + $0x10] sm:$0xff]
    %v1845 = vld [vmem:[#allocation6 + $0x18] sm:$0xff]
    %v1846 = vld [vmem:[#allocation6 + $0x20] sm:$0xff]
    %v1847 = vld [vmem:[#allocation6 + $0x28] sm:$0xff]
    %v1848 = vld [vmem:[#allocation6 + $0x30] sm:$0xff]
    %v1849 = vld [vmem:[#allocation6 + $0x38] sm:$0xff]
    %v1850 = vld [vmem:[#allocation6 + $0x40] sm:$0xff]
    %v1851 = vld [vmem:[#allocation6 + $0x48] sm:$0xff]
    %v1852 = vld [vmem:[#allocation6 + $0x50] sm:$0xff]
    %v1853 = vld [vmem:[#allocation6 + $0x58] sm:$0xff]
    %v1854 = vld [vmem:[#allocation6 + $0x60] sm:$0xff]
    %v1855 = vld [vmem:[#allocation6 + $0x68] sm:$0xff]
    %v1856 = vld [vmem:[#allocation6 + $0x70] sm:$0xff]
    %v1857 = vld [vmem:[#allocation6 + $0x78] sm:$0xff]
    %v1858 = vld [vmem:[#allocation6 + $0x80] sm:$0xff]
    %v1859 = vld [vmem:[#allocation6 + $0x88] sm:$0xff]
    %v1860 = vld [vmem:[#allocation6 + $0x90] sm:$0xff]
    %v1861 = vld [vmem:[#allocation6 + $0x98] sm:$0xff]
    %v1862 = vld [vmem:[#allocation6 + $0xa0] sm:$0xff]
    %v1863 = vld [vmem:[#allocation6 + $0xa8] sm:$0xff]
    %v1864 = vld [vmem:[#allocation6 + $0xb0] sm:$0xff]
    %v1865 = vld [vmem:[#allocation6 + $0xb8] sm:$0xff]
    %v1866 = vld [vmem:[#allocation6 + $0xc0] sm:$0xff]
    %v1867 = vld [vmem:[#allocation6 + $0xc8] sm:$0xff]
    %v1868 = vld [vmem:[#allocation6 + $0xd0] sm:$0xff]
    %v1869 = vld [vmem:[#allocation6 + $0xd8] sm:$0xff]
    %v1870 = vld [vmem:[#allocation6 + $0xe0] sm:$0xff]
    %v1871 = vld [vmem:[#allocation6 + $0xe8] sm:$0xff]
    %v1872 = vld [vmem:[#allocation6 + $0xf0] sm:$0xff]
    %v1873 = vld [vmem:[#allocation6 + $0xf8] sm:$0xff]
    %v1874 = vld [vmem:[#allocation6 + $0x100] sm:$0xff]
    %v1875 = vld [vmem:[#allocation6 + $0x108] sm:$0xff]
    %v1876 = vld [vmem:[#allocation6 + $0x110] sm:$0xff]
    %v1877 = vld [vmem:[#allocation6 + $0x118] sm:$0xff]
    %v1878 = vld [vmem:[#allocation6 + $0x120] sm:$0xff]
    %v1879 = vld [vmem:[#allocation6 + $0x128] sm:$0xff]
    %v1880 = vld [vmem:[#allocation6 + $0x130] sm:$0xff]
    %v1881 = vld [vmem:[#allocation6 + $0x138] sm:$0xff]
    %v1882 = vld [vmem:[#allocation6 + $0x140] sm:$0xff]
    %v1883 = vld [vmem:[#allocation6 + $0x148] sm:$0xff]
    %v1884 = vld [vmem:[#allocation6 + $0x150] sm:$0xff]
    %v1885 = vld [vmem:[#allocation6 + $0x158] sm:$0xff]
    %v1886 = vld [vmem:[#allocation6 + $0x160] sm:$0xff]
    %v1887 = vld [vmem:[#allocation6 + $0x168] sm:$0xff]
    %v1888 = vld [vmem:[#allocation6 + $0x170] sm:$0xff]
    %v1889 = vld [vmem:[#allocation6 + $0x178] sm:$0xff]
    %v1890 = vld [vmem:[#allocation6 + $0x180] sm:$0xff]
    %v1891 = vld [vmem:[#allocation6 + $0x188] sm:$0xff]
    %v1892 = vld [vmem:[#allocation6 + $0x190] sm:$0xff]
    %v1893 = vld [vmem:[#allocation6 + $0x198] sm:$0xff]
    %v1894 = vld [vmem:[#allocation6 + $0x1a0] sm:$0xff]
    %v1895 = vld [vmem:[#allocation6 + $0x1a8] sm:$0xff]
    %v1896 = vld [vmem:[#allocation6 + $0x1b0] sm:$0xff]
    %v1897 = vld [vmem:[#allocation6 + $0x1b8] sm:$0xff]
    %v1898 = vld [vmem:[#allocation6 + $0x1c0] sm:$0xff]
    %v1899 = vld [vmem:[#allocation6 + $0x1c8] sm:$0xff]
    %v1900 = vld [vmem:[#allocation6 + $0x1d0] sm:$0xff]
    %v1901 = vld [vmem:[#allocation6 + $0x1d8] sm:$0xff]
    %v1902 = vld [vmem:[#allocation6 + $0x1e0] sm:$0xff]
    %v1903 = vld [vmem:[#allocation6 + $0x1e8] sm:$0xff]
    %v1904 = vld [vmem:[#allocation6 + $0x1f0] sm:$0xff]
    %v1905 = vld [vmem:[#allocation6 + $0x1f8] sm:$0xff]
    %v1906 = vld [vmem:[#allocation6 + $0x200] sm:$0xff]
    %v1907 = vld [vmem:[#allocation6 + $0x208] sm:$0xff]
    %v1908 = vld [vmem:[#allocation6 + $0x210] sm:$0xff]
    %v1909 = vld [vmem:[#allocation6 + $0x218] sm:$0xff]
    %v1910 = vld [vmem:[#allocation6 + $0x220] sm:$0xff]
    %v1911 = vld [vmem:[#allocation6 + $0x228] sm:$0xff]
    %v1912 = vld [vmem:[#allocation6 + $0x230] sm:$0xff]
    %v1913 = vld [vmem:[#allocation6 + $0x238] sm:$0xff]
    %v1914 = vld [vmem:[#allocation6 + $0x240] sm:$0xff]
    %v1915 = vld [vmem:[#allocation6 + $0x248] sm:$0xff]
    %v1916 = vld [vmem:[#allocation6 + $0x250] sm:$0xff]
    %v1917 = vld [vmem:[#allocation6 + $0x258] sm:$0xff]
    %v1918 = vld [vmem:[#allocation6 + $0x260] sm:$0xff]
    %v1919 = vld [vmem:[#allocation6 + $0x268] sm:$0xff]
    %v1920 = vld [vmem:[#allocation6 + $0x270] sm:$0xff]
    %v1921 = vld [vmem:[#allocation6 + $0x278] sm:$0xff]
    %v1922 = vld [vmem:[%s4] sm:$0x3]
    %v1924 = vlaneseq
    %v1925 = vshrl.u32 %v1924, 7
    %v1926 = vsub.s32 0, %v1925
    %v1927 = vrot.slane %v1922, %v1926
    %v1928 = vlaneseq
    %v1929 = vshrl.u32 %v1928, 7
    %v1930 = vsub.s32 1, %v1929
    %v1931 = vrot.slane %v1922, %v1930
    %v2014 = vunpack.c.l.b16 %v1842
    %v2015 = vunpack.c.h.b16 %v1842
    %v2016 = vunpack.c.l.b16 %v1843
    %v2017 = vunpack.c.h.b16 %v1843
    %v2018 = vunpack.c.l.b16 %v1844
    %v2019 = vunpack.c.h.b16 %v1844
    %v2020 = vunpack.c.l.b16 %v1845
    %v2021 = vunpack.c.h.b16 %v1845
    %v2022 = vunpack.c.l.b16 %v1846
    %v2023 = vunpack.c.h.b16 %v1846
    %v2024 = vunpack.c.l.b16 %v1847
    %v2025 = vunpack.c.h.b16 %v1847
    %v2026 = vunpack.c.l.b16 %v1848
    %v2027 = vunpack.c.h.b16 %v1848
    %v2028 = vunpack.c.l.b16 %v1849
    %v2029 = vunpack.c.h.b16 %v1849
    %v2030 = vunpack.c.l.b16 %v1850
    %v2031 = vunpack.c.h.b16 %v1850
    %v2032 = vunpack.c.l.b16 %v1851
    %v2033 = vunpack.c.h.b16 %v1851
    %v2034 = vunpack.c.l.b16 %v1852
    %v2035 = vunpack.c.h.b16 %v1852
    %v2036 = vunpack.c.l.b16 %v1853
    %v2037 = vunpack.c.h.b16 %v1853
    %v2038 = vunpack.c.l.b16 %v1854
    %v2039 = vunpack.c.h.b16 %v1854
    %v2040 = vunpack.c.l.b16 %v1855
    %v2041 = vunpack.c.h.b16 %v1855
    %v2042 = vunpack.c.l.b16 %v1856
    %v2043 = vunpack.c.h.b16 %v1856
    %v2044 = vunpack.c.l.b16 %v1857
    %v2045 = vunpack.c.h.b16 %v1857
    %v2046 = vunpack.c.l.b16 %v1858
    %v2047 = vunpack.c.h.b16 %v1858
    %v2048 = vunpack.c.l.b16 %v1859
    %v2049 = vunpack.c.h.b16 %v1859
    %v2050 = vunpack.c.l.b16 %v1860
    %v2051 = vunpack.c.h.b16 %v1860
    %v2052 = vunpack.c.l.b16 %v1861
    %v2053 = vunpack.c.h.b16 %v1861
    %v2054 = vunpack.c.l.b16 %v1862
    %v2055 = vunpack.c.h.b16 %v1862
    %v2056 = vunpack.c.l.b16 %v1863
    %v2057 = vunpack.c.h.b16 %v1863
    %v2058 = vunpack.c.l.b16 %v1864
    %v2059 = vunpack.c.h.b16 %v1864
    %v2060 = vunpack.c.l.b16 %v1865
    %v2061 = vunpack.c.h.b16 %v1865
    %v2062 = vunpack.c.l.b16 %v1866
    %v2063 = vunpack.c.h.b16 %v1866
    %v2064 = vunpack.c.l.b16 %v1867
    %v2065 = vunpack.c.h.b16 %v1867
    %v2066 = vunpack.c.l.b16 %v1868
    %v2067 = vunpack.c.h.b16 %v1868
    %v2068 = vunpack.c.l.b16 %v1869
    %v2069 = vunpack.c.h.b16 %v1869
    %v2070 = vunpack.c.l.b16 %v1870
    %v2071 = vunpack.c.h.b16 %v1870
    %v2072 = vunpack.c.l.b16 %v1871
    %v2073 = vunpack.c.h.b16 %v1871
    %v2074 = vunpack.c.l.b16 %v1872
    %v2075 = vunpack.c.h.b16 %v1872
    %v2076 = vunpack.c.l.b16 %v1873
    %v2077 = vunpack.c.h.b16 %v1873
    %v2078 = vunpack.c.l.b16 %v1874
    %v2079 = vunpack.c.h.b16 %v1874
    %v2080 = vunpack.c.l.b16 %v1875
    %v2081 = vunpack.c.h.b16 %v1875
    %v2082 = vunpack.c.l.b16 %v1876
    %v2083 = vunpack.c.h.b16 %v1876
    %v2084 = vunpack.c.l.b16 %v1877
    %v2085 = vunpack.c.h.b16 %v1877
    %v2086 = vunpack.c.l.b16 %v1878
    %v2087 = vunpack.c.h.b16 %v1878
    %v2088 = vunpack.c.l.b16 %v1879
    %v2089 = vunpack.c.h.b16 %v1879
    %v2090 = vunpack.c.l.b16 %v1880
    %v2091 = vunpack.c.h.b16 %v1880
    %v2092 = vunpack.c.l.b16 %v1881
    %v2093 = vunpack.c.h.b16 %v1881
    %v2094 = vunpack.c.l.b16 %v1882
    %v2095 = vunpack.c.h.b16 %v1882
    %v2096 = vunpack.c.l.b16 %v1883
    %v2097 = vunpack.c.h.b16 %v1883
    %v2098 = vunpack.c.l.b16 %v1884
    %v2099 = vunpack.c.h.b16 %v1884
    %v2100 = vunpack.c.l.b16 %v1885
    %v2101 = vunpack.c.h.b16 %v1885
    %v2102 = vunpack.c.l.b16 %v1886
    %v2103 = vunpack.c.h.b16 %v1886
    %v2104 = vunpack.c.l.b16 %v1887
    %v2105 = vunpack.c.h.b16 %v1887
    %v2106 = vunpack.c.l.b16 %v1888
    %v2107 = vunpack.c.h.b16 %v1888
    %v2108 = vunpack.c.l.b16 %v1889
    %v2109 = vunpack.c.h.b16 %v1889
    %v2110 = vunpack.c.l.b16 %v1890
    %v2111 = vunpack.c.h.b16 %v1890
    %v2112 = vunpack.c.l.b16 %v1891
    %v2113 = vunpack.c.h.b16 %v1891
    %v2114 = vunpack.c.l.b16 %v1892
    %v2115 = vunpack.c.h.b16 %v1892
    %v2116 = vunpack.c.l.b16 %v1893
    %v2117 = vunpack.c.h.b16 %v1893
    %v2118 = vunpack.c.l.b16 %v1894
    %v2119 = vunpack.c.h.b16 %v1894
    %v2120 = vunpack.c.l.b16 %v1895
    %v2121 = vunpack.c.h.b16 %v1895
    %v2122 = vunpack.c.l.b16 %v1896
    %v2123 = vunpack.c.h.b16 %v1896
    %v2124 = vunpack.c.l.b16 %v1897
    %v2125 = vunpack.c.h.b16 %v1897
    %v2126 = vunpack.c.l.b16 %v1898
    %v2127 = vunpack.c.h.b16 %v1898
    %v2128 = vunpack.c.l.b16 %v1899
    %v2129 = vunpack.c.h.b16 %v1899
    %v2130 = vunpack.c.l.b16 %v1900
    %v2131 = vunpack.c.h.b16 %v1900
    %v2132 = vunpack.c.l.b16 %v1901
    %v2133 = vunpack.c.h.b16 %v1901
    %v2134 = vunpack.c.l.b16 %v1902
    %v2135 = vunpack.c.h.b16 %v1902
    %v2136 = vunpack.c.l.b16 %v1903
    %v2137 = vunpack.c.h.b16 %v1903
    %v2138 = vunpack.c.l.b16 %v1904
    %v2139 = vunpack.c.h.b16 %v1904
    %v2140 = vunpack.c.l.b16 %v1905
    %v2141 = vunpack.c.h.b16 %v1905
    %v2142 = vunpack.c.l.b16 %v1906
    %v2143 = vunpack.c.h.b16 %v1906
    %v2144 = vunpack.c.l.b16 %v1907
    %v2145 = vunpack.c.h.b16 %v1907
    %v2146 = vunpack.c.l.b16 %v1908
    %v2147 = vunpack.c.h.b16 %v1908
    %v2148 = vunpack.c.l.b16 %v1909
    %v2149 = vunpack.c.h.b16 %v1909
    %v2150 = vunpack.c.l.b16 %v1910
    %v2151 = vunpack.c.h.b16 %v1910
    %v2152 = vunpack.c.l.b16 %v1911
    %v2153 = vunpack.c.h.b16 %v1911
    %v2154 = vunpack.c.l.b16 %v1912
    %v2155 = vunpack.c.h.b16 %v1912
    %v2156 = vunpack.c.l.b16 %v1913
    %v2157 = vunpack.c.h.b16 %v1913
    %v2158 = vunpack.c.l.b16 %v1914
    %v2159 = vunpack.c.h.b16 %v1914
    %v2160 = vunpack.c.l.b16 %v1915
    %v2161 = vunpack.c.h.b16 %v1915
    %v2162 = vunpack.c.l.b16 %v1916
    %v2163 = vunpack.c.h.b16 %v1916
    %v2164 = vunpack.c.l.b16 %v1917
    %v2165 = vunpack.c.h.b16 %v1917
    %v2166 = vunpack.c.l.b16 %v1918
    %v2167 = vunpack.c.h.b16 %v1918
    %v2168 = vunpack.c.l.b16 %v1919
    %v2169 = vunpack.c.h.b16 %v1919
    %v2170 = vunpack.c.l.b16 %v1920
    %v2171 = vunpack.c.h.b16 %v1920
    %v2172 = vunpack.c.l.b16 %v1921
    %v2173 = vunpack.c.h.b16 %v1921
    %v2174 = vpack.c.b16 %v2016, %v2014
    %v2175 = vpack.c.b16 %v2017, %v2015
    %v2176 = vpack.c.b16 %v2020, %v2018
    %v2177 = vpack.c.b16 %v2021, %v2019
    %v2178 = vpack.c.b16 %v2024, %v2022
    %v2179 = vpack.c.b16 %v2025, %v2023
    %v2180 = vpack.c.b16 %v2028, %v2026
    %v2181 = vpack.c.b16 %v2029, %v2027
    %v2182 = vpack.c.b16 %v2032, %v2030
    %v2183 = vpack.c.b16 %v2033, %v2031
    %v2184 = vpack.c.b16 %v2036, %v2034
    %v2185 = vpack.c.b16 %v2037, %v2035
    %v2186 = vpack.c.b16 %v2040, %v2038
    %v2187 = vpack.c.b16 %v2041, %v2039
    %v2188 = vpack.c.b16 %v2044, %v2042
    %v2189 = vpack.c.b16 %v2045, %v2043
    %v2190 = vpack.c.b16 %v2048, %v2046
    %v2191 = vpack.c.b16 %v2049, %v2047
    %v2192 = vpack.c.b16 %v2052, %v2050
    %v2193 = vpack.c.b16 %v2053, %v2051
    %v2194 = vpack.c.b16 %v2056, %v2054
    %v2195 = vpack.c.b16 %v2057, %v2055
    %v2196 = vpack.c.b16 %v2060, %v2058
    %v2197 = vpack.c.b16 %v2061, %v2059
    %v2198 = vpack.c.b16 %v2064, %v2062
    %v2199 = vpack.c.b16 %v2065, %v2063
    %v2200 = vpack.c.b16 %v2068, %v2066
    %v2201 = vpack.c.b16 %v2069, %v2067
    %v2202 = vpack.c.b16 %v2072, %v2070
    %v2203 = vpack.c.b16 %v2073, %v2071
    %v2204 = vpack.c.b16 %v2076, %v2074
    %v2205 = vpack.c.b16 %v2077, %v2075
    %v2206 = vpack.c.b16 %v2080, %v2078
    %v2207 = vpack.c.b16 %v2081, %v2079
    %v2208 = vpack.c.b16 %v2084, %v2082
    %v2209 = vpack.c.b16 %v2085, %v2083
    %v2210 = vpack.c.b16 %v2088, %v2086
    %v2211 = vpack.c.b16 %v2089, %v2087
    %v2212 = vpack.c.b16 %v2092, %v2090
    %v2213 = vpack.c.b16 %v2093, %v2091
    %v2214 = vpack.c.b16 %v2096, %v2094
    %v2215 = vpack.c.b16 %v2097, %v2095
    %v2216 = vpack.c.b16 %v2100, %v2098
    %v2217 = vpack.c.b16 %v2101, %v2099
    %v2218 = vpack.c.b16 %v2104, %v2102
    %v2219 = vpack.c.b16 %v2105, %v2103
    %v2220 = vpack.c.b16 %v2108, %v2106
    %v2221 = vpack.c.b16 %v2109, %v2107
    %v2222 = vpack.c.b16 %v2112, %v2110
    %v2223 = vpack.c.b16 %v2113, %v2111
    %v2224 = vpack.c.b16 %v2116, %v2114
    %v2225 = vpack.c.b16 %v2117, %v2115
    %v2226 = vpack.c.b16 %v2120, %v2118
    %v2227 = vpack.c.b16 %v2121, %v2119
    %v2228 = vpack.c.b16 %v2124, %v2122
    %v2229 = vpack.c.b16 %v2125, %v2123
    %v2230 = vpack.c.b16 %v2128, %v2126
    %v2231 = vpack.c.b16 %v2129, %v2127
    %v2232 = vpack.c.b16 %v2132, %v2130
    %v2233 = vpack.c.b16 %v2133, %v2131
    %v2234 = vpack.c.b16 %v2136, %v2134
    %v2235 = vpack.c.b16 %v2137, %v2135
    %v2236 = vpack.c.b16 %v2140, %v2138
    %v2237 = vpack.c.b16 %v2141, %v2139
    %v2238 = vpack.c.b16 %v2144, %v2142
    %v2239 = vpack.c.b16 %v2145, %v2143
    %v2240 = vpack.c.b16 %v2148, %v2146
    %v2241 = vpack.c.b16 %v2149, %v2147
    %v2242 = vpack.c.b16 %v2152, %v2150
    %v2243 = vpack.c.b16 %v2153, %v2151
    %v2244 = vpack.c.b16 %v2156, %v2154
    %v2245 = vpack.c.b16 %v2157, %v2155
    %v2246 = vpack.c.b16 %v2160, %v2158
    %v2247 = vpack.c.b16 %v2161, %v2159
    %v2248 = vpack.c.b16 %v2164, %v2162
    %v2249 = vpack.c.b16 %v2165, %v2163
    %v2250 = vpack.c.b16 %v2168, %v2166
    %v2251 = vpack.c.b16 %v2169, %v2167
    %v2252 = vpack.c.b16 %v2172, %v2170
    %v2253 = vpack.c.b16 %v2173, %v2171
    %2334 = vmatprep.subr.bf16.mxu0 %v2189
    %2335 = vmatpush1.bf16.msra.mxu0 %v2188
    %2336 = vmatprep.subr.bf16.mxu0 %v2187
    %2337 = vmatpush1.bf16.msra.mxu0 %v2186
    %2338 = vmatprep.subr.bf16.mxu0 %v2185
    %2339 = vmatpush1.bf16.msra.mxu0 %v2184
    %2340 = vmatprep.subr.bf16.mxu0 %v2183
    %2341 = vmatpush1.bf16.msra.mxu0 %v2182
    %2342 = vmatprep.subr.bf16.mxu0 %v2181
    %2343 = vmatpush1.bf16.msra.mxu0 %v2180
    %2344 = vmatprep.subr.bf16.mxu0 %v2179
    %2345 = vmatpush1.bf16.msra.mxu0 %v2178
    %2346 = vmatprep.subr.bf16.mxu0 %v2177
    %2347 = vmatpush1.bf16.msra.mxu0 %v2176
    %2348 = vmatprep.subr.bf16.mxu0 %v2175
    %2349 = vmatpush1.bf16.msra.mxu0 %v2174
    %2350 = vmatprep.subr.bf16.mxu0 %v2205
    %2351 = vmatpush2.bf16.msra.mxu0 %v2204
    %2352 = vmatprep.subr.bf16.mxu0 %v2203
    %2353 = vmatpush2.bf16.msra.mxu0 %v2202
    %2354 = vmatprep.subr.bf16.mxu0 %v2201
    %2355 = vmatpush2.bf16.msra.mxu0 %v2200
    %2356 = vmatprep.subr.bf16.mxu0 %v2199
    %2357 = vmatpush2.bf16.msra.mxu0 %v2198
    %2358 = vmatprep.subr.bf16.mxu0 %v2197
    %2359 = vmatpush2.bf16.msra.mxu0 %v2196
    %2360 = vmatprep.subr.bf16.mxu0 %v2195
    %2361 = vmatpush2.bf16.msra.mxu0 %v2194
    %2362 = vmatprep.subr.bf16.mxu0 %v2193
    %2363 = vmatpush2.bf16.msra.mxu0 %v2192
    %2364 = vmatprep.subr.bf16.mxu0 %v2191
    %2365 = vmatpush2.bf16.msra.mxu0 %v2190
    %2366 = vmatprep.mubr.bf16.mxu0 %v1829
    %2367 = vmatmul.mubr.bf16.gmra.mxu0 %v1828
    %v2368 = vpop.f32.mrf.mxu0
    %v2369 = vadd.f32 %v1927, %v2368
    %v2370 = vpop.f32.mrf.mxu0
    %v2371 = vadd.f32 %v1931, %v2370
    %v2372 = vpop.f32.mrf.mxu0
    %v2373 = vpop.f32.mrf.mxu0
    %2374 = vdwg.mxu0
    %2375 = vmatprep.subr.bf16.mxu0 %v2221
    %2376 = vmatpush1.bf16.msra.mxu0 %v2220
    %2377 = vmatprep.subr.bf16.mxu0 %v2219
    %2378 = vmatpush1.bf16.msra.mxu0 %v2218
    %2379 = vmatprep.subr.bf16.mxu0 %v2217
    %2380 = vmatpush1.bf16.msra.mxu0 %v2216
    %2381 = vmatprep.subr.bf16.mxu0 %v2215
    %2382 = vmatpush1.bf16.msra.mxu0 %v2214
    %2383 = vmatprep.subr.bf16.mxu0 %v2213
    %2384 = vmatpush1.bf16.msra.mxu0 %v2212
    %2385 = vmatprep.subr.bf16.mxu0 %v2211
    %2386 = vmatpush1.bf16.msra.mxu0 %v2210
    %2387 = vmatprep.subr.bf16.mxu0 %v2209
    %2388 = vmatpush1.bf16.msra.mxu0 %v2208
    %2389 = vmatprep.subr.bf16.mxu0 %v2207
    %2390 = vmatpush1.bf16.msra.mxu0 %v2206
    %2391 = vmatprep.subr.bf16.mxu0 %v2237
    %2392 = vmatpush2.bf16.msra.mxu0 %v2236
    %2393 = vmatprep.subr.bf16.mxu0 %v2235
    %2394 = vmatpush2.bf16.msra.mxu0 %v2234
    %2395 = vmatprep.subr.bf16.mxu0 %v2233
    %2396 = vmatpush2.bf16.msra.mxu0 %v2232
    %2397 = vmatprep.subr.bf16.mxu0 %v2231
    %2398 = vmatpush2.bf16.msra.mxu0 %v2230
    %2399 = vmatprep.subr.bf16.mxu0 %v2229
    %2400 = vmatpush2.bf16.msra.mxu0 %v2228
    %2401 = vmatprep.subr.bf16.mxu0 %v2227
    %2402 = vmatpush2.bf16.msra.mxu0 %v2226
    %2403 = vmatprep.subr.bf16.mxu0 %v2225
    %2404 = vmatpush2.bf16.msra.mxu0 %v2224
    %2405 = vmatprep.subr.bf16.mxu0 %v2223
    %2406 = vmatpush2.bf16.msra.mxu0 %v2222
    %2407 = vmatprep.mubr.bf16.mxu0 %v1831
    %2408 = vmatmul.mubr.bf16.gmra.mxu0 %v1830
    %v2409 = vpop.f32.mrf.mxu0
    %v2410 = vadd.f32 %v2369, %v2409
    %v2411 = vpop.f32.mrf.mxu0
    %v2412 = vadd.f32 %v2371, %v2411
    %v2413 = vpop.f32.mrf.mxu0
    %v2414 = vpop.f32.mrf.mxu0
    %2415 = vdwg.mxu0
    %2416 = vmatprep.subr.bf16.mxu0 %v2253
    %2417 = vmatpush1.bf16.msra.mxu0 %v2252
    %2418 = vmatprep.subr.bf16.mxu0 %v2251
    %2419 = vmatpush1.bf16.msra.mxu0 %v2250
    %2420 = vmatprep.subr.bf16.mxu0 %v2249
    %2421 = vmatpush1.bf16.msra.mxu0 %v2248
    %2422 = vmatprep.subr.bf16.mxu0 %v2247
    %2423 = vmatpush1.bf16.msra.mxu0 %v2246
    %2424 = vmatprep.subr.bf16.mxu0 %v2245
    %2425 = vmatpush1.bf16.msra.mxu0 %v2244
    %2426 = vmatprep.subr.bf16.mxu0 %v2243
    %2427 = vmatpush1.bf16.msra.mxu0 %v2242
    %2428 = vmatprep.subr.bf16.mxu0 %v2241
    %2429 = vmatpush1.bf16.msra.mxu0 %v2240
    %2430 = vmatprep.subr.bf16.mxu0 %v2239
    %2431 = vmatpush1.bf16.msra.mxu0 %v2238
    %2432 = vmatprep.subr.bf16.mxu0 0
    %2433 = vmatpush2.bf16.msra.mxu0 0
    %2434 = vmatprep.subr.bf16.mxu0 0
    %2435 = vmatpush2.bf16.msra.mxu0 0
    %2436 = vmatprep.subr.bf16.mxu0 0
    %2437 = vmatpush2.bf16.msra.mxu0 0
    %2438 = vmatprep.subr.bf16.mxu0 0
    %2439 = vmatpush2.bf16.msra.mxu0 0
    %2440 = vmatprep.subr.bf16.mxu0 0
    %2441 = vmatpush2.bf16.msra.mxu0 0
    %2442 = vmatprep.subr.bf16.mxu0 0
    %2443 = vmatpush2.bf16.msra.mxu0 0
    %2444 = vmatprep.subr.bf16.mxu0 0
    %2445 = vmatpush2.bf16.msra.mxu0 0
    %2446 = vmatprep.subr.bf16.mxu0 0
    %2447 = vmatpush2.bf16.msra.mxu0 0
    %2448 = vmatprep.mubr.bf16.mxu0 0
    %2449 = vmatmul.mubr.bf16.gmra.mxu0 %v1832
    %v2450 = vpop.f32.mrf.mxu0
    %v2451 = vadd.f32 %v2410, %v2450
    %v2452 = vpop.f32.mrf.mxu0
    %v2453 = vadd.f32 %v2412, %v2452
    %v2454 = vpop.f32.mrf.mxu0
    %v2455 = vpop.f32.mrf.mxu0
    %2456 = vdwg.mxu0
    %v2457 = vmax.f32 %v2451, 0.0
    %v2458 = vmax.f32 %v2453, 0.0
    %v2459 = vmax.f32 %v2457, %v2458
    %2460 = vmatprep.subr.bf16.mxu0 %v2189
    %2461 = vmatpush1.bf16.msra.mxu0 %v2188
    %2462 = vmatprep.subr.bf16.mxu0 %v2187
    %2463 = vmatpush1.bf16.msra.mxu0 %v2186
    %2464 = vmatprep.subr.bf16.mxu0 %v2185
    %2465 = vmatpush1.bf16.msra.mxu0 %v2184
    %2466 = vmatprep.subr.bf16.mxu0 %v2183
    %2467 = vmatpush1.bf16.msra.mxu0 %v2182
    %2468 = vmatprep.subr.bf16.mxu0 %v2181
    %2469 = vmatpush1.bf16.msra.mxu0 %v2180
    %2470 = vmatprep.subr.bf16.mxu0 %v2179
    %2471 = vmatpush1.bf16.msra.mxu0 %v2178
    %2472 = vmatprep.subr.bf16.mxu0 %v2177
    %2473 = vmatpush1.bf16.msra.mxu0 %v2176
    %2474 = vmatprep.subr.bf16.mxu0 %v2175
    %2475 = vmatpush1.bf16.msra.mxu0 %v2174
    %2476 = vmatprep.subr.bf16.mxu0 %v2205
    %2477 = vmatpush2.bf16.msra.mxu0 %v2204
    %2478 = vmatprep.subr.bf16.mxu0 %v2203
    %2479 = vmatpush2.bf16.msra.mxu0 %v2202
    %2480 = vmatprep.subr.bf16.mxu0 %v2201
    %2481 = vmatpush2.bf16.msra.mxu0 %v2200
    %2482 = vmatprep.subr.bf16.mxu0 %v2199
    %2483 = vmatpush2.bf16.msra.mxu0 %v2198
    %2484 = vmatprep.subr.bf16.mxu0 %v2197
    %2485 = vmatpush2.bf16.msra.mxu0 %v2196
    %2486 = vmatprep.subr.bf16.mxu0 %v2195
    %2487 = vmatpush2.bf16.msra.mxu0 %v2194
    %2488 = vmatprep.subr.bf16.mxu0 %v2193
    %2489 = vmatpush2.bf16.msra.mxu0 %v2192
    %2490 = vmatprep.subr.bf16.mxu0 %v2191
    %2491 = vmatpush2.bf16.msra.mxu0 %v2190
    %2492 = vmatprep.mubr.bf16.mxu0 %v1830
    %2493 = vmatmul.mubr.bf16.gmra.mxu0 %v1829
    %v2494 = vpop.f32.mrf.mxu0
    %v2495 = vadd.f32 %v1927, %v2494
    %v2496 = vpop.f32.mrf.mxu0
    %v2497 = vadd.f32 %v1931, %v2496
    %v2498 = vpop.f32.mrf.mxu0
    %v2499 = vpop.f32.mrf.mxu0
    %2500 = vdwg.mxu0
    %2501 = vmatprep.subr.bf16.mxu0 %v2221
    %2502 = vmatpush1.bf16.msra.mxu0 %v2220
    %2503 = vmatprep.subr.bf16.mxu0 %v2219
    %2504 = vmatpush1.bf16.msra.mxu0 %v2218
    %2505 = vmatprep.subr.bf16.mxu0 %v2217
    %2506 = vmatpush1.bf16.msra.mxu0 %v2216
    %2507 = vmatprep.subr.bf16.mxu0 %v2215
    %2508 = vmatpush1.bf16.msra.mxu0 %v2214
    %2509 = vmatprep.subr.bf16.mxu0 %v2213
    %2510 = vmatpush1.bf16.msra.mxu0 %v2212
    %2511 = vmatprep.subr.bf16.mxu0 %v2211
    %2512 = vmatpush1.bf16.msra.mxu0 %v2210
    %2513 = vmatprep.subr.bf16.mxu0 %v2209
    %2514 = vmatpush1.bf16.msra.mxu0 %v2208
    %2515 = vmatprep.subr.bf16.mxu0 %v2207
    %2516 = vmatpush1.bf16.msra.mxu0 %v2206
    %2517 = vmatprep.subr.bf16.mxu0 %v2237
    %2518 = vmatpush2.bf16.msra.mxu0 %v2236
    %2519 = vmatprep.subr.bf16.mxu0 %v2235
    %2520 = vmatpush2.bf16.msra.mxu0 %v2234
    %2521 = vmatprep.subr.bf16.mxu0 %v2233
    %2522 = vmatpush2.bf16.msra.mxu0 %v2232
    %2523 = vmatprep.subr.bf16.mxu0 %v2231
    %2524 = vmatpush2.bf16.msra.mxu0 %v2230
    %2525 = vmatprep.subr.bf16.mxu0 %v2229
    %2526 = vmatpush2.bf16.msra.mxu0 %v2228
    %2527 = vmatprep.subr.bf16.mxu0 %v2227
    %2528 = vmatpush2.bf16.msra.mxu0 %v2226
    %2529 = vmatprep.subr.bf16.mxu0 %v2225
    %2530 = vmatpush2.bf16.msra.mxu0 %v2224
    %2531 = vmatprep.subr.bf16.mxu0 %v2223
    %2532 = vmatpush2.bf16.msra.mxu0 %v2222
    %2533 = vmatprep.mubr.bf16.mxu0 %v1832
    %2534 = vmatmul.mubr.bf16.gmra.mxu0 %v1831
    %v2535 = vpop.f32.mrf.mxu0
    %v2536 = vadd.f32 %v2495, %v2535
    %v2537 = vpop.f32.mrf.mxu0
    %v2538 = vadd.f32 %v2497, %v2537
    %v2539 = vpop.f32.mrf.mxu0
    %v2540 = vpop.f32.mrf.mxu0
    %2541 = vdwg.mxu0
    %2542 = vmatprep.subr.bf16.mxu0 %v2253
    %2543 = vmatpush1.bf16.msra.mxu0 %v2252
    %2544 = vmatprep.subr.bf16.mxu0 %v2251
    %2545 = vmatpush1.bf16.msra.mxu0 %v2250
    %2546 = vmatprep.subr.bf16.mxu0 %v2249
    %2547 = vmatpush1.bf16.msra.mxu0 %v2248
    %2548 = vmatprep.subr.bf16.mxu0 %v2247
    %2549 = vmatpush1.bf16.msra.mxu0 %v2246
    %2550 = vmatprep.subr.bf16.mxu0 %v2245
    %2551 = vmatpush1.bf16.msra.mxu0 %v2244
    %2552 = vmatprep.subr.bf16.mxu0 %v2243
    %2553 = vmatpush1.bf16.msra.mxu0 %v2242
    %2554 = vmatprep.subr.bf16.mxu0 %v2241
    %2555 = vmatpush1.bf16.msra.mxu0 %v2240
    %2556 = vmatprep.subr.bf16.mxu0 %v2239
    %2557 = vmatpush1.bf16.msra.mxu0 %v2238
    %2558 = vmatprep.subr.bf16.mxu0 0
    %2559 = vmatpush2.bf16.msra.mxu0 0
    %2560 = vmatprep.subr.bf16.mxu0 0
    %2561 = vmatpush2.bf16.msra.mxu0 0
    %2562 = vmatprep.subr.bf16.mxu0 0
    %2563 = vmatpush2.bf16.msra.mxu0 0
    %2564 = vmatprep.subr.bf16.mxu0 0
    %2565 = vmatpush2.bf16.msra.mxu0 0
    %2566 = vmatprep.subr.bf16.mxu0 0
    %2567 = vmatpush2.bf16.msra.mxu0 0
    %2568 = vmatprep.subr.bf16.mxu0 0
    %2569 = vmatpush2.bf16.msra.mxu0 0
    %2570 = vmatprep.subr.bf16.mxu0 0
    %2571 = vmatpush2.bf16.msra.mxu0 0
    %2572 = vmatprep.subr.bf16.mxu0 0
    %2573 = vmatpush2.bf16.msra.mxu0 0
    %2574 = vmatprep.mubr.bf16.mxu0 0
    %2575 = vmatmul.mubr.bf16.gmra.mxu0 %v1833
    %v2576 = vpop.f32.mrf.mxu0
    %v2577 = vadd.f32 %v2536, %v2576
    %v2578 = vpop.f32.mrf.mxu0
    %v2579 = vadd.f32 %v2538, %v2578
    %v2580 = vpop.f32.mrf.mxu0
    %v2581 = vpop.f32.mrf.mxu0
    %2582 = vdwg.mxu0
    %v2583 = vmax.f32 %v2577, 0.0
    %v2584 = vmax.f32 %v2579, 0.0
    %v2585 = vmax.f32 %v2583, %v2584
    %v2586 = vmax.f32 %v2459, %v2585
    %2587 = vmatprep.subr.bf16.mxu0 %v2189
    %2588 = vmatpush1.bf16.msra.mxu0 %v2188
    %2589 = vmatprep.subr.bf16.mxu0 %v2187
    %2590 = vmatpush1.bf16.msra.mxu0 %v2186
    %2591 = vmatprep.subr.bf16.mxu0 %v2185
    %2592 = vmatpush1.bf16.msra.mxu0 %v2184
    %2593 = vmatprep.subr.bf16.mxu0 %v2183
    %2594 = vmatpush1.bf16.msra.mxu0 %v2182
    %2595 = vmatprep.subr.bf16.mxu0 %v2181
    %2596 = vmatpush1.bf16.msra.mxu0 %v2180
    %2597 = vmatprep.subr.bf16.mxu0 %v2179
    %2598 = vmatpush1.bf16.msra.mxu0 %v2178
    %2599 = vmatprep.subr.bf16.mxu0 %v2177
    %2600 = vmatpush1.bf16.msra.mxu0 %v2176
    %2601 = vmatprep.subr.bf16.mxu0 %v2175
    %2602 = vmatpush1.bf16.msra.mxu0 %v2174
    %2603 = vmatprep.subr.bf16.mxu0 %v2205
    %2604 = vmatpush2.bf16.msra.mxu0 %v2204
    %2605 = vmatprep.subr.bf16.mxu0 %v2203
    %2606 = vmatpush2.bf16.msra.mxu0 %v2202
    %2607 = vmatprep.subr.bf16.mxu0 %v2201
    %2608 = vmatpush2.bf16.msra.mxu0 %v2200
    %2609 = vmatprep.subr.bf16.mxu0 %v2199
    %2610 = vmatpush2.bf16.msra.mxu0 %v2198
    %2611 = vmatprep.subr.bf16.mxu0 %v2197
    %2612 = vmatpush2.bf16.msra.mxu0 %v2196
    %2613 = vmatprep.subr.bf16.mxu0 %v2195
    %2614 = vmatpush2.bf16.msra.mxu0 %v2194
    %2615 = vmatprep.subr.bf16.mxu0 %v2193
    %2616 = vmatpush2.bf16.msra.mxu0 %v2192
    %2617 = vmatprep.subr.bf16.mxu0 %v2191
    %2618 = vmatpush2.bf16.msra.mxu0 %v2190
    %2619 = vmatprep.mubr.bf16.mxu0 %v1831
    %2620 = vmatmul.mubr.bf16.gmra.mxu0 %v1830
    %v2621 = vpop.f32.mrf.mxu0
    %v2622 = vadd.f32 %v1927, %v2621
    %v2623 = vpop.f32.mrf.mxu0
    %v2624 = vadd.f32 %v1931, %v2623
    %v2625 = vpop.f32.mrf.mxu0
    %v2626 = vpop.f32.mrf.mxu0
    %2627 = vdwg.mxu0
    %2628 = vmatprep.subr.bf16.mxu0 %v2221
    %2629 = vmatpush1.bf16.msra.mxu0 %v2220
    %2630 = vmatprep.subr.bf16.mxu0 %v2219
    %2631 = vmatpush1.bf16.msra.mxu0 %v2218
    %2632 = vmatprep.subr.bf16.mxu0 %v2217
    %2633 = vmatpush1.bf16.msra.mxu0 %v2216
    %2634 = vmatprep.subr.bf16.mxu0 %v2215
    %2635 = vmatpush1.bf16.msra.mxu0 %v2214
    %2636 = vmatprep.subr.bf16.mxu0 %v2213
    %2637 = vmatpush1.bf16.msra.mxu0 %v2212
    %2638 = vmatprep.subr.bf16.mxu0 %v2211
    %2639 = vmatpush1.bf16.msra.mxu0 %v2210
    %2640 = vmatprep.subr.bf16.mxu0 %v2209
    %2641 = vmatpush1.bf16.msra.mxu0 %v2208
    %2642 = vmatprep.subr.bf16.mxu0 %v2207
    %2643 = vmatpush1.bf16.msra.mxu0 %v2206
    %2644 = vmatprep.subr.bf16.mxu0 %v2237
    %2645 = vmatpush2.bf16.msra.mxu0 %v2236
    %2646 = vmatprep.subr.bf16.mxu0 %v2235
    %2647 = vmatpush2.bf16.msra.mxu0 %v2234
    %2648 = vmatprep.subr.bf16.mxu0 %v2233
    %2649 = vmatpush2.bf16.msra.mxu0 %v2232
    %2650 = vmatprep.subr.bf16.mxu0 %v2231
    %2651 = vmatpush2.bf16.msra.mxu0 %v2230
    %2652 = vmatprep.subr.bf16.mxu0 %v2229
    %2653 = vmatpush2.bf16.msra.mxu0 %v2228
    %2654 = vmatprep.subr.bf16.mxu0 %v2227
    %2655 = vmatpush2.bf16.msra.mxu0 %v2226
    %2656 = vmatprep.subr.bf16.mxu0 %v2225
    %2657 = vmatpush2.bf16.msra.mxu0 %v2224
    %2658 = vmatprep.subr.bf16.mxu0 %v2223
    %2659 = vmatpush2.bf16.msra.mxu0 %v2222
    %2660 = vmatprep.mubr.bf16.mxu0 %v1833
    %2661 = vmatmul.mubr.bf16.gmra.mxu0 %v1832
    %v2662 = vpop.f32.mrf.mxu0
    %v2663 = vadd.f32 %v2622, %v2662
    %v2664 = vpop.f32.mrf.mxu0
    %v2665 = vadd.f32 %v2624, %v2664
    %v2666 = vpop.f32.mrf.mxu0
    %v2667 = vpop.f32.mrf.mxu0
    %2668 = vdwg.mxu0
    %2669 = vmatprep.subr.bf16.mxu0 %v2253
    %2670 = vmatpush1.bf16.msra.mxu0 %v2252
    %2671 = vmatprep.subr.bf16.mxu0 %v2251
    %2672 = vmatpush1.bf16.msra.mxu0 %v2250
    %2673 = vmatprep.subr.bf16.mxu0 %v2249
    %2674 = vmatpush1.bf16.msra.mxu0 %v2248
    %2675 = vmatprep.subr.bf16.mxu0 %v2247
    %2676 = vmatpush1.bf16.msra.mxu0 %v2246
    %2677 = vmatprep.subr.bf16.mxu0 %v2245
    %2678 = vmatpush1.bf16.msra.mxu0 %v2244
    %2679 = vmatprep.subr.bf16.mxu0 %v2243
    %2680 = vmatpush1.bf16.msra.mxu0 %v2242
    %2681 = vmatprep.subr.bf16.mxu0 %v2241
    %2682 = vmatpush1.bf16.msra.mxu0 %v2240
    %2683 = vmatprep.subr.bf16.mxu0 %v2239
    %2684 = vmatpush1.bf16.msra.mxu0 %v2238
    %2685 = vmatprep.subr.bf16.mxu0 0
    %2686 = vmatpush2.bf16.msra.mxu0 0
    %2687 = vmatprep.subr.bf16.mxu0 0
    %2688 = vmatpush2.bf16.msra.mxu0 0
    %2689 = vmatprep.subr.bf16.mxu0 0
    %2690 = vmatpush2.bf16.msra.mxu0 0
    %2691 = vmatprep.subr.bf16.mxu0 0
    %2692 = vmatpush2.bf16.msra.mxu0 0
    %2693 = vmatprep.subr.bf16.mxu0 0
    %2694 = vmatpush2.bf16.msra.mxu0 0
    %2695 = vmatprep.subr.bf16.mxu0 0
    %2696 = vmatpush2.bf16.msra.mxu0 0
    %2697 = vmatprep.subr.bf16.mxu0 0
    %2698 = vmatpush2.bf16.msra.mxu0 0
    %2699 = vmatprep.subr.bf16.mxu0 0
    %2700 = vmatpush2.bf16.msra.mxu0 0
    %2701 = vmatprep.mubr.bf16.mxu0 0
    %2702 = vmatmul.mubr.bf16.gmra.mxu0 %v1834
    %v2703 = vpop.f32.mrf.mxu0
    %v2704 = vadd.f32 %v2663, %v2703
    %v2705 = vpop.f32.mrf.mxu0
    %v2706 = vadd.f32 %v2665, %v2705
    %v2707 = vpop.f32.mrf.mxu0
    %v2708 = vpop.f32.mrf.mxu0
    %2709 = vdwg.mxu0
    %v2710 = vmax.f32 %v2704, 0.0
    %v2711 = vmax.f32 %v2706, 0.0
    %v2712 = vmax.f32 %v2710, %v2711
    %2713 = vmatprep.subr.bf16.mxu0 %v2189
    %2714 = vmatpush1.bf16.msra.mxu0 %v2188
    %2715 = vmatprep.subr.bf16.mxu0 %v2187
    %2716 = vmatpush1.bf16.msra.mxu0 %v2186
    %2717 = vmatprep.subr.bf16.mxu0 %v2185
    %2718 = vmatpush1.bf16.msra.mxu0 %v2184
    %2719 = vmatprep.subr.bf16.mxu0 %v2183
    %2720 = vmatpush1.bf16.msra.mxu0 %v2182
    %2721 = vmatprep.subr.bf16.mxu0 %v2181
    %2722 = vmatpush1.bf16.msra.mxu0 %v2180
    %2723 = vmatprep.subr.bf16.mxu0 %v2179
    %2724 = vmatpush1.bf16.msra.mxu0 %v2178
    %2725 = vmatprep.subr.bf16.mxu0 %v2177
    %2726 = vmatpush1.bf16.msra.mxu0 %v2176
    %2727 = vmatprep.subr.bf16.mxu0 %v2175
    %2728 = vmatpush1.bf16.msra.mxu0 %v2174
    %2729 = vmatprep.subr.bf16.mxu0 %v2205
    %2730 = vmatpush2.bf16.msra.mxu0 %v2204
    %2731 = vmatprep.subr.bf16.mxu0 %v2203
    %2732 = vmatpush2.bf16.msra.mxu0 %v2202
    %2733 = vmatprep.subr.bf16.mxu0 %v2201
    %2734 = vmatpush2.bf16.msra.mxu0 %v2200
    %2735 = vmatprep.subr.bf16.mxu0 %v2199
    %2736 = vmatpush2.bf16.msra.mxu0 %v2198
    %2737 = vmatprep.subr.bf16.mxu0 %v2197
    %2738 = vmatpush2.bf16.msra.mxu0 %v2196
    %2739 = vmatprep.subr.bf16.mxu0 %v2195
    %2740 = vmatpush2.bf16.msra.mxu0 %v2194
    %2741 = vmatprep.subr.bf16.mxu0 %v2193
    %2742 = vmatpush2.bf16.msra.mxu0 %v2192
    %2743 = vmatprep.subr.bf16.mxu0 %v2191
    %2744 = vmatpush2.bf16.msra.mxu0 %v2190
    %2745 = vmatprep.mubr.bf16.mxu0 %v1832
    %2746 = vmatmul.mubr.bf16.gmra.mxu0 %v1831
    %v2747 = vpop.f32.mrf.mxu0
    %v2748 = vadd.f32 %v1927, %v2747
    %v2749 = vpop.f32.mrf.mxu0
    %v2750 = vadd.f32 %v1931, %v2749
    %v2751 = vpop.f32.mrf.mxu0
    %v2752 = vpop.f32.mrf.mxu0
    %2753 = vdwg.mxu0
    %2754 = vmatprep.subr.bf16.mxu0 %v2221
    %2755 = vmatpush1.bf16.msra.mxu0 %v2220
    %2756 = vmatprep.subr.bf16.mxu0 %v2219
    %2757 = vmatpush1.bf16.msra.mxu0 %v2218
    %2758 = vmatprep.subr.bf16.mxu0 %v2217
    %2759 = vmatpush1.bf16.msra.mxu0 %v2216
    %2760 = vmatprep.subr.bf16.mxu0 %v2215
    %2761 = vmatpush1.bf16.msra.mxu0 %v2214
    %2762 = vmatprep.subr.bf16.mxu0 %v2213
    %2763 = vmatpush1.bf16.msra.mxu0 %v2212
    %2764 = vmatprep.subr.bf16.mxu0 %v2211
    %2765 = vmatpush1.bf16.msra.mxu0 %v2210
    %2766 = vmatprep.subr.bf16.mxu0 %v2209
    %2767 = vmatpush1.bf16.msra.mxu0 %v2208
    %2768 = vmatprep.subr.bf16.mxu0 %v2207
    %2769 = vmatpush1.bf16.msra.mxu0 %v2206
    %2770 = vmatprep.subr.bf16.mxu0 %v2237
    %2771 = vmatpush2.bf16.msra.mxu0 %v2236
    %2772 = vmatprep.subr.bf16.mxu0 %v2235
    %2773 = vmatpush2.bf16.msra.mxu0 %v2234
    %2774 = vmatprep.subr.bf16.mxu0 %v2233
    %2775 = vmatpush2.bf16.msra.mxu0 %v2232
    %2776 = vmatprep.subr.bf16.mxu0 %v2231
    %2777 = vmatpush2.bf16.msra.mxu0 %v2230
    %2778 = vmatprep.subr.bf16.mxu0 %v2229
    %2779 = vmatpush2.bf16.msra.mxu0 %v2228
    %2780 = vmatprep.subr.bf16.mxu0 %v2227
    %2781 = vmatpush2.bf16.msra.mxu0 %v2226
    %2782 = vmatprep.subr.bf16.mxu0 %v2225
    %2783 = vmatpush2.bf16.msra.mxu0 %v2224
    %2784 = vmatprep.subr.bf16.mxu0 %v2223
    %2785 = vmatpush2.bf16.msra.mxu0 %v2222
    %2786 = vmatprep.mubr.bf16.mxu0 %v1834
    %2787 = vmatmul.mubr.bf16.gmra.mxu0 %v1833
    %v2788 = vpop.f32.mrf.mxu0
    %v2789 = vadd.f32 %v2748, %v2788
    %v2790 = vpop.f32.mrf.mxu0
    %v2791 = vadd.f32 %v2750, %v2790
    %v2792 = vpop.f32.mrf.mxu0
    %v2793 = vpop.f32.mrf.mxu0
    %2794 = vdwg.mxu0
    %2795 = vmatprep.subr.bf16.mxu0 %v2253
    %2796 = vmatpush1.bf16.msra.mxu0 %v2252
    %2797 = vmatprep.subr.bf16.mxu0 %v2251
    %2798 = vmatpush1.bf16.msra.mxu0 %v2250
    %2799 = vmatprep.subr.bf16.mxu0 %v2249
    %2800 = vmatpush1.bf16.msra.mxu0 %v2248
    %2801 = vmatprep.subr.bf16.mxu0 %v2247
    %2802 = vmatpush1.bf16.msra.mxu0 %v2246
    %2803 = vmatprep.subr.bf16.mxu0 %v2245
    %2804 = vmatpush1.bf16.msra.mxu0 %v2244
    %2805 = vmatprep.subr.bf16.mxu0 %v2243
    %2806 = vmatpush1.bf16.msra.mxu0 %v2242
    %2807 = vmatprep.subr.bf16.mxu0 %v2241
    %2808 = vmatpush1.bf16.msra.mxu0 %v2240
    %2809 = vmatprep.subr.bf16.mxu0 %v2239
    %2810 = vmatpush1.bf16.msra.mxu0 %v2238
    %2811 = vmatprep.subr.bf16.mxu0 0
    %2812 = vmatpush2.bf16.msra.mxu0 0
    %2813 = vmatprep.subr.bf16.mxu0 0
    %2814 = vmatpush2.bf16.msra.mxu0 0
    %2815 = vmatprep.subr.bf16.mxu0 0
    %2816 = vmatpush2.bf16.msra.mxu0 0
    %2817 = vmatprep.subr.bf16.mxu0 0
    %2818 = vmatpush2.bf16.msra.mxu0 0
    %2819 = vmatprep.subr.bf16.mxu0 0
    %2820 = vmatpush2.bf16.msra.mxu0 0
    %2821 = vmatprep.subr.bf16.mxu0 0
    %2822 = vmatpush2.bf16.msra.mxu0 0
    %2823 = vmatprep.subr.bf16.mxu0 0
    %2824 = vmatpush2.bf16.msra.mxu0 0
    %2825 = vmatprep.subr.bf16.mxu0 0
    %2826 = vmatpush2.bf16.msra.mxu0 0
    %2827 = vmatprep.mubr.bf16.mxu0 0
    %2828 = vmatmul.mubr.bf16.gmra.mxu0 %v1835
    %v2829 = vpop.f32.mrf.mxu0
    %v2830 = vadd.f32 %v2789, %v2829
    %v2831 = vpop.f32.mrf.mxu0
    %v2832 = vadd.f32 %v2791, %v2831
    %v2833 = vpop.f32.mrf.mxu0
    %v2834 = vpop.f32.mrf.mxu0
    %2835 = vdwg.mxu0
    %v2836 = vmax.f32 %v2830, 0.0
    %v2837 = vmax.f32 %v2832, 0.0
    %v2838 = vmax.f32 %v2836, %v2837
    %v2839 = vmax.f32 %v2712, %v2838
    %2840 = vmatprep.subr.bf16.mxu0 %v2189
    %2841 = vmatpush1.bf16.msra.mxu0 %v2188
    %2842 = vmatprep.subr.bf16.mxu0 %v2187
    %2843 = vmatpush1.bf16.msra.mxu0 %v2186
    %2844 = vmatprep.subr.bf16.mxu0 %v2185
    %2845 = vmatpush1.bf16.msra.mxu0 %v2184
    %2846 = vmatprep.subr.bf16.mxu0 %v2183
    %2847 = vmatpush1.bf16.msra.mxu0 %v2182
    %2848 = vmatprep.subr.bf16.mxu0 %v2181
    %2849 = vmatpush1.bf16.msra.mxu0 %v2180
    %2850 = vmatprep.subr.bf16.mxu0 %v2179
    %2851 = vmatpush1.bf16.msra.mxu0 %v2178
    %2852 = vmatprep.subr.bf16.mxu0 %v2177
    %2853 = vmatpush1.bf16.msra.mxu0 %v2176
    %2854 = vmatprep.subr.bf16.mxu0 %v2175
    %2855 = vmatpush1.bf16.msra.mxu0 %v2174
    %2856 = vmatprep.subr.bf16.mxu0 %v2205
    %2857 = vmatpush2.bf16.msra.mxu0 %v2204
    %2858 = vmatprep.subr.bf16.mxu0 %v2203
    %2859 = vmatpush2.bf16.msra.mxu0 %v2202
    %2860 = vmatprep.subr.bf16.mxu0 %v2201
    %2861 = vmatpush2.bf16.msra.mxu0 %v2200
    %2862 = vmatprep.subr.bf16.mxu0 %v2199
    %2863 = vmatpush2.bf16.msra.mxu0 %v2198
    %2864 = vmatprep.subr.bf16.mxu0 %v2197
    %2865 = vmatpush2.bf16.msra.mxu0 %v2196
    %2866 = vmatprep.subr.bf16.mxu0 %v2195
    %2867 = vmatpush2.bf16.msra.mxu0 %v2194
    %2868 = vmatprep.subr.bf16.mxu0 %v2193
    %2869 = vmatpush2.bf16.msra.mxu0 %v2192
    %2870 = vmatprep.subr.bf16.mxu0 %v2191
    %2871 = vmatpush2.bf16.msra.mxu0 %v2190
    %2872 = vmatprep.mubr.bf16.mxu0 %v1833
    %2873 = vmatmul.mubr.bf16.gmra.mxu0 %v1832
    %v2874 = vpop.f32.mrf.mxu0
    %v2875 = vadd.f32 %v1927, %v2874
    %v2876 = vpop.f32.mrf.mxu0
    %v2877 = vadd.f32 %v1931, %v2876
    %v2878 = vpop.f32.mrf.mxu0
    %v2879 = vpop.f32.mrf.mxu0
    %2880 = vdwg.mxu0
    %2881 = vmatprep.subr.bf16.mxu0 %v2221
    %2882 = vmatpush1.bf16.msra.mxu0 %v2220
    %2883 = vmatprep.subr.bf16.mxu0 %v2219
    %2884 = vmatpush1.bf16.msra.mxu0 %v2218
    %2885 = vmatprep.subr.bf16.mxu0 %v2217
    %2886 = vmatpush1.bf16.msra.mxu0 %v2216
    %2887 = vmatprep.subr.bf16.mxu0 %v2215
    %2888 = vmatpush1.bf16.msra.mxu0 %v2214
    %2889 = vmatprep.subr.bf16.mxu0 %v2213
    %2890 = vmatpush1.bf16.msra.mxu0 %v2212
    %2891 = vmatprep.subr.bf16.mxu0 %v2211
    %2892 = vmatpush1.bf16.msra.mxu0 %v2210
    %2893 = vmatprep.subr.bf16.mxu0 %v2209
    %2894 = vmatpush1.bf16.msra.mxu0 %v2208
    %2895 = vmatprep.subr.bf16.mxu0 %v2207
    %2896 = vmatpush1.bf16.msra.mxu0 %v2206
    %2897 = vmatprep.subr.bf16.mxu0 %v2237
    %2898 = vmatpush2.bf16.msra.mxu0 %v2236
    %2899 = vmatprep.subr.bf16.mxu0 %v2235
    %2900 = vmatpush2.bf16.msra.mxu0 %v2234
    %2901 = vmatprep.subr.bf16.mxu0 %v2233
    %2902 = vmatpush2.bf16.msra.mxu0 %v2232
    %2903 = vmatprep.subr.bf16.mxu0 %v2231
    %2904 = vmatpush2.bf16.msra.mxu0 %v2230
    %2905 = vmatprep.subr.bf16.mxu0 %v2229
    %2906 = vmatpush2.bf16.msra.mxu0 %v2228
    %2907 = vmatprep.subr.bf16.mxu0 %v2227
    %2908 = vmatpush2.bf16.msra.mxu0 %v2226
    %2909 = vmatprep.subr.bf16.mxu0 %v2225
    %2910 = vmatpush2.bf16.msra.mxu0 %v2224
    %2911 = vmatprep.subr.bf16.mxu0 %v2223
    %2912 = vmatpush2.bf16.msra.mxu0 %v2222
    %2913 = vmatprep.mubr.bf16.mxu0 %v1835
    %2914 = vmatmul.mubr.bf16.gmra.mxu0 %v1834
    %v2915 = vpop.f32.mrf.mxu0
    %v2916 = vadd.f32 %v2875, %v2915
    %v2917 = vpop.f32.mrf.mxu0
    %v2918 = vadd.f32 %v2877, %v2917
    %v2919 = vpop.f32.mrf.mxu0
    %v2920 = vpop.f32.mrf.mxu0
    %2921 = vdwg.mxu0
    %2922 = vmatprep.subr.bf16.mxu0 %v2253
    %2923 = vmatpush1.bf16.msra.mxu0 %v2252
    %2924 = vmatprep.subr.bf16.mxu0 %v2251
    %2925 = vmatpush1.bf16.msra.mxu0 %v2250
    %2926 = vmatprep.subr.bf16.mxu0 %v2249
    %2927 = vmatpush1.bf16.msra.mxu0 %v2248
    %2928 = vmatprep.subr.bf16.mxu0 %v2247
    %2929 = vmatpush1.bf16.msra.mxu0 %v2246
    %2930 = vmatprep.subr.bf16.mxu0 %v2245
    %2931 = vmatpush1.bf16.msra.mxu0 %v2244
    %2932 = vmatprep.subr.bf16.mxu0 %v2243
    %2933 = vmatpush1.bf16.msra.mxu0 %v2242
    %2934 = vmatprep.subr.bf16.mxu0 %v2241
    %2935 = vmatpush1.bf16.msra.mxu0 %v2240
    %2936 = vmatprep.subr.bf16.mxu0 %v2239
    %2937 = vmatpush1.bf16.msra.mxu0 %v2238
    %2938 = vmatprep.subr.bf16.mxu0 0
    %2939 = vmatpush2.bf16.msra.mxu0 0
    %2940 = vmatprep.subr.bf16.mxu0 0
    %2941 = vmatpush2.bf16.msra.mxu0 0
    %2942 = vmatprep.subr.bf16.mxu0 0
    %2943 = vmatpush2.bf16.msra.mxu0 0
    %2944 = vmatprep.subr.bf16.mxu0 0
    %2945 = vmatpush2.bf16.msra.mxu0 0
    %2946 = vmatprep.subr.bf16.mxu0 0
    %2947 = vmatpush2.bf16.msra.mxu0 0
    %2948 = vmatprep.subr.bf16.mxu0 0
    %2949 = vmatpush2.bf16.msra.mxu0 0
    %2950 = vmatprep.subr.bf16.mxu0 0
    %2951 = vmatpush2.bf16.msra.mxu0 0
    %2952 = vmatprep.subr.bf16.mxu0 0
    %2953 = vmatpush2.bf16.msra.mxu0 0
    %2954 = vmatprep.mubr.bf16.mxu0 0
    %2955 = vmatmul.mubr.bf16.gmra.mxu0 %v1836
    %v2956 = vpop.f32.mrf.mxu0
    %v2957 = vadd.f32 %v2916, %v2956
    %v2958 = vpop.f32.mrf.mxu0
    %v2959 = vadd.f32 %v2918, %v2958
    %v2960 = vpop.f32.mrf.mxu0
    %v2961 = vpop.f32.mrf.mxu0
    %2962 = vdwg.mxu0
    %v2963 = vmax.f32 %v2957, 0.0
    %v2964 = vmax.f32 %v2959, 0.0
    %v2965 = vmax.f32 %v2963, %v2964
    %2966 = vmatprep.subr.bf16.mxu0 %v2189
    %2967 = vmatpush1.bf16.msra.mxu0 %v2188
    %2968 = vmatprep.subr.bf16.mxu0 %v2187
    %2969 = vmatpush1.bf16.msra.mxu0 %v2186
    %2970 = vmatprep.subr.bf16.mxu0 %v2185
    %2971 = vmatpush1.bf16.msra.mxu0 %v2184
    %2972 = vmatprep.subr.bf16.mxu0 %v2183
    %2973 = vmatpush1.bf16.msra.mxu0 %v2182
    %2974 = vmatprep.subr.bf16.mxu0 %v2181
    %2975 = vmatpush1.bf16.msra.mxu0 %v2180
    %2976 = vmatprep.subr.bf16.mxu0 %v2179
    %2977 = vmatpush1.bf16.msra.mxu0 %v2178
    %2978 = vmatprep.subr.bf16.mxu0 %v2177
    %2979 = vmatpush1.bf16.msra.mxu0 %v2176
    %2980 = vmatprep.subr.bf16.mxu0 %v2175
    %2981 = vmatpush1.bf16.msra.mxu0 %v2174
    %2982 = vmatprep.subr.bf16.mxu0 %v2205
    %2983 = vmatpush2.bf16.msra.mxu0 %v2204
    %2984 = vmatprep.subr.bf16.mxu0 %v2203
    %2985 = vmatpush2.bf16.msra.mxu0 %v2202
    %2986 = vmatprep.subr.bf16.mxu0 %v2201
    %2987 = vmatpush2.bf16.msra.mxu0 %v2200
    %2988 = vmatprep.subr.bf16.mxu0 %v2199
    %2989 = vmatpush2.bf16.msra.mxu0 %v2198
    %2990 = vmatprep.subr.bf16.mxu0 %v2197
    %2991 = vmatpush2.bf16.msra.mxu0 %v2196
    %2992 = vmatprep.subr.bf16.mxu0 %v2195
    %2993 = vmatpush2.bf16.msra.mxu0 %v2194
    %2994 = vmatprep.subr.bf16.mxu0 %v2193
    %2995 = vmatpush2.bf16.msra.mxu0 %v2192
    %2996 = vmatprep.subr.bf16.mxu0 %v2191
    %2997 = vmatpush2.bf16.msra.mxu0 %v2190
    %2998 = vmatprep.mubr.bf16.mxu0 %v1834
    %2999 = vmatmul.mubr.bf16.gmra.mxu0 %v1833
    %v3000 = vpop.f32.mrf.mxu0
    %v3001 = vadd.f32 %v1927, %v3000
    %v3002 = vpop.f32.mrf.mxu0
    %v3003 = vadd.f32 %v1931, %v3002
    %v3004 = vpop.f32.mrf.mxu0
    %v3005 = vpop.f32.mrf.mxu0
    %3006 = vdwg.mxu0
    %3007 = vmatprep.subr.bf16.mxu0 %v2221
    %3008 = vmatpush1.bf16.msra.mxu0 %v2220
    %3009 = vmatprep.subr.bf16.mxu0 %v2219
    %3010 = vmatpush1.bf16.msra.mxu0 %v2218
    %3011 = vmatprep.subr.bf16.mxu0 %v2217
    %3012 = vmatpush1.bf16.msra.mxu0 %v2216
    %3013 = vmatprep.subr.bf16.mxu0 %v2215
    %3014 = vmatpush1.bf16.msra.mxu0 %v2214
    %3015 = vmatprep.subr.bf16.mxu0 %v2213
    %3016 = vmatpush1.bf16.msra.mxu0 %v2212
    %3017 = vmatprep.subr.bf16.mxu0 %v2211
    %3018 = vmatpush1.bf16.msra.mxu0 %v2210
    %3019 = vmatprep.subr.bf16.mxu0 %v2209
    %3020 = vmatpush1.bf16.msra.mxu0 %v2208
    %3021 = vmatprep.subr.bf16.mxu0 %v2207
    %3022 = vmatpush1.bf16.msra.mxu0 %v2206
    %3023 = vmatprep.subr.bf16.mxu0 %v2237
    %3024 = vmatpush2.bf16.msra.mxu0 %v2236
    %3025 = vmatprep.subr.bf16.mxu0 %v2235
    %3026 = vmatpush2.bf16.msra.mxu0 %v2234
    %3027 = vmatprep.subr.bf16.mxu0 %v2233
    %3028 = vmatpush2.bf16.msra.mxu0 %v2232
    %3029 = vmatprep.subr.bf16.mxu0 %v2231
    %3030 = vmatpush2.bf16.msra.mxu0 %v2230
    %3031 = vmatprep.subr.bf16.mxu0 %v2229
    %3032 = vmatpush2.bf16.msra.mxu0 %v2228
    %3033 = vmatprep.subr.bf16.mxu0 %v2227
    %3034 = vmatpush2.bf16.msra.mxu0 %v2226
    %3035 = vmatprep.subr.bf16.mxu0 %v2225
    %3036 = vmatpush2.bf16.msra.mxu0 %v2224
    %3037 = vmatprep.subr.bf16.mxu0 %v2223
    %3038 = vmatpush2.bf16.msra.mxu0 %v2222
    %3039 = vmatprep.mubr.bf16.mxu0 %v1836
    %3040 = vmatmul.mubr.bf16.gmra.mxu0 %v1835
    %v3041 = vpop.f32.mrf.mxu0
    %v3042 = vadd.f32 %v3001, %v3041
    %v3043 = vpop.f32.mrf.mxu0
    %v3044 = vadd.f32 %v3003, %v3043
    %v3045 = vpop.f32.mrf.mxu0
    %v3046 = vpop.f32.mrf.mxu0
    %3047 = vdwg.mxu0
    %3048 = vmatprep.subr.bf16.mxu0 %v2253
    %3049 = vmatpush1.bf16.msra.mxu0 %v2252
    %3050 = vmatprep.subr.bf16.mxu0 %v2251
    %3051 = vmatpush1.bf16.msra.mxu0 %v2250
    %3052 = vmatprep.subr.bf16.mxu0 %v2249
    %3053 = vmatpush1.bf16.msra.mxu0 %v2248
    %3054 = vmatprep.subr.bf16.mxu0 %v2247
    %3055 = vmatpush1.bf16.msra.mxu0 %v2246
    %3056 = vmatprep.subr.bf16.mxu0 %v2245
    %3057 = vmatpush1.bf16.msra.mxu0 %v2244
    %3058 = vmatprep.subr.bf16.mxu0 %v2243
    %3059 = vmatpush1.bf16.msra.mxu0 %v2242
    %3060 = vmatprep.subr.bf16.mxu0 %v2241
    %3061 = vmatpush1.bf16.msra.mxu0 %v2240
    %3062 = vmatprep.subr.bf16.mxu0 %v2239
    %3063 = vmatpush1.bf16.msra.mxu0 %v2238
    %3064 = vmatprep.subr.bf16.mxu0 0
    %3065 = vmatpush2.bf16.msra.mxu0 0
    %3066 = vmatprep.subr.bf16.mxu0 0
    %3067 = vmatpush2.bf16.msra.mxu0 0
    %3068 = vmatprep.subr.bf16.mxu0 0
    %3069 = vmatpush2.bf16.msra.mxu0 0
    %3070 = vmatprep.subr.bf16.mxu0 0
    %3071 = vmatpush2.bf16.msra.mxu0 0
    %3072 = vmatprep.subr.bf16.mxu0 0
    %3073 = vmatpush2.bf16.msra.mxu0 0
    %3074 = vmatprep.subr.bf16.mxu0 0
    %3075 = vmatpush2.bf16.msra.mxu0 0
    %3076 = vmatprep.subr.bf16.mxu0 0
    %3077 = vmatpush2.bf16.msra.mxu0 0
    %3078 = vmatprep.subr.bf16.mxu0 0
    %3079 = vmatpush2.bf16.msra.mxu0 0
    %3080 = vmatprep.mubr.bf16.mxu0 0
    %3081 = vmatmul.mubr.bf16.gmra.mxu0 %v1837
    %v3082 = vpop.f32.mrf.mxu0
    %v3083 = vadd.f32 %v3042, %v3082
    %v3084 = vpop.f32.mrf.mxu0
    %v3085 = vadd.f32 %v3044, %v3084
    %v3086 = vpop.f32.mrf.mxu0
    %v3087 = vpop.f32.mrf.mxu0
    %3088 = vdwg.mxu0
    %v3089 = vmax.f32 %v3083, 0.0
    %v3090 = vmax.f32 %v3085, 0.0
    %v3091 = vmax.f32 %v3089, %v3090
    %v3092 = vmax.f32 %v2965, %v3091
    %3093 = vmatprep.subr.bf16.mxu0 %v2189
    %3094 = vmatpush1.bf16.msra.mxu0 %v2188
    %3095 = vmatprep.subr.bf16.mxu0 %v2187
    %3096 = vmatpush1.bf16.msra.mxu0 %v2186
    %3097 = vmatprep.subr.bf16.mxu0 %v2185
    %3098 = vmatpush1.bf16.msra.mxu0 %v2184
    %3099 = vmatprep.subr.bf16.mxu0 %v2183
    %3100 = vmatpush1.bf16.msra.mxu0 %v2182
    %3101 = vmatprep.subr.bf16.mxu0 %v2181
    %3102 = vmatpush1.bf16.msra.mxu0 %v2180
    %3103 = vmatprep.subr.bf16.mxu0 %v2179
    %3104 = vmatpush1.bf16.msra.mxu0 %v2178
    %3105 = vmatprep.subr.bf16.mxu0 %v2177
    %3106 = vmatpush1.bf16.msra.mxu0 %v2176
    %3107 = vmatprep.subr.bf16.mxu0 %v2175
    %3108 = vmatpush1.bf16.msra.mxu0 %v2174
    %3109 = vmatprep.subr.bf16.mxu0 %v2205
    %3110 = vmatpush2.bf16.msra.mxu0 %v2204
    %3111 = vmatprep.subr.bf16.mxu0 %v2203
    %3112 = vmatpush2.bf16.msra.mxu0 %v2202
    %3113 = vmatprep.subr.bf16.mxu0 %v2201
    %3114 = vmatpush2.bf16.msra.mxu0 %v2200
    %3115 = vmatprep.subr.bf16.mxu0 %v2199
    %3116 = vmatpush2.bf16.msra.mxu0 %v2198
    %3117 = vmatprep.subr.bf16.mxu0 %v2197
    %3118 = vmatpush2.bf16.msra.mxu0 %v2196
    %3119 = vmatprep.subr.bf16.mxu0 %v2195
    %3120 = vmatpush2.bf16.msra.mxu0 %v2194
    %3121 = vmatprep.subr.bf16.mxu0 %v2193
    %3122 = vmatpush2.bf16.msra.mxu0 %v2192
    %3123 = vmatprep.subr.bf16.mxu0 %v2191
    %3124 = vmatpush2.bf16.msra.mxu0 %v2190
    %3125 = vmatprep.mubr.bf16.mxu0 %v1835
    %3126 = vmatmul.mubr.bf16.gmra.mxu0 %v1834
    %v3127 = vpop.f32.mrf.mxu0
    %v3128 = vadd.f32 %v1927, %v3127
    %v3129 = vpop.f32.mrf.mxu0
    %v3130 = vadd.f32 %v1931, %v3129
    %v3131 = vpop.f32.mrf.mxu0
    %v3132 = vpop.f32.mrf.mxu0
    %3133 = vdwg.mxu0
    %3134 = vmatprep.subr.bf16.mxu0 %v2221
    %3135 = vmatpush1.bf16.msra.mxu0 %v2220
    %3136 = vmatprep.subr.bf16.mxu0 %v2219
    %3137 = vmatpush1.bf16.msra.mxu0 %v2218
    %3138 = vmatprep.subr.bf16.mxu0 %v2217
    %3139 = vmatpush1.bf16.msra.mxu0 %v2216
    %3140 = vmatprep.subr.bf16.mxu0 %v2215
    %3141 = vmatpush1.bf16.msra.mxu0 %v2214
    %3142 = vmatprep.subr.bf16.mxu0 %v2213
    %3143 = vmatpush1.bf16.msra.mxu0 %v2212
    %3144 = vmatprep.subr.bf16.mxu0 %v2211
    %3145 = vmatpush1.bf16.msra.mxu0 %v2210
    %3146 = vmatprep.subr.bf16.mxu0 %v2209
    %3147 = vmatpush1.bf16.msra.mxu0 %v2208
    %3148 = vmatprep.subr.bf16.mxu0 %v2207
    %3149 = vmatpush1.bf16.msra.mxu0 %v2206
    %3150 = vmatprep.subr.bf16.mxu0 %v2237
    %3151 = vmatpush2.bf16.msra.mxu0 %v2236
    %3152 = vmatprep.subr.bf16.mxu0 %v2235
    %3153 = vmatpush2.bf16.msra.mxu0 %v2234
    %3154 = vmatprep.subr.bf16.mxu0 %v2233
    %3155 = vmatpush2.bf16.msra.mxu0 %v2232
    %3156 = vmatprep.subr.bf16.mxu0 %v2231
    %3157 = vmatpush2.bf16.msra.mxu0 %v2230
    %3158 = vmatprep.subr.bf16.mxu0 %v2229
    %3159 = vmatpush2.bf16.msra.mxu0 %v2228
    %3160 = vmatprep.subr.bf16.mxu0 %v2227
    %3161 = vmatpush2.bf16.msra.mxu0 %v2226
    %3162 = vmatprep.subr.bf16.mxu0 %v2225
    %3163 = vmatpush2.bf16.msra.mxu0 %v2224
    %3164 = vmatprep.subr.bf16.mxu0 %v2223
    %3165 = vmatpush2.bf16.msra.mxu0 %v2222
    %3166 = vmatprep.mubr.bf16.mxu0 %v1837
    %3167 = vmatmul.mubr.bf16.gmra.mxu0 %v1836
    %v3168 = vpop.f32.mrf.mxu0
    %v3169 = vadd.f32 %v3128, %v3168
    %v3170 = vpop.f32.mrf.mxu0
    %v3171 = vadd.f32 %v3130, %v3170
    %v3172 = vpop.f32.mrf.mxu0
    %v3173 = vpop.f32.mrf.mxu0
    %3174 = vdwg.mxu0
    %3175 = vmatprep.subr.bf16.mxu0 %v2253
    %3176 = vmatpush1.bf16.msra.mxu0 %v2252
    %3177 = vmatprep.subr.bf16.mxu0 %v2251
    %3178 = vmatpush1.bf16.msra.mxu0 %v2250
    %3179 = vmatprep.subr.bf16.mxu0 %v2249
    %3180 = vmatpush1.bf16.msra.mxu0 %v2248
    %3181 = vmatprep.subr.bf16.mxu0 %v2247
    %3182 = vmatpush1.bf16.msra.mxu0 %v2246
    %3183 = vmatprep.subr.bf16.mxu0 %v2245
    %3184 = vmatpush1.bf16.msra.mxu0 %v2244
    %3185 = vmatprep.subr.bf16.mxu0 %v2243
    %3186 = vmatpush1.bf16.msra.mxu0 %v2242
    %3187 = vmatprep.subr.bf16.mxu0 %v2241
    %3188 = vmatpush1.bf16.msra.mxu0 %v2240
    %3189 = vmatprep.subr.bf16.mxu0 %v2239
    %3190 = vmatpush1.bf16.msra.mxu0 %v2238
    %3191 = vmatprep.subr.bf16.mxu0 0
    %3192 = vmatpush2.bf16.msra.mxu0 0
    %3193 = vmatprep.subr.bf16.mxu0 0
    %3194 = vmatpush2.bf16.msra.mxu0 0
    %3195 = vmatprep.subr.bf16.mxu0 0
    %3196 = vmatpush2.bf16.msra.mxu0 0
    %3197 = vmatprep.subr.bf16.mxu0 0
    %3198 = vmatpush2.bf16.msra.mxu0 0
    %3199 = vmatprep.subr.bf16.mxu0 0
    %3200 = vmatpush2.bf16.msra.mxu0 0
    %3201 = vmatprep.subr.bf16.mxu0 0
    %3202 = vmatpush2.bf16.msra.mxu0 0
    %3203 = vmatprep.subr.bf16.mxu0 0
    %3204 = vmatpush2.bf16.msra.mxu0 0
    %3205 = vmatprep.subr.bf16.mxu0 0
    %3206 = vmatpush2.bf16.msra.mxu0 0
    %3207 = vmatprep.mubr.bf16.mxu0 0
    %3208 = vmatmul.mubr.bf16.gmra.mxu0 %v1838
    %v3209 = vpop.f32.mrf.mxu0
    %v3210 = vadd.f32 %v3169, %v3209
    %v3211 = vpop.f32.mrf.mxu0
    %v3212 = vadd.f32 %v3171, %v3211
    %v3213 = vpop.f32.mrf.mxu0
    %v3214 = vpop.f32.mrf.mxu0
    %3215 = vdwg.mxu0
    %v3216 = vmax.f32 %v3210, 0.0
    %v3217 = vmax.f32 %v3212, 0.0
    %v3218 = vmax.f32 %v3216, %v3217
    %3219 = vmatprep.subr.bf16.mxu0 %v2189
    %3220 = vmatpush1.bf16.msra.mxu0 %v2188
    %3221 = vmatprep.subr.bf16.mxu0 %v2187
    %3222 = vmatpush1.bf16.msra.mxu0 %v2186
    %3223 = vmatprep.subr.bf16.mxu0 %v2185
    %3224 = vmatpush1.bf16.msra.mxu0 %v2184
    %3225 = vmatprep.subr.bf16.mxu0 %v2183
    %3226 = vmatpush1.bf16.msra.mxu0 %v2182
    %3227 = vmatprep.subr.bf16.mxu0 %v2181
    %3228 = vmatpush1.bf16.msra.mxu0 %v2180
    %3229 = vmatprep.subr.bf16.mxu0 %v2179
    %3230 = vmatpush1.bf16.msra.mxu0 %v2178
    %3231 = vmatprep.subr.bf16.mxu0 %v2177
    %3232 = vmatpush1.bf16.msra.mxu0 %v2176
    %3233 = vmatprep.subr.bf16.mxu0 %v2175
    %3234 = vmatpush1.bf16.msra.mxu0 %v2174
    %3235 = vmatprep.subr.bf16.mxu0 %v2205
    %3236 = vmatpush2.bf16.msra.mxu0 %v2204
    %3237 = vmatprep.subr.bf16.mxu0 %v2203
    %3238 = vmatpush2.bf16.msra.mxu0 %v2202
    %3239 = vmatprep.subr.bf16.mxu0 %v2201
    %3240 = vmatpush2.bf16.msra.mxu0 %v2200
    %3241 = vmatprep.subr.bf16.mxu0 %v2199
    %3242 = vmatpush2.bf16.msra.mxu0 %v2198
    %3243 = vmatprep.subr.bf16.mxu0 %v2197
    %3244 = vmatpush2.bf16.msra.mxu0 %v2196
    %3245 = vmatprep.subr.bf16.mxu0 %v2195
    %3246 = vmatpush2.bf16.msra.mxu0 %v2194
    %3247 = vmatprep.subr.bf16.mxu0 %v2193
    %3248 = vmatpush2.bf16.msra.mxu0 %v2192
    %3249 = vmatprep.subr.bf16.mxu0 %v2191
    %3250 = vmatpush2.bf16.msra.mxu0 %v2190
    %3251 = vmatprep.mubr.bf16.mxu0 %v1836
    %3252 = vmatmul.mubr.bf16.gmra.mxu0 %v1835
    %v3253 = vpop.f32.mrf.mxu0
    %v3254 = vadd.f32 %v1927, %v3253
    %v3255 = vpop.f32.mrf.mxu0
    %v3256 = vadd.f32 %v1931, %v3255
    %v3257 = vpop.f32.mrf.mxu0
    %v3258 = vpop.f32.mrf.mxu0
    %3259 = vdwg.mxu0
    %3260 = vmatprep.subr.bf16.mxu0 %v2221
    %3261 = vmatpush1.bf16.msra.mxu0 %v2220
    %3262 = vmatprep.subr.bf16.mxu0 %v2219
    %3263 = vmatpush1.bf16.msra.mxu0 %v2218
    %3264 = vmatprep.subr.bf16.mxu0 %v2217
    %3265 = vmatpush1.bf16.msra.mxu0 %v2216
    %3266 = vmatprep.subr.bf16.mxu0 %v2215
    %3267 = vmatpush1.bf16.msra.mxu0 %v2214
    %3268 = vmatprep.subr.bf16.mxu0 %v2213
    %3269 = vmatpush1.bf16.msra.mxu0 %v2212
    %3270 = vmatprep.subr.bf16.mxu0 %v2211
    %3271 = vmatpush1.bf16.msra.mxu0 %v2210
    %3272 = vmatprep.subr.bf16.mxu0 %v2209
    %3273 = vmatpush1.bf16.msra.mxu0 %v2208
    %3274 = vmatprep.subr.bf16.mxu0 %v2207
    %3275 = vmatpush1.bf16.msra.mxu0 %v2206
    %3276 = vmatprep.subr.bf16.mxu0 %v2237
    %3277 = vmatpush2.bf16.msra.mxu0 %v2236
    %3278 = vmatprep.subr.bf16.mxu0 %v2235
    %3279 = vmatpush2.bf16.msra.mxu0 %v2234
    %3280 = vmatprep.subr.bf16.mxu0 %v2233
    %3281 = vmatpush2.bf16.msra.mxu0 %v2232
    %3282 = vmatprep.subr.bf16.mxu0 %v2231
    %3283 = vmatpush2.bf16.msra.mxu0 %v2230
    %3284 = vmatprep.subr.bf16.mxu0 %v2229
    %3285 = vmatpush2.bf16.msra.mxu0 %v2228
    %3286 = vmatprep.subr.bf16.mxu0 %v2227
    %3287 = vmatpush2.bf16.msra.mxu0 %v2226
    %3288 = vmatprep.subr.bf16.mxu0 %v2225
    %3289 = vmatpush2.bf16.msra.mxu0 %v2224
    %3290 = vmatprep.subr.bf16.mxu0 %v2223
    %3291 = vmatpush2.bf16.msra.mxu0 %v2222
    %3292 = vmatprep.mubr.bf16.mxu0 %v1838
    %3293 = vmatmul.mubr.bf16.gmra.mxu0 %v1837
    %v3294 = vpop.f32.mrf.mxu0
    %v3295 = vadd.f32 %v3254, %v3294
    %v3296 = vpop.f32.mrf.mxu0
    %v3297 = vadd.f32 %v3256, %v3296
    %v3298 = vpop.f32.mrf.mxu0
    %v3299 = vpop.f32.mrf.mxu0
    %3300 = vdwg.mxu0
    %3301 = vmatprep.subr.bf16.mxu0 %v2253
    %3302 = vmatpush1.bf16.msra.mxu0 %v2252
    %3303 = vmatprep.subr.bf16.mxu0 %v2251
    %3304 = vmatpush1.bf16.msra.mxu0 %v2250
    %3305 = vmatprep.subr.bf16.mxu0 %v2249
    %3306 = vmatpush1.bf16.msra.mxu0 %v2248
    %3307 = vmatprep.subr.bf16.mxu0 %v2247
    %3308 = vmatpush1.bf16.msra.mxu0 %v2246
    %3309 = vmatprep.subr.bf16.mxu0 %v2245
    %3310 = vmatpush1.bf16.msra.mxu0 %v2244
    %3311 = vmatprep.subr.bf16.mxu0 %v2243
    %3312 = vmatpush1.bf16.msra.mxu0 %v2242
    %3313 = vmatprep.subr.bf16.mxu0 %v2241
    %3314 = vmatpush1.bf16.msra.mxu0 %v2240
    %3315 = vmatprep.subr.bf16.mxu0 %v2239
    %3316 = vmatpush1.bf16.msra.mxu0 %v2238
    %3317 = vmatprep.subr.bf16.mxu0 0
    %3318 = vmatpush2.bf16.msra.mxu0 0
    %3319 = vmatprep.subr.bf16.mxu0 0
    %3320 = vmatpush2.bf16.msra.mxu0 0
    %3321 = vmatprep.subr.bf16.mxu0 0
    %3322 = vmatpush2.bf16.msra.mxu0 0
    %3323 = vmatprep.subr.bf16.mxu0 0
    %3324 = vmatpush2.bf16.msra.mxu0 0
    %3325 = vmatprep.subr.bf16.mxu0 0
    %3326 = vmatpush2.bf16.msra.mxu0 0
    %3327 = vmatprep.subr.bf16.mxu0 0
    %3328 = vmatpush2.bf16.msra.mxu0 0
    %3329 = vmatprep.subr.bf16.mxu0 0
    %3330 = vmatpush2.bf16.msra.mxu0 0
    %3331 = vmatprep.subr.bf16.mxu0 0
    %3332 = vmatpush2.bf16.msra.mxu0 0
    %3333 = vmatprep.mubr.bf16.mxu0 0
    %3334 = vmatmul.mubr.bf16.gmra.mxu0 %v1839
    %v3335 = vpop.f32.mrf.mxu0
    %v3336 = vadd.f32 %v3295, %v3335
    %v3337 = vpop.f32.mrf.mxu0
    %v3338 = vadd.f32 %v3297, %v3337
    %v3339 = vpop.f32.mrf.mxu0
    %v3340 = vpop.f32.mrf.mxu0
    %3341 = vdwg.mxu0
    %v3342 = vmax.f32 %v3336, 0.0
    %v3343 = vmax.f32 %v3338, 0.0
    %v3344 = vmax.f32 %v3342, %v3343
    %v3345 = vmax.f32 %v3218, %v3344
    %3346 = vmatprep.subr.bf16.mxu0 %v2189
    %3347 = vmatpush1.bf16.msra.mxu0 %v2188
    %3348 = vmatprep.subr.bf16.mxu0 %v2187
    %3349 = vmatpush1.bf16.msra.mxu0 %v2186
    %3350 = vmatprep.subr.bf16.mxu0 %v2185
    %3351 = vmatpush1.bf16.msra.mxu0 %v2184
    %3352 = vmatprep.subr.bf16.mxu0 %v2183
    %3353 = vmatpush1.bf16.msra.mxu0 %v2182
    %3354 = vmatprep.subr.bf16.mxu0 %v2181
    %3355 = vmatpush1.bf16.msra.mxu0 %v2180
    %3356 = vmatprep.subr.bf16.mxu0 %v2179
    %3357 = vmatpush1.bf16.msra.mxu0 %v2178
    %3358 = vmatprep.subr.bf16.mxu0 %v2177
    %3359 = vmatpush1.bf16.msra.mxu0 %v2176
    %3360 = vmatprep.subr.bf16.mxu0 %v2175
    %3361 = vmatpush1.bf16.msra.mxu0 %v2174
    %3362 = vmatprep.subr.bf16.mxu0 %v2205
    %3363 = vmatpush2.bf16.msra.mxu0 %v2204
    %3364 = vmatprep.subr.bf16.mxu0 %v2203
    %3365 = vmatpush2.bf16.msra.mxu0 %v2202
    %3366 = vmatprep.subr.bf16.mxu0 %v2201
    %3367 = vmatpush2.bf16.msra.mxu0 %v2200
    %3368 = vmatprep.subr.bf16.mxu0 %v2199
    %3369 = vmatpush2.bf16.msra.mxu0 %v2198
    %3370 = vmatprep.subr.bf16.mxu0 %v2197
    %3371 = vmatpush2.bf16.msra.mxu0 %v2196
    %3372 = vmatprep.subr.bf16.mxu0 %v2195
    %3373 = vmatpush2.bf16.msra.mxu0 %v2194
    %3374 = vmatprep.subr.bf16.mxu0 %v2193
    %3375 = vmatpush2.bf16.msra.mxu0 %v2192
    %3376 = vmatprep.subr.bf16.mxu0 %v2191
    %3377 = vmatpush2.bf16.msra.mxu0 %v2190
    %3378 = vmatprep.mubr.bf16.mxu0 %v1837
    %3379 = vmatmul.mubr.bf16.gmra.mxu0 %v1836
    %v3380 = vpop.f32.mrf.mxu0
    %v3381 = vadd.f32 %v1927, %v3380
    %v3382 = vpop.f32.mrf.mxu0
    %v3383 = vadd.f32 %v1931, %v3382
    %v3384 = vpop.f32.mrf.mxu0
    %v3385 = vpop.f32.mrf.mxu0
    %3386 = vdwg.mxu0
    %3387 = vmatprep.subr.bf16.mxu0 %v2221
    %3388 = vmatpush1.bf16.msra.mxu0 %v2220
    %3389 = vmatprep.subr.bf16.mxu0 %v2219
    %3390 = vmatpush1.bf16.msra.mxu0 %v2218
    %3391 = vmatprep.subr.bf16.mxu0 %v2217
    %3392 = vmatpush1.bf16.msra.mxu0 %v2216
    %3393 = vmatprep.subr.bf16.mxu0 %v2215
    %3394 = vmatpush1.bf16.msra.mxu0 %v2214
    %3395 = vmatprep.subr.bf16.mxu0 %v2213
    %3396 = vmatpush1.bf16.msra.mxu0 %v2212
    %3397 = vmatprep.subr.bf16.mxu0 %v2211
    %3398 = vmatpush1.bf16.msra.mxu0 %v2210
    %3399 = vmatprep.subr.bf16.mxu0 %v2209
    %3400 = vmatpush1.bf16.msra.mxu0 %v2208
    %3401 = vmatprep.subr.bf16.mxu0 %v2207
    %3402 = vmatpush1.bf16.msra.mxu0 %v2206
    %3403 = vmatprep.subr.bf16.mxu0 %v2237
    %3404 = vmatpush2.bf16.msra.mxu0 %v2236
    %3405 = vmatprep.subr.bf16.mxu0 %v2235
    %3406 = vmatpush2.bf16.msra.mxu0 %v2234
    %3407 = vmatprep.subr.bf16.mxu0 %v2233
    %3408 = vmatpush2.bf16.msra.mxu0 %v2232
    %3409 = vmatprep.subr.bf16.mxu0 %v2231
    %3410 = vmatpush2.bf16.msra.mxu0 %v2230
    %3411 = vmatprep.subr.bf16.mxu0 %v2229
    %3412 = vmatpush2.bf16.msra.mxu0 %v2228
    %3413 = vmatprep.subr.bf16.mxu0 %v2227
    %3414 = vmatpush2.bf16.msra.mxu0 %v2226
    %3415 = vmatprep.subr.bf16.mxu0 %v2225
    %3416 = vmatpush2.bf16.msra.mxu0 %v2224
    %3417 = vmatprep.subr.bf16.mxu0 %v2223
    %3418 = vmatpush2.bf16.msra.mxu0 %v2222
    %3419 = vmatprep.mubr.bf16.mxu0 %v1839
    %3420 = vmatmul.mubr.bf16.gmra.mxu0 %v1838
    %v3421 = vpop.f32.mrf.mxu0
    %v3422 = vadd.f32 %v3381, %v3421
    %v3423 = vpop.f32.mrf.mxu0
    %v3424 = vadd.f32 %v3383, %v3423
    %v3425 = vpop.f32.mrf.mxu0
    %v3426 = vpop.f32.mrf.mxu0
    %3427 = vdwg.mxu0
    %3428 = vmatprep.subr.bf16.mxu0 %v2253
    %3429 = vmatpush1.bf16.msra.mxu0 %v2252
    %3430 = vmatprep.subr.bf16.mxu0 %v2251
    %3431 = vmatpush1.bf16.msra.mxu0 %v2250
    %3432 = vmatprep.subr.bf16.mxu0 %v2249
    %3433 = vmatpush1.bf16.msra.mxu0 %v2248
    %3434 = vmatprep.subr.bf16.mxu0 %v2247
    %3435 = vmatpush1.bf16.msra.mxu0 %v2246
    %3436 = vmatprep.subr.bf16.mxu0 %v2245
    %3437 = vmatpush1.bf16.msra.mxu0 %v2244
    %3438 = vmatprep.subr.bf16.mxu0 %v2243
    %3439 = vmatpush1.bf16.msra.mxu0 %v2242
    %3440 = vmatprep.subr.bf16.mxu0 %v2241
    %3441 = vmatpush1.bf16.msra.mxu0 %v2240
    %3442 = vmatprep.subr.bf16.mxu0 %v2239
    %3443 = vmatpush1.bf16.msra.mxu0 %v2238
    %3444 = vmatprep.subr.bf16.mxu0 0
    %3445 = vmatpush2.bf16.msra.mxu0 0
    %3446 = vmatprep.subr.bf16.mxu0 0
    %3447 = vmatpush2.bf16.msra.mxu0 0
    %3448 = vmatprep.subr.bf16.mxu0 0
    %3449 = vmatpush2.bf16.msra.mxu0 0
    %3450 = vmatprep.subr.bf16.mxu0 0
    %3451 = vmatpush2.bf16.msra.mxu0 0
    %3452 = vmatprep.subr.bf16.mxu0 0
    %3453 = vmatpush2.bf16.msra.mxu0 0
    %3454 = vmatprep.subr.bf16.mxu0 0
    %3455 = vmatpush2.bf16.msra.mxu0 0
    %3456 = vmatprep.subr.bf16.mxu0 0
    %3457 = vmatpush2.bf16.msra.mxu0 0
    %3458 = vmatprep.subr.bf16.mxu0 0
    %3459 = vmatpush2.bf16.msra.mxu0 0
    %3460 = vmatprep.mubr.bf16.mxu0 0
    %3461 = vmatmul.mubr.bf16.gmra.mxu0 %v1840
    %v3462 = vpop.f32.mrf.mxu0
    %v3463 = vadd.f32 %v3422, %v3462
    %v3464 = vpop.f32.mrf.mxu0
    %v3465 = vadd.f32 %v3424, %v3464
    %v3466 = vpop.f32.mrf.mxu0
    %v3467 = vpop.f32.mrf.mxu0
    %3468 = vdwg.mxu0
    %v3469 = vmax.f32 %v3463, 0.0
    %v3470 = vmax.f32 %v3465, 0.0
    %v3471 = vmax.f32 %v3469, %v3470
    %3472 = vmatprep.subr.bf16.mxu0 %v2189
    %3473 = vmatpush1.bf16.msra.mxu0 %v2188
    %3474 = vmatprep.subr.bf16.mxu0 %v2187
    %3475 = vmatpush1.bf16.msra.mxu0 %v2186
    %3476 = vmatprep.subr.bf16.mxu0 %v2185
    %3477 = vmatpush1.bf16.msra.mxu0 %v2184
    %3478 = vmatprep.subr.bf16.mxu0 %v2183
    %3479 = vmatpush1.bf16.msra.mxu0 %v2182
    %3480 = vmatprep.subr.bf16.mxu0 %v2181
    %3481 = vmatpush1.bf16.msra.mxu0 %v2180
    %3482 = vmatprep.subr.bf16.mxu0 %v2179
    %3483 = vmatpush1.bf16.msra.mxu0 %v2178
    %3484 = vmatprep.subr.bf16.mxu0 %v2177
    %3485 = vmatpush1.bf16.msra.mxu0 %v2176
    %3486 = vmatprep.subr.bf16.mxu0 %v2175
    %3487 = vmatpush1.bf16.msra.mxu0 %v2174
    %3488 = vmatprep.subr.bf16.mxu0 %v2205
    %3489 = vmatpush2.bf16.msra.mxu0 %v2204
    %3490 = vmatprep.subr.bf16.mxu0 %v2203
    %3491 = vmatpush2.bf16.msra.mxu0 %v2202
    %3492 = vmatprep.subr.bf16.mxu0 %v2201
    %3493 = vmatpush2.bf16.msra.mxu0 %v2200
    %3494 = vmatprep.subr.bf16.mxu0 %v2199
    %3495 = vmatpush2.bf16.msra.mxu0 %v2198
    %3496 = vmatprep.subr.bf16.mxu0 %v2197
    %3497 = vmatpush2.bf16.msra.mxu0 %v2196
    %3498 = vmatprep.subr.bf16.mxu0 %v2195
    %3499 = vmatpush2.bf16.msra.mxu0 %v2194
    %3500 = vmatprep.subr.bf16.mxu0 %v2193
    %3501 = vmatpush2.bf16.msra.mxu0 %v2192
    %3502 = vmatprep.subr.bf16.mxu0 %v2191
    %3503 = vmatpush2.bf16.msra.mxu0 %v2190
    %3504 = vmatprep.mubr.bf16.mxu0 %v1838
    %3505 = vmatmul.mubr.bf16.gmra.mxu0 %v1837
    %v3506 = vpop.f32.mrf.mxu0
    %v3507 = vadd.f32 %v1927, %v3506
    %v3508 = vpop.f32.mrf.mxu0
    %v3509 = vadd.f32 %v1931, %v3508
    %v3510 = vpop.f32.mrf.mxu0
    %v3511 = vpop.f32.mrf.mxu0
    %3512 = vdwg.mxu0
    %3513 = vmatprep.subr.bf16.mxu0 %v2221
    %3514 = vmatpush1.bf16.msra.mxu0 %v2220
    %3515 = vmatprep.subr.bf16.mxu0 %v2219
    %3516 = vmatpush1.bf16.msra.mxu0 %v2218
    %3517 = vmatprep.subr.bf16.mxu0 %v2217
    %3518 = vmatpush1.bf16.msra.mxu0 %v2216
    %3519 = vmatprep.subr.bf16.mxu0 %v2215
    %3520 = vmatpush1.bf16.msra.mxu0 %v2214
    %3521 = vmatprep.subr.bf16.mxu0 %v2213
    %3522 = vmatpush1.bf16.msra.mxu0 %v2212
    %3523 = vmatprep.subr.bf16.mxu0 %v2211
    %3524 = vmatpush1.bf16.msra.mxu0 %v2210
    %3525 = vmatprep.subr.bf16.mxu0 %v2209
    %3526 = vmatpush1.bf16.msra.mxu0 %v2208
    %3527 = vmatprep.subr.bf16.mxu0 %v2207
    %3528 = vmatpush1.bf16.msra.mxu0 %v2206
    %3529 = vmatprep.subr.bf16.mxu0 %v2237
    %3530 = vmatpush2.bf16.msra.mxu0 %v2236
    %3531 = vmatprep.subr.bf16.mxu0 %v2235
    %3532 = vmatpush2.bf16.msra.mxu0 %v2234
    %3533 = vmatprep.subr.bf16.mxu0 %v2233
    %3534 = vmatpush2.bf16.msra.mxu0 %v2232
    %3535 = vmatprep.subr.bf16.mxu0 %v2231
    %3536 = vmatpush2.bf16.msra.mxu0 %v2230
    %3537 = vmatprep.subr.bf16.mxu0 %v2229
    %3538 = vmatpush2.bf16.msra.mxu0 %v2228
    %3539 = vmatprep.subr.bf16.mxu0 %v2227
    %3540 = vmatpush2.bf16.msra.mxu0 %v2226
    %3541 = vmatprep.subr.bf16.mxu0 %v2225
    %3542 = vmatpush2.bf16.msra.mxu0 %v2224
    %3543 = vmatprep.subr.bf16.mxu0 %v2223
    %3544 = vmatpush2.bf16.msra.mxu0 %v2222
    %3545 = vmatprep.mubr.bf16.mxu0 %v1840
    %3546 = vmatmul.mubr.bf16.gmra.mxu0 %v1839
    %v3547 = vpop.f32.mrf.mxu0
    %v3548 = vadd.f32 %v3507, %v3547
    %v3549 = vpop.f32.mrf.mxu0
    %v3550 = vadd.f32 %v3509, %v3549
    %v3551 = vpop.f32.mrf.mxu0
    %v3552 = vpop.f32.mrf.mxu0
    %3553 = vdwg.mxu0
    %3554 = vmatprep.subr.bf16.mxu0 %v2253
    %3555 = vmatpush1.bf16.msra.mxu0 %v2252
    %3556 = vmatprep.subr.bf16.mxu0 %v2251
    %3557 = vmatpush1.bf16.msra.mxu0 %v2250
    %3558 = vmatprep.subr.bf16.mxu0 %v2249
    %3559 = vmatpush1.bf16.msra.mxu0 %v2248
    %3560 = vmatprep.subr.bf16.mxu0 %v2247
    %3561 = vmatpush1.bf16.msra.mxu0 %v2246
    %3562 = vmatprep.subr.bf16.mxu0 %v2245
    %3563 = vmatpush1.bf16.msra.mxu0 %v2244
    %3564 = vmatprep.subr.bf16.mxu0 %v2243
    %3565 = vmatpush1.bf16.msra.mxu0 %v2242
    %3566 = vmatprep.subr.bf16.mxu0 %v2241
    %3567 = vmatpush1.bf16.msra.mxu0 %v2240
    %3568 = vmatprep.subr.bf16.mxu0 %v2239
    %3569 = vmatpush1.bf16.msra.mxu0 %v2238
    %3570 = vmatprep.subr.bf16.mxu0 0
    %3571 = vmatpush2.bf16.msra.mxu0 0
    %3572 = vmatprep.subr.bf16.mxu0 0
    %3573 = vmatpush2.bf16.msra.mxu0 0
    %3574 = vmatprep.subr.bf16.mxu0 0
    %3575 = vmatpush2.bf16.msra.mxu0 0
    %3576 = vmatprep.subr.bf16.mxu0 0
    %3577 = vmatpush2.bf16.msra.mxu0 0
    %3578 = vmatprep.subr.bf16.mxu0 0
    %3579 = vmatpush2.bf16.msra.mxu0 0
    %3580 = vmatprep.subr.bf16.mxu0 0
    %3581 = vmatpush2.bf16.msra.mxu0 0
    %3582 = vmatprep.subr.bf16.mxu0 0
    %3583 = vmatpush2.bf16.msra.mxu0 0
    %3584 = vmatprep.subr.bf16.mxu0 0
    %3585 = vmatpush2.bf16.msra.mxu0 0
    %3586 = vmatprep.mubr.bf16.mxu0 0
    %3587 = vmatmul.mubr.bf16.gmra.mxu0 %v1841
    %v3588 = vpop.f32.mrf.mxu0
    %v3589 = vadd.f32 %v3548, %v3588
    %v3590 = vpop.f32.mrf.mxu0
    %v3591 = vadd.f32 %v3550, %v3590
    %v3592 = vpop.f32.mrf.mxu0
    %v3593 = vpop.f32.mrf.mxu0
    %3594 = vdwg.mxu0
    %v3595 = vmax.f32 %v3589, 0.0
    %v3596 = vmax.f32 %v3591, 0.0
    %v3597 = vmax.f32 %v3595, %v3596
    %v3598 = vmax.f32 %v3471, %v3597
    %v3599 = vpack.c.bf16 %v2586, %v2586
    %v3600 = vpack.c.bf16 %v2839, %v2839
    %v3601 = vpack.c.bf16 %v3092, %v3092
    %v3602 = vpack.c.bf16 %v3345, %v3345
    %v3603 = vpack.c.bf16 %v3598, %v3598
    %v3604 = vld [vmem:[#allocation7] sm:$0xf]
    %v3605 = vld [vmem:[#allocation7 + $0x4] sm:$0xf]
    %v3606 = vld [vmem:[#allocation7 + $0x8] sm:$0xf]
    %v3607 = vld [vmem:[#allocation7 + $0xc] sm:$0xf]
    %v3608 = vld [vmem:[#allocation7 + $0x10] sm:$0xf]
    %v3609 = vld [vmem:[#allocation7 + $0x14] sm:$0xf]
    %v3610 = vld [vmem:[#allocation7 + $0x18] sm:$0xf]
    %v3611 = vld [vmem:[#allocation7 + $0x1c] sm:$0xf]
    %v3612 = vld [vmem:[#allocation7 + $0x20] sm:$0xf]
    %v3613 = vld [vmem:[#allocation7 + $0x24] sm:$0xf]
    %v3614 = vld [vmem:[#allocation7 + $0x28] sm:$0xf]
    %v3615 = vld [vmem:[#allocation7 + $0x2c] sm:$0xf]
    %v3616 = vld [vmem:[#allocation7 + $0x30] sm:$0xf]
    %v3617 = vld [vmem:[#allocation7 + $0x34] sm:$0xf]
    %v3618 = vld [vmem:[#allocation7 + $0x38] sm:$0xf]
    %v3619 = vld [vmem:[#allocation7 + $0x3c] sm:$0xf]
    %v3620 = vld [vmem:[#allocation7 + $0x40] sm:$0xf]
    %v3621 = vld [vmem:[#allocation7 + $0x44] sm:$0xf]
    %v3622 = vld [vmem:[#allocation7 + $0x48] sm:$0xf]
    %v3623 = vld [vmem:[#allocation7 + $0x4c] sm:$0xf]
    %v3624 = vld [vmem:[#allocation7 + $0x50] sm:$0xf]
    %v3625 = vld [vmem:[#allocation7 + $0x54] sm:$0xf]
    %v3626 = vld [vmem:[#allocation7 + $0x58] sm:$0xf]
    %v3627 = vld [vmem:[#allocation7 + $0x5c] sm:$0xf]
    %v3628 = vld [vmem:[#allocation7 + $0x60] sm:$0xf]
    %v3629 = vld [vmem:[#allocation7 + $0x64] sm:$0xf]
    %v3630 = vld [vmem:[#allocation7 + $0x68] sm:$0xf]
    %v3631 = vld [vmem:[#allocation7 + $0x6c] sm:$0xf]
    %v3632 = vld [vmem:[#allocation7 + $0x70] sm:$0xf]
    %v3633 = vld [vmem:[#allocation7 + $0x74] sm:$0xf]
    %v3634 = vld [vmem:[#allocation7 + $0x78] sm:$0xf]
    %v3635 = vld [vmem:[#allocation7 + $0x7c] sm:$0xf]
    %v3636 = vld [vmem:[#allocation7 + $0x80] sm:$0xf]
    %v3637 = vld [vmem:[#allocation7 + $0x84] sm:$0xf]
    %v3638 = vld [vmem:[#allocation7 + $0x88] sm:$0xf]
    %v3639 = vld [vmem:[#allocation7 + $0x8c] sm:$0xf]
    %v3640 = vld [vmem:[#allocation7 + $0x90] sm:$0xf]
    %v3641 = vld [vmem:[#allocation7 + $0x94] sm:$0xf]
    %v3642 = vld [vmem:[#allocation7 + $0x98] sm:$0xf]
    %v3643 = vld [vmem:[#allocation7 + $0x9c] sm:$0xf]
    %v3644 = vld [vmem:[#allocation7 + $0xa0] sm:$0xf]
    %v3645 = vld [vmem:[#allocation7 + $0xa4] sm:$0xf]
    %v3646 = vld [vmem:[#allocation7 + $0xa8] sm:$0xf]
    %v3647 = vld [vmem:[#allocation7 + $0xac] sm:$0xf]
    %v3648 = vld [vmem:[#allocation7 + $0xb0] sm:$0xf]
    %v3649 = vld [vmem:[#allocation7 + $0xb4] sm:$0xf]
    %v3650 = vld [vmem:[#allocation7 + $0xb8] sm:$0xf]
    %v3651 = vld [vmem:[#allocation7 + $0xbc] sm:$0xf]
    %v3652 = vld [vmem:[#allocation7 + $0xc0] sm:$0xf]
    %v3653 = vld [vmem:[#allocation7 + $0xc4] sm:$0xf]
    %v3654 = vld [vmem:[#allocation7 + $0xc8] sm:$0xf]
    %v3655 = vld [vmem:[#allocation7 + $0xcc] sm:$0xf]
    %v3656 = vld [vmem:[#allocation7 + $0xd0] sm:$0xf]
    %v3657 = vld [vmem:[#allocation7 + $0xd4] sm:$0xf]
    %v3658 = vld [vmem:[#allocation7 + $0xd8] sm:$0xf]
    %v3659 = vld [vmem:[#allocation7 + $0xdc] sm:$0xf]
    %v3660 = vld [vmem:[#allocation7 + $0xe0] sm:$0xf]
    %v3661 = vld [vmem:[#allocation7 + $0xe4] sm:$0xf]
    %v3662 = vld [vmem:[#allocation7 + $0xe8] sm:$0xf]
    %v3663 = vld [vmem:[#allocation7 + $0xec] sm:$0xf]
    %v3664 = vld [vmem:[#allocation7 + $0xf0] sm:$0xf]
    %v3665 = vld [vmem:[#allocation7 + $0xf4] sm:$0xf]
    %v3666 = vld [vmem:[#allocation7 + $0xf8] sm:$0xf]
    %v3667 = vld [vmem:[#allocation7 + $0xfc] sm:$0xf]
    %v3668 = vld [vmem:[#allocation7 + $0x100] sm:$0xf]
    %v3669 = vld [vmem:[#allocation7 + $0x104] sm:$0xf]
    %v3670 = vld [vmem:[#allocation7 + $0x108] sm:$0xf]
    %v3671 = vld [vmem:[#allocation7 + $0x10c] sm:$0xf]
    %v3672 = vld [vmem:[#allocation7 + $0x110] sm:$0xf]
    %v3673 = vld [vmem:[#allocation7 + $0x114] sm:$0xf]
    %v3674 = vld [vmem:[#allocation7 + $0x118] sm:$0xf]
    %v3675 = vld [vmem:[#allocation7 + $0x11c] sm:$0xf]
    %v3676 = vld [vmem:[#allocation7 + $0x120] sm:$0xf]
    %v3677 = vld [vmem:[#allocation7 + $0x124] sm:$0xf]
    %v3678 = vld [vmem:[#allocation7 + $0x128] sm:$0xf]
    %v3679 = vld [vmem:[#allocation7 + $0x12c] sm:$0xf]
    %v3680 = vld [vmem:[#allocation7 + $0x130] sm:$0xf]
    %v3681 = vld [vmem:[#allocation7 + $0x134] sm:$0xf]
    %v3682 = vld [vmem:[#allocation7 + $0x138] sm:$0xf]
    %v3683 = vld [vmem:[#allocation7 + $0x13c] sm:$0xf]
    %v3684 = vld [vmem:[%s6] sm:$0x1]
    %v3686 = vlaneseq
    %v3687 = vshrl.u32 %v3686, 7
    %v3688 = vsub.s32 0, %v3687
    %v3689 = vrot.slane %v3684, %v3688
    %v3771 = vunpack.c.l.b16 %v3604
    %v3772 = vunpack.c.l.b16 %v3605
    %v3773 = vunpack.c.l.b16 %v3606
    %v3774 = vunpack.c.l.b16 %v3607
    %v3775 = vunpack.c.l.b16 %v3608
    %v3776 = vunpack.c.l.b16 %v3609
    %v3777 = vunpack.c.l.b16 %v3610
    %v3778 = vunpack.c.l.b16 %v3611
    %v3779 = vunpack.c.l.b16 %v3612
    %v3780 = vunpack.c.l.b16 %v3613
    %v3781 = vunpack.c.l.b16 %v3614
    %v3782 = vunpack.c.l.b16 %v3615
    %v3783 = vunpack.c.l.b16 %v3616
    %v3784 = vunpack.c.l.b16 %v3617
    %v3785 = vunpack.c.l.b16 %v3618
    %v3786 = vunpack.c.l.b16 %v3619
    %v3787 = vunpack.c.l.b16 %v3620
    %v3788 = vunpack.c.l.b16 %v3621
    %v3789 = vunpack.c.l.b16 %v3622
    %v3790 = vunpack.c.l.b16 %v3623
    %v3791 = vunpack.c.l.b16 %v3624
    %v3792 = vunpack.c.l.b16 %v3625
    %v3793 = vunpack.c.l.b16 %v3626
    %v3794 = vunpack.c.l.b16 %v3627
    %v3795 = vunpack.c.l.b16 %v3628
    %v3796 = vunpack.c.l.b16 %v3629
    %v3797 = vunpack.c.l.b16 %v3630
    %v3798 = vunpack.c.l.b16 %v3631
    %v3799 = vunpack.c.l.b16 %v3632
    %v3800 = vunpack.c.l.b16 %v3633
    %v3801 = vunpack.c.l.b16 %v3634
    %v3802 = vunpack.c.l.b16 %v3635
    %v3803 = vunpack.c.l.b16 %v3636
    %v3804 = vunpack.c.l.b16 %v3637
    %v3805 = vunpack.c.l.b16 %v3638
    %v3806 = vunpack.c.l.b16 %v3639
    %v3807 = vunpack.c.l.b16 %v3640
    %v3808 = vunpack.c.l.b16 %v3641
    %v3809 = vunpack.c.l.b16 %v3642
    %v3810 = vunpack.c.l.b16 %v3643
    %v3811 = vunpack.c.l.b16 %v3644
    %v3812 = vunpack.c.l.b16 %v3645
    %v3813 = vunpack.c.l.b16 %v3646
    %v3814 = vunpack.c.l.b16 %v3647
    %v3815 = vunpack.c.l.b16 %v3648
    %v3816 = vunpack.c.l.b16 %v3649
    %v3817 = vunpack.c.l.b16 %v3650
    %v3818 = vunpack.c.l.b16 %v3651
    %v3819 = vunpack.c.l.b16 %v3652
    %v3820 = vunpack.c.l.b16 %v3653
    %v3821 = vunpack.c.l.b16 %v3654
    %v3822 = vunpack.c.l.b16 %v3655
    %v3823 = vunpack.c.l.b16 %v3656
    %v3824 = vunpack.c.l.b16 %v3657
    %v3825 = vunpack.c.l.b16 %v3658
    %v3826 = vunpack.c.l.b16 %v3659
    %v3827 = vunpack.c.l.b16 %v3660
    %v3828 = vunpack.c.l.b16 %v3661
    %v3829 = vunpack.c.l.b16 %v3662
    %v3830 = vunpack.c.l.b16 %v3663
    %v3831 = vunpack.c.l.b16 %v3664
    %v3832 = vunpack.c.l.b16 %v3665
    %v3833 = vunpack.c.l.b16 %v3666
    %v3834 = vunpack.c.l.b16 %v3667
    %v3835 = vunpack.c.l.b16 %v3668
    %v3836 = vunpack.c.l.b16 %v3669
    %v3837 = vunpack.c.l.b16 %v3670
    %v3838 = vunpack.c.l.b16 %v3671
    %v3839 = vunpack.c.l.b16 %v3672
    %v3840 = vunpack.c.l.b16 %v3673
    %v3841 = vunpack.c.l.b16 %v3674
    %v3842 = vunpack.c.l.b16 %v3675
    %v3843 = vunpack.c.l.b16 %v3676
    %v3844 = vunpack.c.l.b16 %v3677
    %v3845 = vunpack.c.l.b16 %v3678
    %v3846 = vunpack.c.l.b16 %v3679
    %v3847 = vunpack.c.l.b16 %v3680
    %v3848 = vunpack.c.l.b16 %v3681
    %v3849 = vunpack.c.l.b16 %v3682
    %v3850 = vunpack.c.l.b16 %v3683
    %v3851 = vpack.c.b16 %v3772, %v3771
    %v3852 = vpack.c.b16 %v3774, %v3773
    %v3853 = vpack.c.b16 %v3776, %v3775
    %v3854 = vpack.c.b16 %v3778, %v3777
    %v3855 = vpack.c.b16 %v3780, %v3779
    %v3856 = vpack.c.b16 %v3782, %v3781
    %v3857 = vpack.c.b16 %v3784, %v3783
    %v3858 = vpack.c.b16 %v3786, %v3785
    %v3859 = vpack.c.b16 %v3788, %v3787
    %v3860 = vpack.c.b16 %v3790, %v3789
    %v3861 = vpack.c.b16 %v3792, %v3791
    %v3862 = vpack.c.b16 %v3794, %v3793
    %v3863 = vpack.c.b16 %v3796, %v3795
    %v3864 = vpack.c.b16 %v3798, %v3797
    %v3865 = vpack.c.b16 %v3800, %v3799
    %v3866 = vpack.c.b16 %v3802, %v3801
    %v3867 = vpack.c.b16 %v3804, %v3803
    %v3868 = vpack.c.b16 %v3806, %v3805
    %v3869 = vpack.c.b16 %v3808, %v3807
    %v3870 = vpack.c.b16 %v3810, %v3809
    %v3871 = vpack.c.b16 %v3812, %v3811
    %v3872 = vpack.c.b16 %v3814, %v3813
    %v3873 = vpack.c.b16 %v3816, %v3815
    %v3874 = vpack.c.b16 %v3818, %v3817
    %v3875 = vpack.c.b16 %v3820, %v3819
    %v3876 = vpack.c.b16 %v3822, %v3821
    %v3877 = vpack.c.b16 %v3824, %v3823
    %v3878 = vpack.c.b16 %v3826, %v3825
    %v3879 = vpack.c.b16 %v3828, %v3827
    %v3880 = vpack.c.b16 %v3830, %v3829
    %v3881 = vpack.c.b16 %v3832, %v3831
    %v3882 = vpack.c.b16 %v3834, %v3833
    %v3883 = vpack.c.b16 %v3836, %v3835
    %v3884 = vpack.c.b16 %v3838, %v3837
    %v3885 = vpack.c.b16 %v3840, %v3839
    %v3886 = vpack.c.b16 %v3842, %v3841
    %v3887 = vpack.c.b16 %v3844, %v3843
    %v3888 = vpack.c.b16 %v3846, %v3845
    %v3889 = vpack.c.b16 %v3848, %v3847
    %v3890 = vpack.c.b16 %v3850, %v3849
    %3931 = vmatprep.subr.bf16.mxu0 0
    %3932 = vmatpush1.bf16.msra.mxu0 %v3858
    %3933 = vmatprep.subr.bf16.mxu0 0
    %3934 = vmatpush1.bf16.msra.mxu0 %v3857
    %3935 = vmatprep.subr.bf16.mxu0 0
    %3936 = vmatpush1.bf16.msra.mxu0 %v3856
    %3937 = vmatprep.subr.bf16.mxu0 0
    %3938 = vmatpush1.bf16.msra.mxu0 %v3855
    %3939 = vmatprep.subr.bf16.mxu0 0
    %3940 = vmatpush1.bf16.msra.mxu0 %v3854
    %3941 = vmatprep.subr.bf16.mxu0 0
    %3942 = vmatpush1.bf16.msra.mxu0 %v3853
    %3943 = vmatprep.subr.bf16.mxu0 0
    %3944 = vmatpush1.bf16.msra.mxu0 %v3852
    %3945 = vmatprep.subr.bf16.mxu0 0
    %3946 = vmatpush1.bf16.msra.mxu0 %v3851
    %3947 = vmatprep.subr.bf16.mxu0 0
    %3948 = vmatpush2.bf16.msra.mxu0 %v3866
    %3949 = vmatprep.subr.bf16.mxu0 0
    %3950 = vmatpush2.bf16.msra.mxu0 %v3865
    %3951 = vmatprep.subr.bf16.mxu0 0
    %3952 = vmatpush2.bf16.msra.mxu0 %v3864
    %3953 = vmatprep.subr.bf16.mxu0 0
    %3954 = vmatpush2.bf16.msra.mxu0 %v3863
    %3955 = vmatprep.subr.bf16.mxu0 0
    %3956 = vmatpush2.bf16.msra.mxu0 %v3862
    %3957 = vmatprep.subr.bf16.mxu0 0
    %3958 = vmatpush2.bf16.msra.mxu0 %v3861
    %3959 = vmatprep.subr.bf16.mxu0 0
    %3960 = vmatpush2.bf16.msra.mxu0 %v3860
    %3961 = vmatprep.subr.bf16.mxu0 0
    %3962 = vmatpush2.bf16.msra.mxu0 %v3859
    %3963 = vmatprep.mubr.bf16.mxu0 %v3600
    %3964 = vmatmul.mubr.bf16.gmra.mxu0 %v3599
    %v3965 = vpop.f32.mrf.mxu0
    %v3966 = vadd.f32 %v3689, %v3965
    %v3967 = vpop.f32.mrf.mxu0
    %v3968 = vpop.f32.mrf.mxu0
    %v3969 = vpop.f32.mrf.mxu0
    %3970 = vdwg.mxu0
    %3971 = vmatprep.subr.bf16.mxu0 0
    %3972 = vmatpush1.bf16.msra.mxu0 %v3874
    %3973 = vmatprep.subr.bf16.mxu0 0
    %3974 = vmatpush1.bf16.msra.mxu0 %v3873
    %3975 = vmatprep.subr.bf16.mxu0 0
    %3976 = vmatpush1.bf16.msra.mxu0 %v3872
    %3977 = vmatprep.subr.bf16.mxu0 0
    %3978 = vmatpush1.bf16.msra.mxu0 %v3871
    %3979 = vmatprep.subr.bf16.mxu0 0
    %3980 = vmatpush1.bf16.msra.mxu0 %v3870
    %3981 = vmatprep.subr.bf16.mxu0 0
    %3982 = vmatpush1.bf16.msra.mxu0 %v3869
    %3983 = vmatprep.subr.bf16.mxu0 0
    %3984 = vmatpush1.bf16.msra.mxu0 %v3868
    %3985 = vmatprep.subr.bf16.mxu0 0
    %3986 = vmatpush1.bf16.msra.mxu0 %v3867
    %3987 = vmatprep.subr.bf16.mxu0 0
    %3988 = vmatpush2.bf16.msra.mxu0 %v3882
    %3989 = vmatprep.subr.bf16.mxu0 0
    %3990 = vmatpush2.bf16.msra.mxu0 %v3881
    %3991 = vmatprep.subr.bf16.mxu0 0
    %3992 = vmatpush2.bf16.msra.mxu0 %v3880
    %3993 = vmatprep.subr.bf16.mxu0 0
    %3994 = vmatpush2.bf16.msra.mxu0 %v3879
    %3995 = vmatprep.subr.bf16.mxu0 0
    %3996 = vmatpush2.bf16.msra.mxu0 %v3878
    %3997 = vmatprep.subr.bf16.mxu0 0
    %3998 = vmatpush2.bf16.msra.mxu0 %v3877
    %3999 = vmatprep.subr.bf16.mxu0 0
    %4000 = vmatpush2.bf16.msra.mxu0 %v3876
    %4001 = vmatprep.subr.bf16.mxu0 0
    %4002 = vmatpush2.bf16.msra.mxu0 %v3875
    %4003 = vmatprep.mubr.bf16.mxu0 %v3602
    %4004 = vmatmul.mubr.bf16.gmra.mxu0 %v3601
    %v4005 = vpop.f32.mrf.mxu0
    %v4006 = vadd.f32 %v3966, %v4005
    %v4007 = vpop.f32.mrf.mxu0
    %v4008 = vpop.f32.mrf.mxu0
    %v4009 = vpop.f32.mrf.mxu0
    %4010 = vdwg.mxu0
    %4011 = vmatprep.subr.bf16.mxu0 0
    %4012 = vmatpush1.bf16.msra.mxu0 %v3890
    %4013 = vmatprep.subr.bf16.mxu0 0
    %4014 = vmatpush1.bf16.msra.mxu0 %v3889
    %4015 = vmatprep.subr.bf16.mxu0 0
    %4016 = vmatpush1.bf16.msra.mxu0 %v3888
    %4017 = vmatprep.subr.bf16.mxu0 0
    %4018 = vmatpush1.bf16.msra.mxu0 %v3887
    %4019 = vmatprep.subr.bf16.mxu0 0
    %4020 = vmatpush1.bf16.msra.mxu0 %v3886
    %4021 = vmatprep.subr.bf16.mxu0 0
    %4022 = vmatpush1.bf16.msra.mxu0 %v3885
    %4023 = vmatprep.subr.bf16.mxu0 0
    %4024 = vmatpush1.bf16.msra.mxu0 %v3884
    %4025 = vmatprep.subr.bf16.mxu0 0
    %4026 = vmatpush1.bf16.msra.mxu0 %v3883
    %4027 = vmatprep.subr.bf16.mxu0 0
    %4028 = vmatpush2.bf16.msra.mxu0 0
    %4029 = vmatprep.subr.bf16.mxu0 0
    %4030 = vmatpush2.bf16.msra.mxu0 0
    %4031 = vmatprep.subr.bf16.mxu0 0
    %4032 = vmatpush2.bf16.msra.mxu0 0
    %4033 = vmatprep.subr.bf16.mxu0 0
    %4034 = vmatpush2.bf16.msra.mxu0 0
    %4035 = vmatprep.subr.bf16.mxu0 0
    %4036 = vmatpush2.bf16.msra.mxu0 0
    %4037 = vmatprep.subr.bf16.mxu0 0
    %4038 = vmatpush2.bf16.msra.mxu0 0
    %4039 = vmatprep.subr.bf16.mxu0 0
    %4040 = vmatpush2.bf16.msra.mxu0 0
    %4041 = vmatprep.subr.bf16.mxu0 0
    %4042 = vmatpush2.bf16.msra.mxu0 0
    %4043 = vmatprep.mubr.bf16.mxu0 0
    %4044 = vmatmul.mubr.bf16.gmra.mxu0 %v3603
    %v4045 = vpop.f32.mrf.mxu0
    %v4046 = vadd.f32 %v4006, %v4045
    %v4047 = vpop.f32.mrf.mxu0
    %v4048 = vpop.f32.mrf.mxu0
    %v4049 = vpop.f32.mrf.mxu0
    %4050 = vdwg.mxu0
    %v4051 = vmax.f32 %v4046, 0.0
    %v4052 = vpack.c.bf16 %v4051, %v4051
    %v4053 = vld [vmem:[%s7] sm:$0xf]
    %v4054 = vld [vmem:[%s7 + $0x4] sm:$0xf]
    %v4055 = vld [vmem:[%s7 + $0x8] sm:$0xf]
    %v4056 = vld [vmem:[%s7 + $0xc] sm:$0xf]
    %v4057 = vld [vmem:[%s7 + $0x10] sm:$0xf]
    %v4058 = vld [vmem:[%s7 + $0x14] sm:$0xf]
    %v4059 = vld [vmem:[%s7 + $0x18] sm:$0xf]
    %v4060 = vld [vmem:[%s7 + $0x1c] sm:$0xf]
    %v4061 = vld [vmem:[%s7 + $0x20] sm:$0xf]
    %v4062 = vld [vmem:[%s7 + $0x24] sm:$0xf]
    %v4063 = vld [vmem:[%s7 + $0x28] sm:$0xf]
    %v4064 = vld [vmem:[%s7 + $0x2c] sm:$0xf]
    %v4065 = vld [vmem:[%s7 + $0x30] sm:$0xf]
    %v4066 = vld [vmem:[%s7 + $0x34] sm:$0xf]
    %v4067 = vld [vmem:[%s7 + $0x38] sm:$0xf]
    %v4068 = vld [vmem:[%s7 + $0x3c] sm:$0xf]
    %v4069 = vld [vmem:[%s8] sm:$0x1]
    %v4071 = vlaneseq
    %v4072 = vshrl.u32 %v4071, 7
    %v4073 = vsub.s32 0, %v4072
    %v4074 = vrot.slane %v4069, %v4073
    %v4092 = vunpack.c.l.b16 %v4053
    %v4093 = vunpack.c.l.b16 %v4054
    %v4094 = vunpack.c.l.b16 %v4055
    %v4095 = vunpack.c.l.b16 %v4056
    %v4096 = vunpack.c.l.b16 %v4057
    %v4097 = vunpack.c.l.b16 %v4058
    %v4098 = vunpack.c.l.b16 %v4059
    %v4099 = vunpack.c.l.b16 %v4060
    %v4100 = vunpack.c.l.b16 %v4061
    %v4101 = vunpack.c.l.b16 %v4062
    %v4102 = vunpack.c.l.b16 %v4063
    %v4103 = vunpack.c.l.b16 %v4064
    %v4104 = vunpack.c.l.b16 %v4065
    %v4105 = vunpack.c.l.b16 %v4066
    %v4106 = vunpack.c.l.b16 %v4067
    %v4107 = vunpack.c.l.b16 %v4068
    %v4108 = vpack.c.b16 %v4093, %v4092
    %v4109 = vpack.c.b16 %v4095, %v4094
    %v4110 = vpack.c.b16 %v4097, %v4096
    %v4111 = vpack.c.b16 %v4099, %v4098
    %v4112 = vpack.c.b16 %v4101, %v4100
    %v4113 = vpack.c.b16 %v4103, %v4102
    %v4114 = vpack.c.b16 %v4105, %v4104
    %v4115 = vpack.c.b16 %v4107, %v4106
    %4124 = vmatprep.subr.bf16.mxu0 0
    %4125 = vmatpush1.bf16.msra.mxu0 %v4115
    %4126 = vmatprep.subr.bf16.mxu0 0
    %4127 = vmatpush1.bf16.msra.mxu0 %v4114
    %4128 = vmatprep.subr.bf16.mxu0 0
    %4129 = vmatpush1.bf16.msra.mxu0 %v4113
    %4130 = vmatprep.subr.bf16.mxu0 0
    %4131 = vmatpush1.bf16.msra.mxu0 %v4112
    %4132 = vmatprep.subr.bf16.mxu0 0
    %4133 = vmatpush1.bf16.msra.mxu0 %v4111
    %4134 = vmatprep.subr.bf16.mxu0 0
    %4135 = vmatpush1.bf16.msra.mxu0 %v4110
    %4136 = vmatprep.subr.bf16.mxu0 0
    %4137 = vmatpush1.bf16.msra.mxu0 %v4109
    %4138 = vmatprep.subr.bf16.mxu0 0
    %4139 = vmatpush1.bf16.msra.mxu0 %v4108
    %4140 = vmatprep.subr.bf16.mxu0 0
    %4141 = vmatpush2.bf16.msra.mxu0 0
    %4142 = vmatprep.subr.bf16.mxu0 0
    %4143 = vmatpush2.bf16.msra.mxu0 0
    %4144 = vmatprep.subr.bf16.mxu0 0
    %4145 = vmatpush2.bf16.msra.mxu0 0
    %4146 = vmatprep.subr.bf16.mxu0 0
    %4147 = vmatpush2.bf16.msra.mxu0 0
    %4148 = vmatprep.subr.bf16.mxu0 0
    %4149 = vmatpush2.bf16.msra.mxu0 0
    %4150 = vmatprep.subr.bf16.mxu0 0
    %4151 = vmatpush2.bf16.msra.mxu0 0
    %4152 = vmatprep.subr.bf16.mxu0 0
    %4153 = vmatpush2.bf16.msra.mxu0 0
    %4154 = vmatprep.subr.bf16.mxu0 0
    %4155 = vmatpush2.bf16.msra.mxu0 0
    %4156 = vmatprep.mubr.bf16.mxu0 0
    %4157 = vmatmul.mubr.bf16.gmra.mxu0 %v4052
    %v4158 = vpop.f32.mrf.mxu0
    %v4159 = vadd.f32 %v4074, %v4158
    %v4160 = vpop.f32.mrf.mxu0
    %v4161 = vpop.f32.mrf.mxu0
    %v4162 = vpop.f32.mrf.mxu0
    %4163 = vdwg.mxu0
    %v4164 = vmax.f32 %v4159, 0.0
    %v4165 = vpack.c.bf16 %v4164, %v4164
    %v4166 = vld [vmem:[#allocation9] sm:$0xf]
    %v4167 = vld [vmem:[#allocation9 + $0x4] sm:$0xf]
    %v4168 = vld [vmem:[#allocation9 + $0x8] sm:$0xf]
    %v4169 = vld [vmem:[#allocation9 + $0xc] sm:$0xf]
    %v4170 = vld [vmem:[#allocation9 + $0x10] sm:$0xf]
    %v4171 = vld [vmem:[#allocation9 + $0x14] sm:$0xf]
    %v4172 = vld [vmem:[#allocation9 + $0x18] sm:$0xf]
    %v4173 = vld [vmem:[#allocation9 + $0x1c] sm:$0xf]
    %v4174 = vld [vmem:[#allocation9 + $0x20] sm:$0xf]
    %v4175 = vld [vmem:[#allocation9 + $0x24] sm:$0xf]
    %v4176 = vld [vmem:[#allocation9 + $0x28] sm:$0xf]
    %v4177 = vld [vmem:[#allocation9 + $0x2c] sm:$0xf]
    %v4178 = vld [vmem:[#allocation9 + $0x30] sm:$0xf]
    %v4179 = vld [vmem:[#allocation9 + $0x34] sm:$0xf]
    %v4180 = vld [vmem:[#allocation9 + $0x38] sm:$0xf]
    %v4181 = vld [vmem:[#allocation9 + $0x3c] sm:$0xf]
    %v4182 = vld [vmem:[%s10] sm:$0x1]
    %v4184 = vlaneseq
    %v4185 = vshrl.u32 %v4184, 7
    %v4186 = vsub.s32 0, %v4185
    %v4187 = vrot.slane %v4182, %v4186
    %v4205 = vunpack.c.l.b16 %v4166
    %v4206 = vunpack.c.l.b16 %v4167
    %v4207 = vunpack.c.l.b16 %v4168
    %v4208 = vunpack.c.l.b16 %v4169
    %v4209 = vunpack.c.l.b16 %v4170
    %v4210 = vunpack.c.l.b16 %v4171
    %v4211 = vunpack.c.l.b16 %v4172
    %v4212 = vunpack.c.l.b16 %v4173
    %v4213 = vunpack.c.l.b16 %v4174
    %v4214 = vunpack.c.l.b16 %v4175
    %v4215 = vunpack.c.l.b16 %v4176
    %v4216 = vunpack.c.l.b16 %v4177
    %v4217 = vunpack.c.l.b16 %v4178
    %v4218 = vunpack.c.l.b16 %v4179
    %v4219 = vunpack.c.l.b16 %v4180
    %v4220 = vunpack.c.l.b16 %v4181
    %v4221 = vpack.c.b16 %v4206, %v4205
    %v4222 = vpack.c.b16 %v4208, %v4207
    %v4223 = vpack.c.b16 %v4210, %v4209
    %v4224 = vpack.c.b16 %v4212, %v4211
    %v4225 = vpack.c.b16 %v4214, %v4213
    %v4226 = vpack.c.b16 %v4216, %v4215
    %v4227 = vpack.c.b16 %v4218, %v4217
    %v4228 = vpack.c.b16 %v4220, %v4219
    %4237 = vmatprep.subr.bf16.mxu0 0
    %4238 = vmatpush1.bf16.msra.mxu0 %v4228
    %4239 = vmatprep.subr.bf16.mxu0 0
    %4240 = vmatpush1.bf16.msra.mxu0 %v4227
    %4241 = vmatprep.subr.bf16.mxu0 0
    %4242 = vmatpush1.bf16.msra.mxu0 %v4226
    %4243 = vmatprep.subr.bf16.mxu0 0
    %4244 = vmatpush1.bf16.msra.mxu0 %v4225
    %4245 = vmatprep.subr.bf16.mxu0 0
    %4246 = vmatpush1.bf16.msra.mxu0 %v4224
    %4247 = vmatprep.subr.bf16.mxu0 0
    %4248 = vmatpush1.bf16.msra.mxu0 %v4223
    %4249 = vmatprep.subr.bf16.mxu0 0
    %4250 = vmatpush1.bf16.msra.mxu0 %v4222
    %4251 = vmatprep.subr.bf16.mxu0 0
    %4252 = vmatpush1.bf16.msra.mxu0 %v4221
    %4253 = vmatprep.subr.bf16.mxu0 0
    %4254 = vmatpush2.bf16.msra.mxu0 0
    %4255 = vmatprep.subr.bf16.mxu0 0
    %4256 = vmatpush2.bf16.msra.mxu0 0
    %4257 = vmatprep.subr.bf16.mxu0 0
    %4258 = vmatpush2.bf16.msra.mxu0 0
    %4259 = vmatprep.subr.bf16.mxu0 0
    %4260 = vmatpush2.bf16.msra.mxu0 0
    %4261 = vmatprep.subr.bf16.mxu0 0
    %4262 = vmatpush2.bf16.msra.mxu0 0
    %4263 = vmatprep.subr.bf16.mxu0 0
    %4264 = vmatpush2.bf16.msra.mxu0 0
    %4265 = vmatprep.subr.bf16.mxu0 0
    %4266 = vmatpush2.bf16.msra.mxu0 0
    %4267 = vmatprep.subr.bf16.mxu0 0
    %4268 = vmatpush2.bf16.msra.mxu0 0
    %4269 = vmatprep.mubr.bf16.mxu0 0
    %4270 = vmatmul.mubr.bf16.gmra.mxu0 %v4165
    %v4271 = vpop.f32.mrf.mxu0
    %v4272 = vadd.f32 %v4187, %v4271
    %v4273 = vpop.f32.mrf.mxu0
    %v4274 = vpop.f32.mrf.mxu0
    %v4275 = vpop.f32.mrf.mxu0
    %4276 = vdwg.mxu0
    %4277 = vst [vmem:[%s11] sm:$0xff] %v4272
    // Predicated region
    $region66: #{network_forward.1} parent=1 // pred_check
      _
    $region67: #{network_forward.1} parent=1 // pred_check_branch
      %4279 = sbr.rel (0) target = $region69
    $region68: #{network_forward.1} parent=1 // pred_region
      _
    $region69: #{network_forward.1} parent=1 // pred_fallthru
      _
    // Predicated region
    $region70: #{network_forward.1} parent=1 // pred_check
      _
    $region71: #{network_forward.1} parent=1 // pred_check_branch
      %4281 = sbr.rel (0) target = $region73
    $region72: #{network_forward.1} parent=1 // pred_region
      _
    $region73: #{network_forward.1} parent=1 // pred_fallthru
      _
    %4282 = vsyncpa [#allocation3], 1
    %4283 = vsyncpa [#allocation5], 1
    %4284 = vsyncpa [#allocation8], 1

</llo_original>
